<compile_context>
chip_gen: v5e
topology: v5e:2x2
jax: 0.10.0
libtpu: 0.0.40
codegen_flags: <defaults>
</compile_context>

<pallas_src>
import math
import functools

import jax
import jax.numpy as jnp
from jax.experimental import pallas as pl
from jax.experimental.pallas import tpu as pltpu


def _round_up(x, m):
    return -(-x // m) * m


# ----------------------------------------------------------------------------
# Fused Seq2Seq kernel: encoder over T steps + autoregressive decoder rollout.
# Single invocation (no grid); all state lives in registers / VMEM.
# ----------------------------------------------------------------------------
def _seq2seq_kernel(T, P, L, H, *refs):
    # refs: x_seq, dec0, (W,b)*L encoder, (W,b)*L decoder, lin_w, lin_b, out
    x_ref = refs[0]                        # (T, B, In_pad)   f32
    dec0_ref = refs[1]                     # (B, Out_pad)     f32
    enc_refs = refs[2:2 + 2 * L]           # fused W (K,4H), bias (B,4H)
    dec_refs = refs[2 + 2 * L:2 + 4 * L]
    lin_w_ref = refs[2 + 4 * L]            # (H, Out_pad)
    lin_b_ref = refs[3 + 4 * L]            # (B, Out_pad)     f32
    out_ref = refs[4 + 4 * L]              # (P, B, Out_pad)  f32

    B = x_ref.shape[1]

    def cell(x_in, h, c, w_ref, b_ref):
        # One fused gate matmul: [x, h] @ [W_ih; W_hh] + b   (PyTorch i,f,g,o)
        xh = jnp.concatenate([x_in, h], axis=-1)
        gates = (jnp.dot(xh.astype(w_ref.dtype), w_ref[...],
                         preferred_element_type=jnp.float32)
                 + b_ref[...])
        i = jax.nn.sigmoid(gates[:, 0:H])
        f = jax.nn.sigmoid(gates[:, H:2 * H])
        g = jnp.tanh(gates[:, 2 * H:3 * H])
        o = jax.nn.sigmoid(gates[:, 3 * H:4 * H])
        c_new = f * c + i * g
        h_new = o * jnp.tanh(c_new)
        return h_new, c_new

    h = [jnp.zeros((B, H), jnp.float32) for _ in range(L)]
    c = [jnp.zeros((B, H), jnp.float32) for _ in range(L)]

    # ---- encoder: T timesteps, L stacked layers (fully unrolled) ----
    for t in range(T):
        x = x_ref[t]                               # (B, In_pad)
        for l in range(L):
            h[l], c[l] = cell(x, h[l], c[l], enc_refs[2 * l], enc_refs[2 * l + 1])
            x = h[l]

    # ---- decoder: pred_length autoregressive steps ----
    # Dropout(p=0.5) is identity in eval mode.
    # TODO(synk): teacher-forcing branch (teacher_location) is dead with the
    # reference forward's defaults (teacher_forcing_ratio=0) and is omitted.
    x = dec0_ref[...]                              # (B, Out_pad)
    for t in range(P):
        layer_in = x
        for l in range(L):
            h[l], c[l] = cell(layer_in, h[l], c[l],
                              dec_refs[2 * l], dec_refs[2 * l + 1])
            layer_in = h[l]
        now = (jnp.dot(layer_in.astype(lin_w_ref.dtype), lin_w_ref[...],
                       preferred_element_type=jnp.float32)
               + lin_b_ref[...] + x)               # Linear + residual add
        out_ref[t] = now                           # full-tile (B, 128) store
        x = now                                    # feedback to next step


# ----------------------------------------------------------------------------
# Parameters (deterministic, PyTorch-style uniform init)
# ----------------------------------------------------------------------------
def init_params(key, input_size, hidden_size, hidden_dim, num_layers):
    bound = 1.0 / math.sqrt(hidden_dim)
    params = {"enc": [], "dec": []}

    def nxt():
        nonlocal key
        key, sub = jax.random.split(key)
        return sub

    def uni(shape, b):
        return jax.random.uniform(nxt(), shape, jnp.float32, -b, b)

    for which, in0 in (("enc", input_size), ("dec", hidden_size)):
        for l in range(num_layers):
            in_dim = in0 if l == 0 else hidden_dim
            w_ih = uni((in_dim, 4 * hidden_dim), bound)      # (In, 4H)
            w_hh = uni((hidden_dim, 4 * hidden_dim), bound)  # (H, 4H)
            bias = uni((1, 4 * hidden_dim), bound) + uni((1, 4 * hidden_dim), bound)
            params[which].append((w_ih, w_hh, bias))

    params["lin_w"] = uni((hidden_dim, hidden_size), bound)  # (H, out)
    params["lin_b"] = uni((1, hidden_size), bound)
    return params


# ----------------------------------------------------------------------------
# Seq2Seq forward (Pallas-backed): ONE pallas_call total
# ----------------------------------------------------------------------------
def seq2seq_forward(params, in_data, last_location, pred_length,
                    num_layers, hidden_dim, matmul_dtype=jnp.float32):
    B, T, In = in_data.shape
    hidden_size = last_location.shape[-1]
    H, L = hidden_dim, num_layers

    B_pad = _round_up(B, 8)               # sublane multiple
    In_pad = _round_up(In, 128)           # lane-dense encoder input
    Out_pad = _round_up(hidden_size, 128)  # lane-dense decoder output

    # Time-major encoder input, batch/lane padded with zeros.
    x_tm = jnp.transpose(in_data, (1, 0, 2))                     # (T,B,In)
    x_tm = jnp.pad(x_tm, ((0, 0), (0, B_pad - B), (0, In_pad - In)))
    dec0 = jnp.pad(last_location[:, 0, :],
                   ((0, B_pad - B), (0, Out_pad - hidden_size)))  # (B_pad,Out_pad)

    def prep_cell(w_ih, w_hh, b, in_pad_to):
        in_dim = w_ih.shape[0]
        if in_pad_to > in_dim:
            w_ih = jnp.pad(w_ih, ((0, in_pad_to - in_dim), (0, 0)))
        W = jnp.concatenate([w_ih, w_hh], axis=0).astype(matmul_dtype)  # (K,4H)
        bb = jnp.broadcast_to(b, (B_pad, 4 * H)).astype(jnp.float32)
        return W, bb

    flat = []
    for l, (w_ih, w_hh, b) in enumerate(params["enc"]):
        W, bb = prep_cell(w_ih, w_hh, b, In_pad if l == 0 else H)
        flat += [W, bb]
    for l, (w_ih, w_hh, b) in enumerate(params["dec"]):
        W, bb = prep_cell(w_ih, w_hh, b, Out_pad if l == 0 else H)
        flat += [W, bb]
    lin_w = jnp.pad(params["lin_w"],
                    ((0, 0), (0, Out_pad - hidden_size))).astype(matmul_dtype)
    lin_b = jnp.broadcast_to(
        jnp.pad(params["lin_b"], ((0, 0), (0, Out_pad - hidden_size))),
        (B_pad, Out_pad)).astype(jnp.float32)

    kernel = functools.partial(_seq2seq_kernel, T, pred_length, L, H)
    n_in = 2 + len(flat) + 2

    out = pl.pallas_call(
        kernel,
        out_shape=jax.ShapeDtypeStruct((pred_length, B_pad, Out_pad),
                                       jnp.float32),
        in_specs=[pl.BlockSpec(memory_space=pltpu.MemorySpace.VMEM)] * n_in,
        out_specs=pl.BlockSpec(memory_space=pltpu.MemorySpace.VMEM),
    )(x_tm, dec0, *flat, lin_w, lin_b)                # (P, B_pad, Out_pad)

    return jnp.transpose(out, (1, 0, 2))[:B, :, :hidden_size]  # (B, P, out)


# ----------------------------------------------------------------------------
# Pure-JAX reference (correctness check)
# ----------------------------------------------------------------------------
def _lstm_layer_ref(seq, h0, c0, w_ih, w_hh, b):
    H = h0.shape[-1]

    def step(carry, x):
        hh, cc = carry
        gates = x @ w_ih + hh @ w_hh + b
        i = jax.nn.sigmoid(gates[:, :H])
        f = jax.nn.sigmoid(gates[:, H:2 * H])
        g = jnp.tanh(gates[:, 2 * H:3 * H])
        o = jax.nn.sigmoid(gates[:, 3 * H:])
        c2 = f * cc + i * g
        h2 = o * jnp.tanh(c2)
        return (h2, c2), h2

    (hT, cT), ys = jax.lax.scan(step, (h0, c0), seq)
    return ys, hT, cT


def seq2seq_ref(params, in_data, last_location, pred_length,
                num_layers, hidden_dim):
    B = in_data.shape[0]
    seq = jnp.transpose(in_data, (1, 0, 2))
    h, c = [], []
    for l in range(num_layers):
        w_ih, w_hh, b = params["enc"][l]
        seq, hT, cT = _lstm_layer_ref(seq, jnp.zeros((B, hidden_dim)),
                                      jnp.zeros((B, hidden_dim)), w_ih, w_hh, b)
        h.append(hT)
        c.append(cT)
    dec_in = last_location[:, 0, :]
    outs = []
    for _ in range(pred_length):
        layer_in = dec_in[None]
        for l in range(num_layers):
            w_ih, w_hh, b = params["dec"][l]
            layer_in, h[l], c[l] = _lstm_layer_ref(layer_in, h[l], c[l],
                                                   w_ih, w_hh, b)
        now = layer_in[0] @ params["lin_w"] + params["lin_b"] + dec_in
        outs.append(now)
        dec_in = now
    return jnp.stack(outs, axis=1)


# ----------------------------------------------------------------------------
if __name__ == "__main__":
    B, T = 2, 8
    input_size, hidden_size, hidden_dim, num_layers = 6, 4, 32, 2
    pred_length = 4

    key = jax.random.PRNGKey(0)
    kp, kx, kl = jax.random.split(key, 3)
    params = init_params(kp, input_size, hidden_size, hidden_dim, num_layers)
    in_data = jax.random.normal(kx, (B, T, input_size), jnp.float32)
    last_location = jax.random.normal(kl, (B, 1, hidden_size), jnp.float32)

    ref = seq2seq_ref(params, in_data, last_location, pred_length,
                      num_layers, hidden_dim)

    # f32 matmul path: exact algorithmic check against the JAX reference.
    out_f32 = seq2seq_forward(params, in_data, last_location, pred_length,
                              num_layers, hidden_dim,
                              matmul_dtype=jnp.float32)
    out_f32 = jax.block_until_ready(out_f32)
    assert out_f32.shape == (B, pred_length, hidden_size), out_f32.shape
    if not jnp.allclose(out_f32, ref, atol=2e-4, rtol=2e-4):
        raise AssertionError("Pallas Seq2Seq (f32) mismatch vs JAX reference")

    # bf16 matmul-operand path (v6e/v7x fast path): loose tolerance because
    # rounding accumulates through the T + pred_length recurrence.
    out_bf16 = seq2seq_forward(params, in_data, last_location, pred_length,
                               num_layers, hidden_dim,
                               matmul_dtype=jnp.bfloat16)
    out_bf16 = jax.block_until_ready(out_bf16)
    if not jnp.allclose(out_bf16, ref, atol=1e-1, rtol=1e-1):
        raise AssertionError("Pallas Seq2Seq (bf16 matmul) mismatch vs reference")

    print("KERNEL_OK")
</pallas_src>

<mosaic_0001>
module attributes {stable_mosaic.version = 11 : i64} {
  func.func @_seq2seq_kernel(%arg0: memref<8x8x128xf32, #tpu.memory_space<vmem>>, %arg1: memref<8x128xf32, #tpu.memory_space<vmem>>, %arg2: memref<160x128xf32, #tpu.memory_space<vmem>>, %arg3: memref<8x128xf32, #tpu.memory_space<vmem>>, %arg4: memref<64x128xf32, #tpu.memory_space<vmem>>, %arg5: memref<8x128xf32, #tpu.memory_space<vmem>>, %arg6: memref<160x128xf32, #tpu.memory_space<vmem>>, %arg7: memref<8x128xf32, #tpu.memory_space<vmem>>, %arg8: memref<64x128xf32, #tpu.memory_space<vmem>>, %arg9: memref<8x128xf32, #tpu.memory_space<vmem>>, %arg10: memref<32x128xf32, #tpu.memory_space<vmem>>, %arg11: memref<8x128xf32, #tpu.memory_space<vmem>>, %arg12: memref<4x8x128xf32, #tpu.memory_space<vmem>>) attributes {dimension_semantics = [], scalar_prefetch = 0 : i64, scratch_operands = 0 : i64, tpu.core_type = #tpu.core_type<tc>} {
    %cst = arith.constant 0.000000e+00 : f32
    %0 = vector.broadcast %cst : f32 to vector<8x32xf32>
    %cst_0 = arith.constant 0.000000e+00 : f32
    %1 = vector.broadcast %cst_0 : f32 to vector<8x32xf32>
    %cst_1 = arith.constant 0.000000e+00 : f32
    %2 = vector.broadcast %cst_1 : f32 to vector<8x32xf32>
    %cst_2 = arith.constant 0.000000e+00 : f32
    %3 = vector.broadcast %cst_2 : f32 to vector<8x32xf32>
    %c0 = arith.constant 0 : index
    %c0_3 = arith.constant 0 : index
    %c0_4 = arith.constant 0 : index
    %4 = vector.load %arg0[%c0, %c0_3, %c0_4] : memref<8x8x128xf32, #tpu.memory_space<vmem>>, vector<1x8x128xf32>
    %5 = vector.shape_cast %4 : vector<1x8x128xf32> to vector<8x128xf32>
    %6 = tpu.concatenate %5, %0 in 1 : vector<8x128xf32>, vector<8x32xf32> -> vector<8x160xf32>
    %c0_5 = arith.constant 0 : index
    %c0_6 = arith.constant 0 : index
    %7 = vector.load %arg2[%c0_5, %c0_6] : memref<160x128xf32, #tpu.memory_space<vmem>>, vector<160x128xf32>
    %cst_7 = arith.constant dense<0.000000e+00> : vector<8x128xf32>
    %8 = tpu.matmul %6, %7, %cst_7 {dimension_numbers = #tpu.dot_dimension_numbers<[1], [0], [0], [1], [0, 0, 1, 1], [], []>} : vector<8x160xf32>, vector<160x128xf32>, vector<8x128xf32> -> vector<8x128xf32>
    %c0_8 = arith.constant 0 : index
    %c0_9 = arith.constant 0 : index
    %9 = vector.load %arg3[%c0_8, %c0_9] : memref<8x128xf32, #tpu.memory_space<vmem>>, vector<8x128xf32>
    %10 = arith.addf %8, %9 : vector<8x128xf32>
    %11 = vector.extract_strided_slice %10 {offsets = [0, 0], sizes = [8, 32], strides = [1, 1]} : vector<8x128xf32> to vector<8x32xf32>
    %12 = arith.negf %11 : vector<8x32xf32>
    %13 = math.exp %12 : vector<8x32xf32>
    %cst_10 = arith.constant 1.000000e+00 : f32
    %14 = vector.broadcast %cst_10 : f32 to vector<8x32xf32>
    %15 = arith.addf %14, %13 : vector<8x32xf32>
    %16 = arith.divf %14, %15 : vector<8x32xf32>
    %17 = vector.extract_strided_slice %10 {offsets = [0, 32], sizes = [8, 32], strides = [1, 1]} : vector<8x128xf32> to vector<8x32xf32>
    %18 = arith.negf %17 : vector<8x32xf32>
    %19 = math.exp %18 : vector<8x32xf32>
    %cst_11 = arith.constant 1.000000e+00 : f32
    %20 = vector.broadcast %cst_11 : f32 to vector<8x32xf32>
    %21 = arith.addf %20, %19 : vector<8x32xf32>
    %22 = arith.divf %20, %21 : vector<8x32xf32>
    %23 = vector.extract_strided_slice %10 {offsets = [0, 64], sizes = [8, 32], strides = [1, 1]} : vector<8x128xf32> to vector<8x32xf32>
    %24 = math.tanh %23 : vector<8x32xf32>
    %25 = vector.extract_strided_slice %10 {offsets = [0, 96], sizes = [8, 32], strides = [1, 1]} : vector<8x128xf32> to vector<8x32xf32>
    %26 = arith.negf %25 : vector<8x32xf32>
    %27 = math.exp %26 : vector<8x32xf32>
    %cst_12 = arith.constant 1.000000e+00 : f32
    %28 = vector.broadcast %cst_12 : f32 to vector<8x32xf32>
    %29 = arith.addf %28, %27 : vector<8x32xf32>
    %30 = arith.divf %28, %29 : vector<8x32xf32>
    %31 = arith.mulf %22, %2 : vector<8x32xf32>
    %32 = arith.mulf %16, %24 : vector<8x32xf32>
    %33 = arith.addf %31, %32 : vector<8x32xf32>
    %34 = math.tanh %33 : vector<8x32xf32>
    %35 = arith.mulf %30, %34 : vector<8x32xf32>
    %36 = tpu.concatenate %35, %1 in 1 : vector<8x32xf32>, vector<8x32xf32> -> vector<8x64xf32>
    %c0_13 = arith.constant 0 : index
    %c0_14 = arith.constant 0 : index
    %37 = vector.load %arg4[%c0_13, %c0_14] : memref<64x128xf32, #tpu.memory_space<vmem>>, vector<64x128xf32>
    %cst_15 = arith.constant dense<0.000000e+00> : vector<8x128xf32>
    %38 = tpu.matmul %36, %37, %cst_15 {dimension_numbers = #tpu.dot_dimension_numbers<[1], [0], [0], [1], [0, 0, 1, 1], [], []>} : vector<8x64xf32>, vector<64x128xf32>, vector<8x128xf32> -> vector<8x128xf32>
    %c0_16 = arith.constant 0 : index
    %c0_17 = arith.constant 0 : index
    %39 = vector.load %arg5[%c0_16, %c0_17] : memref<8x128xf32, #tpu.memory_space<vmem>>, vector<8x128xf32>
    %40 = arith.addf %38, %39 : vector<8x128xf32>
    %41 = vector.extract_strided_slice %40 {offsets = [0, 0], sizes = [8, 32], strides = [1, 1]} : vector<8x128xf32> to vector<8x32xf32>
    %42 = arith.negf %41 : vector<8x32xf32>
    %43 = math.exp %42 : vector<8x32xf32>
    %cst_18 = arith.constant 1.000000e+00 : f32
    %44 = vector.broadcast %cst_18 : f32 to vector<8x32xf32>
    %45 = arith.addf %44, %43 : vector<8x32xf32>
    %46 = arith.divf %44, %45 : vector<8x32xf32>
    %47 = vector.extract_strided_slice %40 {offsets = [0, 32], sizes = [8, 32], strides = [1, 1]} : vector<8x128xf32> to vector<8x32xf32>
    %48 = arith.negf %47 : vector<8x32xf32>
    %49 = math.exp %48 : vector<8x32xf32>
    %cst_19 = arith.constant 1.000000e+00 : f32
    %50 = vector.broadcast %cst_19 : f32 to vector<8x32xf32>
    %51 = arith.addf %50, %49 : vector<8x32xf32>
    %52 = arith.divf %50, %51 : vector<8x32xf32>
    %53 = vector.extract_strided_slice %40 {offsets = [0, 64], sizes = [8, 32], strides = [1, 1]} : vector<8x128xf32> to vector<8x32xf32>
    %54 = math.tanh %53 : vector<8x32xf32>
    %55 = vector.extract_strided_slice %40 {offsets = [0, 96], sizes = [8, 32], strides = [1, 1]} : vector<8x128xf32> to vector<8x32xf32>
    %56 = arith.negf %55 : vector<8x32xf32>
    %57 = math.exp %56 : vector<8x32xf32>
    %cst_20 = arith.constant 1.000000e+00 : f32
    %58 = vector.broadcast %cst_20 : f32 to vector<8x32xf32>
    %59 = arith.addf %58, %57 : vector<8x32xf32>
    %60 = arith.divf %58, %59 : vector<8x32xf32>
    %61 = arith.mulf %52, %3 : vector<8x32xf32>
    %62 = arith.mulf %46, %54 : vector<8x32xf32>
    %63 = arith.addf %61, %62 : vector<8x32xf32>
    %64 = math.tanh %63 : vector<8x32xf32>
    %65 = arith.mulf %60, %64 : vector<8x32xf32>
    %c1 = arith.constant 1 : index
    %c0_21 = arith.constant 0 : index
    %c0_22 = arith.constant 0 : index
    %66 = vector.load %arg0[%c1, %c0_21, %c0_22] : memref<8x8x128xf32, #tpu.memory_space<vmem>>, vector<1x8x128xf32>
    %67 = vector.shape_cast %66 : vector<1x8x128xf32> to vector<8x128xf32>
    %68 = tpu.concatenate %67, %35 in 1 : vector<8x128xf32>, vector<8x32xf32> -> vector<8x160xf32>
    %c0_23 = arith.constant 0 : index
    %c0_24 = arith.constant 0 : index
    %69 = vector.load %arg2[%c0_23, %c0_24] : memref<160x128xf32, #tpu.memory_space<vmem>>, vector<160x128xf32>
    %cst_25 = arith.constant dense<0.000000e+00> : vector<8x128xf32>
    %70 = tpu.matmul %68, %69, %cst_25 {dimension_numbers = #tpu.dot_dimension_numbers<[1], [0], [0], [1], [0, 0, 1, 1], [], []>} : vector<8x160xf32>, vector<160x128xf32>, vector<8x128xf32> -> vector<8x128xf32>
    %c0_26 = arith.constant 0 : index
    %c0_27 = arith.constant 0 : index
    %71 = vector.load %arg3[%c0_26, %c0_27] : memref<8x128xf32, #tpu.memory_space<vmem>>, vector<8x128xf32>
    %72 = arith.addf %70, %71 : vector<8x128xf32>
    %73 = vector.extract_strided_slice %72 {offsets = [0, 0], sizes = [8, 32], strides = [1, 1]} : vector<8x128xf32> to vector<8x32xf32>
    %74 = arith.negf %73 : vector<8x32xf32>
    %75 = math.exp %74 : vector<8x32xf32>
    %cst_28 = arith.constant 1.000000e+00 : f32
    %76 = vector.broadcast %cst_28 : f32 to vector<8x32xf32>
    %77 = arith.addf %76, %75 : vector<8x32xf32>
    %78 = arith.divf %76, %77 : vector<8x32xf32>
    %79 = vector.extract_strided_slice %72 {offsets = [0, 32], sizes = [8, 32], strides = [1, 1]} : vector<8x128xf32> to vector<8x32xf32>
    %80 = arith.negf %79 : vector<8x32xf32>
    %81 = math.exp %80 : vector<8x32xf32>
    %cst_29 = arith.constant 1.000000e+00 : f32
    %82 = vector.broadcast %cst_29 : f32 to vector<8x32xf32>
    %83 = arith.addf %82, %81 : vector<8x32xf32>
    %84 = arith.divf %82, %83 : vector<8x32xf32>
    %85 = vector.extract_strided_slice %72 {offsets = [0, 64], sizes = [8, 32], strides = [1, 1]} : vector<8x128xf32> to vector<8x32xf32>
    %86 = math.tanh %85 : vector<8x32xf32>
    %87 = vector.extract_strided_slice %72 {offsets = [0, 96], sizes = [8, 32], strides = [1, 1]} : vector<8x128xf32> to vector<8x32xf32>
    %88 = arith.negf %87 : vector<8x32xf32>
    %89 = math.exp %88 : vector<8x32xf32>
    %cst_30 = arith.constant 1.000000e+00 : f32
    %90 = vector.broadcast %cst_30 : f32 to vector<8x32xf32>
    %91 = arith.addf %90, %89 : vector<8x32xf32>
    %92 = arith.divf %90, %91 : vector<8x32xf32>
    %93 = arith.mulf %84, %33 : vector<8x32xf32>
    %94 = arith.mulf %78, %86 : vector<8x32xf32>
    %95 = arith.addf %93, %94 : vector<8x32xf32>
    %96 = math.tanh %95 : vector<8x32xf32>
    %97 = arith.mulf %92, %96 : vector<8x32xf32>
    %98 = tpu.concatenate %97, %65 in 1 : vector<8x32xf32>, vector<8x32xf32> -> vector<8x64xf32>
    %c0_31 = arith.constant 0 : index
    %c0_32 = arith.constant 0 : index
    %99 = vector.load %arg4[%c0_31, %c0_32] : memref<64x128xf32, #tpu.memory_space<vmem>>, vector<64x128xf32>
    %cst_33 = arith.constant dense<0.000000e+00> : vector<8x128xf32>
    %100 = tpu.matmul %98, %99, %cst_33 {dimension_numbers = #tpu.dot_dimension_numbers<[1], [0], [0], [1], [0, 0, 1, 1], [], []>} : vector<8x64xf32>, vector<64x128xf32>, vector<8x128xf32> -> vector<8x128xf32>
    %c0_34 = arith.constant 0 : index
    %c0_35 = arith.constant 0 : index
    %101 = vector.load %arg5[%c0_34, %c0_35] : memref<8x128xf32, #tpu.memory_space<vmem>>, vector<8x128xf32>
    %102 = arith.addf %100, %101 : vector<8x128xf32>
    %103 = vector.extract_strided_slice %102 {offsets = [0, 0], sizes = [8, 32], strides = [1, 1]} : vector<8x128xf32> to vector<8x32xf32>
    %104 = arith.negf %103 : vector<8x32xf32>
    %105 = math.exp %104 : vector<8x32xf32>
    %cst_36 = arith.constant 1.000000e+00 : f32
    %106 = vector.broadcast %cst_36 : f32 to vector<8x32xf32>
    %107 = arith.addf %106, %105 : vector<8x32xf32>
    %108 = arith.divf %106, %107 : vector<8x32xf32>
    %109 = vector.extract_strided_slice %102 {offsets = [0, 32], sizes = [8, 32], strides = [1, 1]} : vector<8x128xf32> to vector<8x32xf32>
    %110 = arith.negf %109 : vector<8x32xf32>
    %111 = math.exp %110 : vector<8x32xf32>
    %cst_37 = arith.constant 1.000000e+00 : f32
    %112 = vector.broadcast %cst_37 : f32 to vector<8x32xf32>
    %113 = arith.addf %112, %111 : vector<8x32xf32>
    %114 = arith.divf %112, %113 : vector<8x32xf32>
    %115 = vector.extract_strided_slice %102 {offsets = [0, 64], sizes = [8, 32], strides = [1, 1]} : vector<8x128xf32> to vector<8x32xf32>
    %116 = math.tanh %115 : vector<8x32xf32>
    %117 = vector.extract_strided_slice %102 {offsets = [0, 96], sizes = [8, 32], strides = [1, 1]} : vector<8x128xf32> to vector<8x32xf32>
    %118 = arith.negf %117 : vector<8x32xf32>
    %119 = math.exp %118 : vector<8x32xf32>
    %cst_38 = arith.constant 1.000000e+00 : f32
    %120 = vector.broadcast %cst_38 : f32 to vector<8x32xf32>
    %121 = arith.addf %120, %119 : vector<8x32xf32>
    %122 = arith.divf %120, %121 : vector<8x32xf32>
    %123 = arith.mulf %114, %63 : vector<8x32xf32>
    %124 = arith.mulf %108, %116 : vector<8x32xf32>
    %125 = arith.addf %123, %124 : vector<8x32xf32>
    %126 = math.tanh %125 : vector<8x32xf32>
    %127 = arith.mulf %122, %126 : vector<8x32xf32>
    %c2 = arith.constant 2 : index
    %c0_39 = arith.constant 0 : index
    %c0_40 = arith.constant 0 : index
    %128 = vector.load %arg0[%c2, %c0_39, %c0_40] : memref<8x8x128xf32, #tpu.memory_space<vmem>>, vector<1x8x128xf32>
    %129 = vector.shape_cast %128 : vector<1x8x128xf32> to vector<8x128xf32>
    %130 = tpu.concatenate %129, %97 in 1 : vector<8x128xf32>, vector<8x32xf32> -> vector<8x160xf32>
    %c0_41 = arith.constant 0 : index
    %c0_42 = arith.constant 0 : index
    %131 = vector.load %arg2[%c0_41, %c0_42] : memref<160x128xf32, #tpu.memory_space<vmem>>, vector<160x128xf32>
    %cst_43 = arith.constant dense<0.000000e+00> : vector<8x128xf32>
    %132 = tpu.matmul %130, %131, %cst_43 {dimension_numbers = #tpu.dot_dimension_numbers<[1], [0], [0], [1], [0, 0, 1, 1], [], []>} : vector<8x160xf32>, vector<160x128xf32>, vector<8x128xf32> -> vector<8x128xf32>
    %c0_44 = arith.constant 0 : index
    %c0_45 = arith.constant 0 : index
    %133 = vector.load %arg3[%c0_44, %c0_45] : memref<8x128xf32, #tpu.memory_space<vmem>>, vector<8x128xf32>
    %134 = arith.addf %132, %133 : vector<8x128xf32>
    %135 = vector.extract_strided_slice %134 {offsets = [0, 0], sizes = [8, 32], strides = [1, 1]} : vector<8x128xf32> to vector<8x32xf32>
    %136 = arith.negf %135 : vector<8x32xf32>
    %137 = math.exp %136 : vector<8x32xf32>
    %cst_46 = arith.constant 1.000000e+00 : f32
    %138 = vector.broadcast %cst_46 : f32 to vector<8x32xf32>
    %139 = arith.addf %138, %137 : vector<8x32xf32>
    %140 = arith.divf %138, %139 : vector<8x32xf32>
    %141 = vector.extract_strided_slice %134 {offsets = [0, 32], sizes = [8, 32], strides = [1, 1]} : vector<8x128xf32> to vector<8x32xf32>
    %142 = arith.negf %141 : vector<8x32xf32>
    %143 = math.exp %142 : vector<8x32xf32>
    %cst_47 = arith.constant 1.000000e+00 : f32
    %144 = vector.broadcast %cst_47 : f32 to vector<8x32xf32>
    %145 = arith.addf %144, %143 : vector<8x32xf32>
    %146 = arith.divf %144, %145 : vector<8x32xf32>
    %147 = vector.extract_strided_slice %134 {offsets = [0, 64], sizes = [8, 32], strides = [1, 1]} : vector<8x128xf32> to vector<8x32xf32>
    %148 = math.tanh %147 : vector<8x32xf32>
    %149 = vector.extract_strided_slice %134 {offsets = [0, 96], sizes = [8, 32], strides = [1, 1]} : vector<8x128xf32> to vector<8x32xf32>
    %150 = arith.negf %149 : vector<8x32xf32>
    %151 = math.exp %150 : vector<8x32xf32>
    %cst_48 = arith.constant 1.000000e+00 : f32
    %152 = vector.broadcast %cst_48 : f32 to vector<8x32xf32>
    %153 = arith.addf %152, %151 : vector<8x32xf32>
    %154 = arith.divf %152, %153 : vector<8x32xf32>
    %155 = arith.mulf %146, %95 : vector<8x32xf32>
    %156 = arith.mulf %140, %148 : vector<8x32xf32>
    %157 = arith.addf %155, %156 : vector<8x32xf32>
    %158 = math.tanh %157 : vector<8x32xf32>
    %159 = arith.mulf %154, %158 : vector<8x32xf32>
    %160 = tpu.concatenate %159, %127 in 1 : vector<8x32xf32>, vector<8x32xf32> -> vector<8x64xf32>
    %c0_49 = arith.constant 0 : index
    %c0_50 = arith.constant 0 : index
    %161 = vector.load %arg4[%c0_49, %c0_50] : memref<64x128xf32, #tpu.memory_space<vmem>>, vector<64x128xf32>
    %cst_51 = arith.constant dense<0.000000e+00> : vector<8x128xf32>
    %162 = tpu.matmul %160, %161, %cst_51 {dimension_numbers = #tpu.dot_dimension_numbers<[1], [0], [0], [1], [0, 0, 1, 1], [], []>} : vector<8x64xf32>, vector<64x128xf32>, vector<8x128xf32> -> vector<8x128xf32>
    %c0_52 = arith.constant 0 : index
    %c0_53 = arith.constant 0 : index
    %163 = vector.load %arg5[%c0_52, %c0_53] : memref<8x128xf32, #tpu.memory_space<vmem>>, vector<8x128xf32>
    %164 = arith.addf %162, %163 : vector<8x128xf32>
    %165 = vector.extract_strided_slice %164 {offsets = [0, 0], sizes = [8, 32], strides = [1, 1]} : vector<8x128xf32> to vector<8x32xf32>
    %166 = arith.negf %165 : vector<8x32xf32>
    %167 = math.exp %166 : vector<8x32xf32>
    %cst_54 = arith.constant 1.000000e+00 : f32
    %168 = vector.broadcast %cst_54 : f32 to vector<8x32xf32>
    %169 = arith.addf %168, %167 : vector<8x32xf32>
    %170 = arith.divf %168, %169 : vector<8x32xf32>
    %171 = vector.extract_strided_slice %164 {offsets = [0, 32], sizes = [8, 32], strides = [1, 1]} : vector<8x128xf32> to vector<8x32xf32>
    %172 = arith.negf %171 : vector<8x32xf32>
    %173 = math.exp %172 : vector<8x32xf32>
    %cst_55 = arith.constant 1.000000e+00 : f32
    %174 = vector.broadcast %cst_55 : f32 to vector<8x32xf32>
    %175 = arith.addf %174, %173 : vector<8x32xf32>
    %176 = arith.divf %174, %175 : vector<8x32xf32>
    %177 = vector.extract_strided_slice %164 {offsets = [0, 64], sizes = [8, 32], strides = [1, 1]} : vector<8x128xf32> to vector<8x32xf32>
    %178 = math.tanh %177 : vector<8x32xf32>
    %179 = vector.extract_strided_slice %164 {offsets = [0, 96], sizes = [8, 32], strides = [1, 1]} : vector<8x128xf32> to vector<8x32xf32>
    %180 = arith.negf %179 : vector<8x32xf32>
    %181 = math.exp %180 : vector<8x32xf32>
    %cst_56 = arith.constant 1.000000e+00 : f32
    %182 = vector.broadcast %cst_56 : f32 to vector<8x32xf32>
    %183 = arith.addf %182, %181 : vector<8x32xf32>
    %184 = arith.divf %182, %183 : vector<8x32xf32>
    %185 = arith.mulf %176, %125 : vector<8x32xf32>
    %186 = arith.mulf %170, %178 : vector<8x32xf32>
    %187 = arith.addf %185, %186 : vector<8x32xf32>
    %188 = math.tanh %187 : vector<8x32xf32>
    %189 = arith.mulf %184, %188 : vector<8x32xf32>
    %c3 = arith.constant 3 : index
    %c0_57 = arith.constant 0 : index
    %c0_58 = arith.constant 0 : index
    %190 = vector.load %arg0[%c3, %c0_57, %c0_58] : memref<8x8x128xf32, #tpu.memory_space<vmem>>, vector<1x8x128xf32>
    %191 = vector.shape_cast %190 : vector<1x8x128xf32> to vector<8x128xf32>
    %192 = tpu.concatenate %191, %159 in 1 : vector<8x128xf32>, vector<8x32xf32> -> vector<8x160xf32>
    %c0_59 = arith.constant 0 : index
    %c0_60 = arith.constant 0 : index
    %193 = vector.load %arg2[%c0_59, %c0_60] : memref<160x128xf32, #tpu.memory_space<vmem>>, vector<160x128xf32>
    %cst_61 = arith.constant dense<0.000000e+00> : vector<8x128xf32>
    %194 = tpu.matmul %192, %193, %cst_61 {dimension_numbers = #tpu.dot_dimension_numbers<[1], [0], [0], [1], [0, 0, 1, 1], [], []>} : vector<8x160xf32>, vector<160x128xf32>, vector<8x128xf32> -> vector<8x128xf32>
    %c0_62 = arith.constant 0 : index
    %c0_63 = arith.constant 0 : index
    %195 = vector.load %arg3[%c0_62, %c0_63] : memref<8x128xf32, #tpu.memory_space<vmem>>, vector<8x128xf32>
    %196 = arith.addf %194, %195 : vector<8x128xf32>
    %197 = vector.extract_strided_slice %196 {offsets = [0, 0], sizes = [8, 32], strides = [1, 1]} : vector<8x128xf32> to vector<8x32xf32>
    %198 = arith.negf %197 : vector<8x32xf32>
    %199 = math.exp %198 : vector<8x32xf32>
    %cst_64 = arith.constant 1.000000e+00 : f32
    %200 = vector.broadcast %cst_64 : f32 to vector<8x32xf32>
    %201 = arith.addf %200, %199 : vector<8x32xf32>
    %202 = arith.divf %200, %201 : vector<8x32xf32>
    %203 = vector.extract_strided_slice %196 {offsets = [0, 32], sizes = [8, 32], strides = [1, 1]} : vector<8x128xf32> to vector<8x32xf32>
    %204 = arith.negf %203 : vector<8x32xf32>
    %205 = math.exp %204 : vector<8x32xf32>
    %cst_65 = arith.constant 1.000000e+00 : f32
    %206 = vector.broadcast %cst_65 : f32 to vector<8x32xf32>
    %207 = arith.addf %206, %205 : vector<8x32xf32>
    %208 = arith.divf %206, %207 : vector<8x32xf32>
    %209 = vector.extract_strided_slice %196 {offsets = [0, 64], sizes = [8, 32], strides = [1, 1]} : vector<8x128xf32> to vector<8x32xf32>
    %210 = math.tanh %209 : vector<8x32xf32>
    %211 = vector.extract_strided_slice %196 {offsets = [0, 96], sizes = [8, 32], strides = [1, 1]} : vector<8x128xf32> to vector<8x32xf32>
    %212 = arith.negf %211 : vector<8x32xf32>
    %213 = math.exp %212 : vector<8x32xf32>
    %cst_66 = arith.constant 1.000000e+00 : f32
    %214 = vector.broadcast %cst_66 : f32 to vector<8x32xf32>
    %215 = arith.addf %214, %213 : vector<8x32xf32>
    %216 = arith.divf %214, %215 : vector<8x32xf32>
    %217 = arith.mulf %208, %157 : vector<8x32xf32>
    %218 = arith.mulf %202, %210 : vector<8x32xf32>
    %219 = arith.addf %217, %218 : vector<8x32xf32>
    %220 = math.tanh %219 : vector<8x32xf32>
    %221 = arith.mulf %216, %220 : vector<8x32xf32>
    %222 = tpu.concatenate %221, %189 in 1 : vector<8x32xf32>, vector<8x32xf32> -> vector<8x64xf32>
    %c0_67 = arith.constant 0 : index
    %c0_68 = arith.constant 0 : index
    %223 = vector.load %arg4[%c0_67, %c0_68] : memref<64x128xf32, #tpu.memory_space<vmem>>, vector<64x128xf32>
    %cst_69 = arith.constant dense<0.000000e+00> : vector<8x128xf32>
    %224 = tpu.matmul %222, %223, %cst_69 {dimension_numbers = #tpu.dot_dimension_numbers<[1], [0], [0], [1], [0, 0, 1, 1], [], []>} : vector<8x64xf32>, vector<64x128xf32>, vector<8x128xf32> -> vector<8x128xf32>
    %c0_70 = arith.constant 0 : index
    %c0_71 = arith.constant 0 : index
    %225 = vector.load %arg5[%c0_70, %c0_71] : memref<8x128xf32, #tpu.memory_space<vmem>>, vector<8x128xf32>
    %226 = arith.addf %224, %225 : vector<8x128xf32>
    %227 = vector.extract_strided_slice %226 {offsets = [0, 0], sizes = [8, 32], strides = [1, 1]} : vector<8x128xf32> to vector<8x32xf32>
    %228 = arith.negf %227 : vector<8x32xf32>
    %229 = math.exp %228 : vector<8x32xf32>
    %cst_72 = arith.constant 1.000000e+00 : f32
    %230 = vector.broadcast %cst_72 : f32 to vector<8x32xf32>
    %231 = arith.addf %230, %229 : vector<8x32xf32>
    %232 = arith.divf %230, %231 : vector<8x32xf32>
    %233 = vector.extract_strided_slice %226 {offsets = [0, 32], sizes = [8, 32], strides = [1, 1]} : vector<8x128xf32> to vector<8x32xf32>
    %234 = arith.negf %233 : vector<8x32xf32>
    %235 = math.exp %234 : vector<8x32xf32>
    %cst_73 = arith.constant 1.000000e+00 : f32
    %236 = vector.broadcast %cst_73 : f32 to vector<8x32xf32>
    %237 = arith.addf %236, %235 : vector<8x32xf32>
    %238 = arith.divf %236, %237 : vector<8x32xf32>
    %239 = vector.extract_strided_slice %226 {offsets = [0, 64], sizes = [8, 32], strides = [1, 1]} : vector<8x128xf32> to vector<8x32xf32>
    %240 = math.tanh %239 : vector<8x32xf32>
    %241 = vector.extract_strided_slice %226 {offsets = [0, 96], sizes = [8, 32], strides = [1, 1]} : vector<8x128xf32> to vector<8x32xf32>
    %242 = arith.negf %241 : vector<8x32xf32>
    %243 = math.exp %242 : vector<8x32xf32>
    %cst_74 = arith.constant 1.000000e+00 : f32
    %244 = vector.broadcast %cst_74 : f32 to vector<8x32xf32>
    %245 = arith.addf %244, %243 : vector<8x32xf32>
    %246 = arith.divf %244, %245 : vector<8x32xf32>
    %247 = arith.mulf %238, %187 : vector<8x32xf32>
    %248 = arith.mulf %232, %240 : vector<8x32xf32>
    %249 = arith.addf %247, %248 : vector<8x32xf32>
    %250 = math.tanh %249 : vector<8x32xf32>
    %251 = arith.mulf %246, %250 : vector<8x32xf32>
    %c4 = arith.constant 4 : index
    %c0_75 = arith.constant 0 : index
    %c0_76 = arith.constant 0 : index
    %252 = vector.load %arg0[%c4, %c0_75, %c0_76] : memref<8x8x128xf32, #tpu.memory_space<vmem>>, vector<1x8x128xf32>
    %253 = vector.shape_cast %252 : vector<1x8x128xf32> to vector<8x128xf32>
    %254 = tpu.concatenate %253, %221 in 1 : vector<8x128xf32>, vector<8x32xf32> -> vector<8x160xf32>
    %c0_77 = arith.constant 0 : index
    %c0_78 = arith.constant 0 : index
    %255 = vector.load %arg2[%c0_77, %c0_78] : memref<160x128xf32, #tpu.memory_space<vmem>>, vector<160x128xf32>
    %cst_79 = arith.constant dense<0.000000e+00> : vector<8x128xf32>
    %256 = tpu.matmul %254, %255, %cst_79 {dimension_numbers = #tpu.dot_dimension_numbers<[1], [0], [0], [1], [0, 0, 1, 1], [], []>} : vector<8x160xf32>, vector<160x128xf32>, vector<8x128xf32> -> vector<8x128xf32>
    %c0_80 = arith.constant 0 : index
    %c0_81 = arith.constant 0 : index
    %257 = vector.load %arg3[%c0_80, %c0_81] : memref<8x128xf32, #tpu.memory_space<vmem>>, vector<8x128xf32>
    %258 = arith.addf %256, %257 : vector<8x128xf32>
    %259 = vector.extract_strided_slice %258 {offsets = [0, 0], sizes = [8, 32], strides = [1, 1]} : vector<8x128xf32> to vector<8x32xf32>
    %260 = arith.negf %259 : vector<8x32xf32>
    %261 = math.exp %260 : vector<8x32xf32>
    %cst_82 = arith.constant 1.000000e+00 : f32
    %262 = vector.broadcast %cst_82 : f32 to vector<8x32xf32>
    %263 = arith.addf %262, %261 : vector<8x32xf32>
    %264 = arith.divf %262, %263 : vector<8x32xf32>
    %265 = vector.extract_strided_slice %258 {offsets = [0, 32], sizes = [8, 32], strides = [1, 1]} : vector<8x128xf32> to vector<8x32xf32>
    %266 = arith.negf %265 : vector<8x32xf32>
    %267 = math.exp %266 : vector<8x32xf32>
    %cst_83 = arith.constant 1.000000e+00 : f32
    %268 = vector.broadcast %cst_83 : f32 to vector<8x32xf32>
    %269 = arith.addf %268, %267 : vector<8x32xf32>
    %270 = arith.divf %268, %269 : vector<8x32xf32>
    %271 = vector.extract_strided_slice %258 {offsets = [0, 64], sizes = [8, 32], strides = [1, 1]} : vector<8x128xf32> to vector<8x32xf32>
    %272 = math.tanh %271 : vector<8x32xf32>
    %273 = vector.extract_strided_slice %258 {offsets = [0, 96], sizes = [8, 32], strides = [1, 1]} : vector<8x128xf32> to vector<8x32xf32>
    %274 = arith.negf %273 : vector<8x32xf32>
    %275 = math.exp %274 : vector<8x32xf32>
    %cst_84 = arith.constant 1.000000e+00 : f32
    %276 = vector.broadcast %cst_84 : f32 to vector<8x32xf32>
    %277 = arith.addf %276, %275 : vector<8x32xf32>
    %278 = arith.divf %276, %277 : vector<8x32xf32>
    %279 = arith.mulf %270, %219 : vector<8x32xf32>
    %280 = arith.mulf %264, %272 : vector<8x32xf32>
    %281 = arith.addf %279, %280 : vector<8x32xf32>
    %282 = math.tanh %281 : vector<8x32xf32>
    %283 = arith.mulf %278, %282 : vector<8x32xf32>
    %284 = tpu.concatenate %283, %251 in 1 : vector<8x32xf32>, vector<8x32xf32> -> vector<8x64xf32>
    %c0_85 = arith.constant 0 : index
    %c0_86 = arith.constant 0 : index
    %285 = vector.load %arg4[%c0_85, %c0_86] : memref<64x128xf32, #tpu.memory_space<vmem>>, vector<64x128xf32>
    %cst_87 = arith.constant dense<0.000000e+00> : vector<8x128xf32>
    %286 = tpu.matmul %284, %285, %cst_87 {dimension_numbers = #tpu.dot_dimension_numbers<[1], [0], [0], [1], [0, 0, 1, 1], [], []>} : vector<8x64xf32>, vector<64x128xf32>, vector<8x128xf32> -> vector<8x128xf32>
    %c0_88 = arith.constant 0 : index
    %c0_89 = arith.constant 0 : index
    %287 = vector.load %arg5[%c0_88, %c0_89] : memref<8x128xf32, #tpu.memory_space<vmem>>, vector<8x128xf32>
    %288 = arith.addf %286, %287 : vector<8x128xf32>
    %289 = vector.extract_strided_slice %288 {offsets = [0, 0], sizes = [8, 32], strides = [1, 1]} : vector<8x128xf32> to vector<8x32xf32>
    %290 = arith.negf %289 : vector<8x32xf32>
    %291 = math.exp %290 : vector<8x32xf32>
    %cst_90 = arith.constant 1.000000e+00 : f32
    %292 = vector.broadcast %cst_90 : f32 to vector<8x32xf32>
    %293 = arith.addf %292, %291 : vector<8x32xf32>
    %294 = arith.divf %292, %293 : vector<8x32xf32>
    %295 = vector.extract_strided_slice %288 {offsets = [0, 32], sizes = [8, 32], strides = [1, 1]} : vector<8x128xf32> to vector<8x32xf32>
    %296 = arith.negf %295 : vector<8x32xf32>
    %297 = math.exp %296 : vector<8x32xf32>
    %cst_91 = arith.constant 1.000000e+00 : f32
    %298 = vector.broadcast %cst_91 : f32 to vector<8x32xf32>
    %299 = arith.addf %298, %297 : vector<8x32xf32>
    %300 = arith.divf %298, %299 : vector<8x32xf32>
    %301 = vector.extract_strided_slice %288 {offsets = [0, 64], sizes = [8, 32], strides = [1, 1]} : vector<8x128xf32> to vector<8x32xf32>
    %302 = math.tanh %301 : vector<8x32xf32>
    %303 = vector.extract_strided_slice %288 {offsets = [0, 96], sizes = [8, 32], strides = [1, 1]} : vector<8x128xf32> to vector<8x32xf32>
    %304 = arith.negf %303 : vector<8x32xf32>
    %305 = math.exp %304 : vector<8x32xf32>
    %cst_92 = arith.constant 1.000000e+00 : f32
    %306 = vector.broadcast %cst_92 : f32 to vector<8x32xf32>
    %307 = arith.addf %306, %305 : vector<8x32xf32>
    %308 = arith.divf %306, %307 : vector<8x32xf32>
    %309 = arith.mulf %300, %249 : vector<8x32xf32>
    %310 = arith.mulf %294, %302 : vector<8x32xf32>
    %311 = arith.addf %309, %310 : vector<8x32xf32>
    %312 = math.tanh %311 : vector<8x32xf32>
    %313 = arith.mulf %308, %312 : vector<8x32xf32>
    %c5 = arith.constant 5 : index
    %c0_93 = arith.constant 0 : index
    %c0_94 = arith.constant 0 : index
    %314 = vector.load %arg0[%c5, %c0_93, %c0_94] : memref<8x8x128xf32, #tpu.memory_space<vmem>>, vector<1x8x128xf32>
    %315 = vector.shape_cast %314 : vector<1x8x128xf32> to vector<8x128xf32>
    %316 = tpu.concatenate %315, %283 in 1 : vector<8x128xf32>, vector<8x32xf32> -> vector<8x160xf32>
    %c0_95 = arith.constant 0 : index
    %c0_96 = arith.constant 0 : index
    %317 = vector.load %arg2[%c0_95, %c0_96] : memref<160x128xf32, #tpu.memory_space<vmem>>, vector<160x128xf32>
    %cst_97 = arith.constant dense<0.000000e+00> : vector<8x128xf32>
    %318 = tpu.matmul %316, %317, %cst_97 {dimension_numbers = #tpu.dot_dimension_numbers<[1], [0], [0], [1], [0, 0, 1, 1], [], []>} : vector<8x160xf32>, vector<160x128xf32>, vector<8x128xf32> -> vector<8x128xf32>
    %c0_98 = arith.constant 0 : index
    %c0_99 = arith.constant 0 : index
    %319 = vector.load %arg3[%c0_98, %c0_99] : memref<8x128xf32, #tpu.memory_space<vmem>>, vector<8x128xf32>
    %320 = arith.addf %318, %319 : vector<8x128xf32>
    %321 = vector.extract_strided_slice %320 {offsets = [0, 0], sizes = [8, 32], strides = [1, 1]} : vector<8x128xf32> to vector<8x32xf32>
    %322 = arith.negf %321 : vector<8x32xf32>
    %323 = math.exp %322 : vector<8x32xf32>
    %cst_100 = arith.constant 1.000000e+00 : f32
    %324 = vector.broadcast %cst_100 : f32 to vector<8x32xf32>
    %325 = arith.addf %324, %323 : vector<8x32xf32>
    %326 = arith.divf %324, %325 : vector<8x32xf32>
    %327 = vector.extract_strided_slice %320 {offsets = [0, 32], sizes = [8, 32], strides = [1, 1]} : vector<8x128xf32> to vector<8x32xf32>
    %328 = arith.negf %327 : vector<8x32xf32>
    %329 = math.exp %328 : vector<8x32xf32>
    %cst_101 = arith.constant 1.000000e+00 : f32
    %330 = vector.broadcast %cst_101 : f32 to vector<8x32xf32>
    %331 = arith.addf %330, %329 : vector<8x32xf32>
    %332 = arith.divf %330, %331 : vector<8x32xf32>
    %333 = vector.extract_strided_slice %320 {offsets = [0, 64], sizes = [8, 32], strides = [1, 1]} : vector<8x128xf32> to vector<8x32xf32>
    %334 = math.tanh %333 : vector<8x32xf32>
    %335 = vector.extract_strided_slice %320 {offsets = [0, 96], sizes = [8, 32], strides = [1, 1]} : vector<8x128xf32> to vector<8x32xf32>
    %336 = arith.negf %335 : vector<8x32xf32>
    %337 = math.exp %336 : vector<8x32xf32>
    %cst_102 = arith.constant 1.000000e+00 : f32
    %338 = vector.broadcast %cst_102 : f32 to vector<8x32xf32>
    %339 = arith.addf %338, %337 : vector<8x32xf32>
    %340 = arith.divf %338, %339 : vector<8x32xf32>
    %341 = arith.mulf %332, %281 : vector<8x32xf32>
    %342 = arith.mulf %326, %334 : vector<8x32xf32>
    %343 = arith.addf %341, %342 : vector<8x32xf32>
    %344 = math.tanh %343 : vector<8x32xf32>
    %345 = arith.mulf %340, %344 : vector<8x32xf32>
    %346 = tpu.concatenate %345, %313 in 1 : vector<8x32xf32>, vector<8x32xf32> -> vector<8x64xf32>
    %c0_103 = arith.constant 0 : index
    %c0_104 = arith.constant 0 : index
    %347 = vector.load %arg4[%c0_103, %c0_104] : memref<64x128xf32, #tpu.memory_space<vmem>>, vector<64x128xf32>
    %cst_105 = arith.constant dense<0.000000e+00> : vector<8x128xf32>
    %348 = tpu.matmul %346, %347, %cst_105 {dimension_numbers = #tpu.dot_dimension_numbers<[1], [0], [0], [1], [0, 0, 1, 1], [], []>} : vector<8x64xf32>, vector<64x128xf32>, vector<8x128xf32> -> vector<8x128xf32>
    %c0_106 = arith.constant 0 : index
    %c0_107 = arith.constant 0 : index
    %349 = vector.load %arg5[%c0_106, %c0_107] : memref<8x128xf32, #tpu.memory_space<vmem>>, vector<8x128xf32>
    %350 = arith.addf %348, %349 : vector<8x128xf32>
    %351 = vector.extract_strided_slice %350 {offsets = [0, 0], sizes = [8, 32], strides = [1, 1]} : vector<8x128xf32> to vector<8x32xf32>
    %352 = arith.negf %351 : vector<8x32xf32>
    %353 = math.exp %352 : vector<8x32xf32>
    %cst_108 = arith.constant 1.000000e+00 : f32
    %354 = vector.broadcast %cst_108 : f32 to vector<8x32xf32>
    %355 = arith.addf %354, %353 : vector<8x32xf32>
    %356 = arith.divf %354, %355 : vector<8x32xf32>
    %357 = vector.extract_strided_slice %350 {offsets = [0, 32], sizes = [8, 32], strides = [1, 1]} : vector<8x128xf32> to vector<8x32xf32>
    %358 = arith.negf %357 : vector<8x32xf32>
    %359 = math.exp %358 : vector<8x32xf32>
    %cst_109 = arith.constant 1.000000e+00 : f32
    %360 = vector.broadcast %cst_109 : f32 to vector<8x32xf32>
    %361 = arith.addf %360, %359 : vector<8x32xf32>
    %362 = arith.divf %360, %361 : vector<8x32xf32>
    %363 = vector.extract_strided_slice %350 {offsets = [0, 64], sizes = [8, 32], strides = [1, 1]} : vector<8x128xf32> to vector<8x32xf32>
    %364 = math.tanh %363 : vector<8x32xf32>
    %365 = vector.extract_strided_slice %350 {offsets = [0, 96], sizes = [8, 32], strides = [1, 1]} : vector<8x128xf32> to vector<8x32xf32>
    %366 = arith.negf %365 : vector<8x32xf32>
    %367 = math.exp %366 : vector<8x32xf32>
    %cst_110 = arith.constant 1.000000e+00 : f32
    %368 = vector.broadcast %cst_110 : f32 to vector<8x32xf32>
    %369 = arith.addf %368, %367 : vector<8x32xf32>
    %370 = arith.divf %368, %369 : vector<8x32xf32>
    %371 = arith.mulf %362, %311 : vector<8x32xf32>
    %372 = arith.mulf %356, %364 : vector<8x32xf32>
    %373 = arith.addf %371, %372 : vector<8x32xf32>
    %374 = math.tanh %373 : vector<8x32xf32>
    %375 = arith.mulf %370, %374 : vector<8x32xf32>
    %c6 = arith.constant 6 : index
    %c0_111 = arith.constant 0 : index
    %c0_112 = arith.constant 0 : index
    %376 = vector.load %arg0[%c6, %c0_111, %c0_112] : memref<8x8x128xf32, #tpu.memory_space<vmem>>, vector<1x8x128xf32>
    %377 = vector.shape_cast %376 : vector<1x8x128xf32> to vector<8x128xf32>
    %378 = tpu.concatenate %377, %345 in 1 : vector<8x128xf32>, vector<8x32xf32> -> vector<8x160xf32>
    %c0_113 = arith.constant 0 : index
    %c0_114 = arith.constant 0 : index
    %379 = vector.load %arg2[%c0_113, %c0_114] : memref<160x128xf32, #tpu.memory_space<vmem>>, vector<160x128xf32>
    %cst_115 = arith.constant dense<0.000000e+00> : vector<8x128xf32>
    %380 = tpu.matmul %378, %379, %cst_115 {dimension_numbers = #tpu.dot_dimension_numbers<[1], [0], [0], [1], [0, 0, 1, 1], [], []>} : vector<8x160xf32>, vector<160x128xf32>, vector<8x128xf32> -> vector<8x128xf32>
    %c0_116 = arith.constant 0 : index
    %c0_117 = arith.constant 0 : index
    %381 = vector.load %arg3[%c0_116, %c0_117] : memref<8x128xf32, #tpu.memory_space<vmem>>, vector<8x128xf32>
    %382 = arith.addf %380, %381 : vector<8x128xf32>
    %383 = vector.extract_strided_slice %382 {offsets = [0, 0], sizes = [8, 32], strides = [1, 1]} : vector<8x128xf32> to vector<8x32xf32>
    %384 = arith.negf %383 : vector<8x32xf32>
    %385 = math.exp %384 : vector<8x32xf32>
    %cst_118 = arith.constant 1.000000e+00 : f32
    %386 = vector.broadcast %cst_118 : f32 to vector<8x32xf32>
    %387 = arith.addf %386, %385 : vector<8x32xf32>
    %388 = arith.divf %386, %387 : vector<8x32xf32>
    %389 = vector.extract_strided_slice %382 {offsets = [0, 32], sizes = [8, 32], strides = [1, 1]} : vector<8x128xf32> to vector<8x32xf32>
    %390 = arith.negf %389 : vector<8x32xf32>
    %391 = math.exp %390 : vector<8x32xf32>
    %cst_119 = arith.constant 1.000000e+00 : f32
    %392 = vector.broadcast %cst_119 : f32 to vector<8x32xf32>
    %393 = arith.addf %392, %391 : vector<8x32xf32>
    %394 = arith.divf %392, %393 : vector<8x32xf32>
    %395 = vector.extract_strided_slice %382 {offsets = [0, 64], sizes = [8, 32], strides = [1, 1]} : vector<8x128xf32> to vector<8x32xf32>
    %396 = math.tanh %395 : vector<8x32xf32>
    %397 = vector.extract_strided_slice %382 {offsets = [0, 96], sizes = [8, 32], strides = [1, 1]} : vector<8x128xf32> to vector<8x32xf32>
    %398 = arith.negf %397 : vector<8x32xf32>
    %399 = math.exp %398 : vector<8x32xf32>
    %cst_120 = arith.constant 1.000000e+00 : f32
    %400 = vector.broadcast %cst_120 : f32 to vector<8x32xf32>
    %401 = arith.addf %400, %399 : vector<8x32xf32>
    %402 = arith.divf %400, %401 : vector<8x32xf32>
    %403 = arith.mulf %394, %343 : vector<8x32xf32>
    %404 = arith.mulf %388, %396 : vector<8x32xf32>
    %405 = arith.addf %403, %404 : vector<8x32xf32>
    %406 = math.tanh %405 : vector<8x32xf32>
    %407 = arith.mulf %402, %406 : vector<8x32xf32>
    %408 = tpu.concatenate %407, %375 in 1 : vector<8x32xf32>, vector<8x32xf32> -> vector<8x64xf32>
    %c0_121 = arith.constant 0 : index
    %c0_122 = arith.constant 0 : index
    %409 = vector.load %arg4[%c0_121, %c0_122] : memref<64x128xf32, #tpu.memory_space<vmem>>, vector<64x128xf32>
    %cst_123 = arith.constant dense<0.000000e+00> : vector<8x128xf32>
    %410 = tpu.matmul %408, %409, %cst_123 {dimension_numbers = #tpu.dot_dimension_numbers<[1], [0], [0], [1], [0, 0, 1, 1], [], []>} : vector<8x64xf32>, vector<64x128xf32>, vector<8x128xf32> -> vector<8x128xf32>
    %c0_124 = arith.constant 0 : index
    %c0_125 = arith.constant 0 : index
    %411 = vector.load %arg5[%c0_124, %c0_125] : memref<8x128xf32, #tpu.memory_space<vmem>>, vector<8x128xf32>
    %412 = arith.addf %410, %411 : vector<8x128xf32>
    %413 = vector.extract_strided_slice %412 {offsets = [0, 0], sizes = [8, 32], strides = [1, 1]} : vector<8x128xf32> to vector<8x32xf32>
    %414 = arith.negf %413 : vector<8x32xf32>
    %415 = math.exp %414 : vector<8x32xf32>
    %cst_126 = arith.constant 1.000000e+00 : f32
    %416 = vector.broadcast %cst_126 : f32 to vector<8x32xf32>
    %417 = arith.addf %416, %415 : vector<8x32xf32>
    %418 = arith.divf %416, %417 : vector<8x32xf32>
    %419 = vector.extract_strided_slice %412 {offsets = [0, 32], sizes = [8, 32], strides = [1, 1]} : vector<8x128xf32> to vector<8x32xf32>
    %420 = arith.negf %419 : vector<8x32xf32>
    %421 = math.exp %420 : vector<8x32xf32>
    %cst_127 = arith.constant 1.000000e+00 : f32
    %422 = vector.broadcast %cst_127 : f32 to vector<8x32xf32>
    %423 = arith.addf %422, %421 : vector<8x32xf32>
    %424 = arith.divf %422, %423 : vector<8x32xf32>
    %425 = vector.extract_strided_slice %412 {offsets = [0, 64], sizes = [8, 32], strides = [1, 1]} : vector<8x128xf32> to vector<8x32xf32>
    %426 = math.tanh %425 : vector<8x32xf32>
    %427 = vector.extract_strided_slice %412 {offsets = [0, 96], sizes = [8, 32], strides = [1, 1]} : vector<8x128xf32> to vector<8x32xf32>
    %428 = arith.negf %427 : vector<8x32xf32>
    %429 = math.exp %428 : vector<8x32xf32>
    %cst_128 = arith.constant 1.000000e+00 : f32
    %430 = vector.broadcast %cst_128 : f32 to vector<8x32xf32>
    %431 = arith.addf %430, %429 : vector<8x32xf32>
    %432 = arith.divf %430, %431 : vector<8x32xf32>
    %433 = arith.mulf %424, %373 : vector<8x32xf32>
    %434 = arith.mulf %418, %426 : vector<8x32xf32>
    %435 = arith.addf %433, %434 : vector<8x32xf32>
    %436 = math.tanh %435 : vector<8x32xf32>
    %437 = arith.mulf %432, %436 : vector<8x32xf32>
    %c7 = arith.constant 7 : index
    %c0_129 = arith.constant 0 : index
    %c0_130 = arith.constant 0 : index
    %438 = vector.load %arg0[%c7, %c0_129, %c0_130] : memref<8x8x128xf32, #tpu.memory_space<vmem>>, vector<1x8x128xf32>
    %439 = vector.shape_cast %438 : vector<1x8x128xf32> to vector<8x128xf32>
    %440 = tpu.concatenate %439, %407 in 1 : vector<8x128xf32>, vector<8x32xf32> -> vector<8x160xf32>
    %c0_131 = arith.constant 0 : index
    %c0_132 = arith.constant 0 : index
    %441 = vector.load %arg2[%c0_131, %c0_132] : memref<160x128xf32, #tpu.memory_space<vmem>>, vector<160x128xf32>
    %cst_133 = arith.constant dense<0.000000e+00> : vector<8x128xf32>
    %442 = tpu.matmul %440, %441, %cst_133 {dimension_numbers = #tpu.dot_dimension_numbers<[1], [0], [0], [1], [0, 0, 1, 1], [], []>} : vector<8x160xf32>, vector<160x128xf32>, vector<8x128xf32> -> vector<8x128xf32>
    %c0_134 = arith.constant 0 : index
    %c0_135 = arith.constant 0 : index
    %443 = vector.load %arg3[%c0_134, %c0_135] : memref<8x128xf32, #tpu.memory_space<vmem>>, vector<8x128xf32>
    %444 = arith.addf %442, %443 : vector<8x128xf32>
    %445 = vector.extract_strided_slice %444 {offsets = [0, 0], sizes = [8, 32], strides = [1, 1]} : vector<8x128xf32> to vector<8x32xf32>
    %446 = arith.negf %445 : vector<8x32xf32>
    %447 = math.exp %446 : vector<8x32xf32>
    %cst_136 = arith.constant 1.000000e+00 : f32
    %448 = vector.broadcast %cst_136 : f32 to vector<8x32xf32>
    %449 = arith.addf %448, %447 : vector<8x32xf32>
    %450 = arith.divf %448, %449 : vector<8x32xf32>
    %451 = vector.extract_strided_slice %444 {offsets = [0, 32], sizes = [8, 32], strides = [1, 1]} : vector<8x128xf32> to vector<8x32xf32>
    %452 = arith.negf %451 : vector<8x32xf32>
    %453 = math.exp %452 : vector<8x32xf32>
    %cst_137 = arith.constant 1.000000e+00 : f32
    %454 = vector.broadcast %cst_137 : f32 to vector<8x32xf32>
    %455 = arith.addf %454, %453 : vector<8x32xf32>
    %456 = arith.divf %454, %455 : vector<8x32xf32>
    %457 = vector.extract_strided_slice %444 {offsets = [0, 64], sizes = [8, 32], strides = [1, 1]} : vector<8x128xf32> to vector<8x32xf32>
    %458 = math.tanh %457 : vector<8x32xf32>
    %459 = vector.extract_strided_slice %444 {offsets = [0, 96], sizes = [8, 32], strides = [1, 1]} : vector<8x128xf32> to vector<8x32xf32>
    %460 = arith.negf %459 : vector<8x32xf32>
    %461 = math.exp %460 : vector<8x32xf32>
    %cst_138 = arith.constant 1.000000e+00 : f32
    %462 = vector.broadcast %cst_138 : f32 to vector<8x32xf32>
    %463 = arith.addf %462, %461 : vector<8x32xf32>
    %464 = arith.divf %462, %463 : vector<8x32xf32>
    %465 = arith.mulf %456, %405 : vector<8x32xf32>
    %466 = arith.mulf %450, %458 : vector<8x32xf32>
    %467 = arith.addf %465, %466 : vector<8x32xf32>
    %468 = math.tanh %467 : vector<8x32xf32>
    %469 = arith.mulf %464, %468 : vector<8x32xf32>
    %470 = tpu.concatenate %469, %437 in 1 : vector<8x32xf32>, vector<8x32xf32> -> vector<8x64xf32>
    %c0_139 = arith.constant 0 : index
    %c0_140 = arith.constant 0 : index
    %471 = vector.load %arg4[%c0_139, %c0_140] : memref<64x128xf32, #tpu.memory_space<vmem>>, vector<64x128xf32>
    %cst_141 = arith.constant dense<0.000000e+00> : vector<8x128xf32>
    %472 = tpu.matmul %470, %471, %cst_141 {dimension_numbers = #tpu.dot_dimension_numbers<[1], [0], [0], [1], [0, 0, 1, 1], [], []>} : vector<8x64xf32>, vector<64x128xf32>, vector<8x128xf32> -> vector<8x128xf32>
    %c0_142 = arith.constant 0 : index
    %c0_143 = arith.constant 0 : index
    %473 = vector.load %arg5[%c0_142, %c0_143] : memref<8x128xf32, #tpu.memory_space<vmem>>, vector<8x128xf32>
    %474 = arith.addf %472, %473 : vector<8x128xf32>
    %475 = vector.extract_strided_slice %474 {offsets = [0, 0], sizes = [8, 32], strides = [1, 1]} : vector<8x128xf32> to vector<8x32xf32>
    %476 = arith.negf %475 : vector<8x32xf32>
    %477 = math.exp %476 : vector<8x32xf32>
    %cst_144 = arith.constant 1.000000e+00 : f32
    %478 = vector.broadcast %cst_144 : f32 to vector<8x32xf32>
    %479 = arith.addf %478, %477 : vector<8x32xf32>
    %480 = arith.divf %478, %479 : vector<8x32xf32>
    %481 = vector.extract_strided_slice %474 {offsets = [0, 32], sizes = [8, 32], strides = [1, 1]} : vector<8x128xf32> to vector<8x32xf32>
    %482 = arith.negf %481 : vector<8x32xf32>
    %483 = math.exp %482 : vector<8x32xf32>
    %cst_145 = arith.constant 1.000000e+00 : f32
    %484 = vector.broadcast %cst_145 : f32 to vector<8x32xf32>
    %485 = arith.addf %484, %483 : vector<8x32xf32>
    %486 = arith.divf %484, %485 : vector<8x32xf32>
    %487 = vector.extract_strided_slice %474 {offsets = [0, 64], sizes = [8, 32], strides = [1, 1]} : vector<8x128xf32> to vector<8x32xf32>
    %488 = math.tanh %487 : vector<8x32xf32>
    %489 = vector.extract_strided_slice %474 {offsets = [0, 96], sizes = [8, 32], strides = [1, 1]} : vector<8x128xf32> to vector<8x32xf32>
    %490 = arith.negf %489 : vector<8x32xf32>
    %491 = math.exp %490 : vector<8x32xf32>
    %cst_146 = arith.constant 1.000000e+00 : f32
    %492 = vector.broadcast %cst_146 : f32 to vector<8x32xf32>
    %493 = arith.addf %492, %491 : vector<8x32xf32>
    %494 = arith.divf %492, %493 : vector<8x32xf32>
    %495 = arith.mulf %486, %435 : vector<8x32xf32>
    %496 = arith.mulf %480, %488 : vector<8x32xf32>
    %497 = arith.addf %495, %496 : vector<8x32xf32>
    %498 = math.tanh %497 : vector<8x32xf32>
    %499 = arith.mulf %494, %498 : vector<8x32xf32>
    %c0_147 = arith.constant 0 : index
    %c0_148 = arith.constant 0 : index
    %500 = vector.load %arg1[%c0_147, %c0_148] : memref<8x128xf32, #tpu.memory_space<vmem>>, vector<8x128xf32>
    %501 = tpu.concatenate %500, %469 in 1 : vector<8x128xf32>, vector<8x32xf32> -> vector<8x160xf32>
    %c0_149 = arith.constant 0 : index
    %c0_150 = arith.constant 0 : index
    %502 = vector.load %arg6[%c0_149, %c0_150] : memref<160x128xf32, #tpu.memory_space<vmem>>, vector<160x128xf32>
    %cst_151 = arith.constant dense<0.000000e+00> : vector<8x128xf32>
    %503 = tpu.matmul %501, %502, %cst_151 {dimension_numbers = #tpu.dot_dimension_numbers<[1], [0], [0], [1], [0, 0, 1, 1], [], []>} : vector<8x160xf32>, vector<160x128xf32>, vector<8x128xf32> -> vector<8x128xf32>
    %c0_152 = arith.constant 0 : index
    %c0_153 = arith.constant 0 : index
    %504 = vector.load %arg7[%c0_152, %c0_153] : memref<8x128xf32, #tpu.memory_space<vmem>>, vector<8x128xf32>
    %505 = arith.addf %503, %504 : vector<8x128xf32>
    %506 = vector.extract_strided_slice %505 {offsets = [0, 0], sizes = [8, 32], strides = [1, 1]} : vector<8x128xf32> to vector<8x32xf32>
    %507 = arith.negf %506 : vector<8x32xf32>
    %508 = math.exp %507 : vector<8x32xf32>
    %cst_154 = arith.constant 1.000000e+00 : f32
    %509 = vector.broadcast %cst_154 : f32 to vector<8x32xf32>
    %510 = arith.addf %509, %508 : vector<8x32xf32>
    %511 = arith.divf %509, %510 : vector<8x32xf32>
    %512 = vector.extract_strided_slice %505 {offsets = [0, 32], sizes = [8, 32], strides = [1, 1]} : vector<8x128xf32> to vector<8x32xf32>
    %513 = arith.negf %512 : vector<8x32xf32>
    %514 = math.exp %513 : vector<8x32xf32>
    %cst_155 = arith.constant 1.000000e+00 : f32
    %515 = vector.broadcast %cst_155 : f32 to vector<8x32xf32>
    %516 = arith.addf %515, %514 : vector<8x32xf32>
    %517 = arith.divf %515, %516 : vector<8x32xf32>
    %518 = vector.extract_strided_slice %505 {offsets = [0, 64], sizes = [8, 32], strides = [1, 1]} : vector<8x128xf32> to vector<8x32xf32>
    %519 = math.tanh %518 : vector<8x32xf32>
    %520 = vector.extract_strided_slice %505 {offsets = [0, 96], sizes = [8, 32], strides = [1, 1]} : vector<8x128xf32> to vector<8x32xf32>
    %521 = arith.negf %520 : vector<8x32xf32>
    %522 = math.exp %521 : vector<8x32xf32>
    %cst_156 = arith.constant 1.000000e+00 : f32
    %523 = vector.broadcast %cst_156 : f32 to vector<8x32xf32>
    %524 = arith.addf %523, %522 : vector<8x32xf32>
    %525 = arith.divf %523, %524 : vector<8x32xf32>
    %526 = arith.mulf %517, %467 : vector<8x32xf32>
    %527 = arith.mulf %511, %519 : vector<8x32xf32>
    %528 = arith.addf %526, %527 : vector<8x32xf32>
    %529 = math.tanh %528 : vector<8x32xf32>
    %530 = arith.mulf %525, %529 : vector<8x32xf32>
    %531 = tpu.concatenate %530, %499 in 1 : vector<8x32xf32>, vector<8x32xf32> -> vector<8x64xf32>
    %c0_157 = arith.constant 0 : index
    %c0_158 = arith.constant 0 : index
    %532 = vector.load %arg8[%c0_157, %c0_158] : memref<64x128xf32, #tpu.memory_space<vmem>>, vector<64x128xf32>
    %cst_159 = arith.constant dense<0.000000e+00> : vector<8x128xf32>
    %533 = tpu.matmul %531, %532, %cst_159 {dimension_numbers = #tpu.dot_dimension_numbers<[1], [0], [0], [1], [0, 0, 1, 1], [], []>} : vector<8x64xf32>, vector<64x128xf32>, vector<8x128xf32> -> vector<8x128xf32>
    %c0_160 = arith.constant 0 : index
    %c0_161 = arith.constant 0 : index
    %534 = vector.load %arg9[%c0_160, %c0_161] : memref<8x128xf32, #tpu.memory_space<vmem>>, vector<8x128xf32>
    %535 = arith.addf %533, %534 : vector<8x128xf32>
    %536 = vector.extract_strided_slice %535 {offsets = [0, 0], sizes = [8, 32], strides = [1, 1]} : vector<8x128xf32> to vector<8x32xf32>
    %537 = arith.negf %536 : vector<8x32xf32>
    %538 = math.exp %537 : vector<8x32xf32>
    %cst_162 = arith.constant 1.000000e+00 : f32
    %539 = vector.broadcast %cst_162 : f32 to vector<8x32xf32>
    %540 = arith.addf %539, %538 : vector<8x32xf32>
    %541 = arith.divf %539, %540 : vector<8x32xf32>
    %542 = vector.extract_strided_slice %535 {offsets = [0, 32], sizes = [8, 32], strides = [1, 1]} : vector<8x128xf32> to vector<8x32xf32>
    %543 = arith.negf %542 : vector<8x32xf32>
    %544 = math.exp %543 : vector<8x32xf32>
    %cst_163 = arith.constant 1.000000e+00 : f32
    %545 = vector.broadcast %cst_163 : f32 to vector<8x32xf32>
    %546 = arith.addf %545, %544 : vector<8x32xf32>
    %547 = arith.divf %545, %546 : vector<8x32xf32>
    %548 = vector.extract_strided_slice %535 {offsets = [0, 64], sizes = [8, 32], strides = [1, 1]} : vector<8x128xf32> to vector<8x32xf32>
    %549 = math.tanh %548 : vector<8x32xf32>
    %550 = vector.extract_strided_slice %535 {offsets = [0, 96], sizes = [8, 32], strides = [1, 1]} : vector<8x128xf32> to vector<8x32xf32>
    %551 = arith.negf %550 : vector<8x32xf32>
    %552 = math.exp %551 : vector<8x32xf32>
    %cst_164 = arith.constant 1.000000e+00 : f32
    %553 = vector.broadcast %cst_164 : f32 to vector<8x32xf32>
    %554 = arith.addf %553, %552 : vector<8x32xf32>
    %555 = arith.divf %553, %554 : vector<8x32xf32>
    %556 = arith.mulf %547, %497 : vector<8x32xf32>
    %557 = arith.mulf %541, %549 : vector<8x32xf32>
    %558 = arith.addf %556, %557 : vector<8x32xf32>
    %559 = math.tanh %558 : vector<8x32xf32>
    %560 = arith.mulf %555, %559 : vector<8x32xf32>
    %c0_165 = arith.constant 0 : index
    %c0_166 = arith.constant 0 : index
    %561 = vector.load %arg10[%c0_165, %c0_166] : memref<32x128xf32, #tpu.memory_space<vmem>>, vector<32x128xf32>
    %cst_167 = arith.constant dense<0.000000e+00> : vector<8x128xf32>
    %562 = tpu.matmul %560, %561, %cst_167 {dimension_numbers = #tpu.dot_dimension_numbers<[1], [0], [0], [1], [0, 0, 1, 1], [], []>} : vector<8x32xf32>, vector<32x128xf32>, vector<8x128xf32> -> vector<8x128xf32>
    %c0_168 = arith.constant 0 : index
    %c0_169 = arith.constant 0 : index
    %563 = vector.load %arg11[%c0_168, %c0_169] : memref<8x128xf32, #tpu.memory_space<vmem>>, vector<8x128xf32>
    %564 = arith.addf %562, %563 : vector<8x128xf32>
    %565 = arith.addf %564, %500 : vector<8x128xf32>
    %c0_170 = arith.constant 0 : index
    %c0_171 = arith.constant 0 : index
    %c0_172 = arith.constant 0 : index
    %566 = vector.load %arg12[%c0_170, %c0_171, %c0_172] : memref<4x8x128xf32, #tpu.memory_space<vmem>>, vector<1x8x128xf32>
    %567 = vector.shape_cast %566 : vector<1x8x128xf32> to vector<8x128xf32>
    %568 = vector.shape_cast %565 : vector<8x128xf32> to vector<1x8x128xf32>
    tpu.vector_store %arg12[%c0_170, %c0_171, %c0_172], %568 {strides = array<i32>} : memref<4x8x128xf32, #tpu.memory_space<vmem>>, vector<1x8x128xf32>,
    %569 = tpu.concatenate %565, %530 in 1 : vector<8x128xf32>, vector<8x32xf32> -> vector<8x160xf32>
    %c0_173 = arith.constant 0 : index
    %c0_174 = arith.constant 0 : index
    %570 = vector.load %arg6[%c0_173, %c0_174] : memref<160x128xf32, #tpu.memory_space<vmem>>, vector<160x128xf32>
    %cst_175 = arith.constant dense<0.000000e+00> : vector<8x128xf32>
    %571 = tpu.matmul %569, %570, %cst_175 {dimension_numbers = #tpu.dot_dimension_numbers<[1], [0], [0], [1], [0, 0, 1, 1], [], []>} : vector<8x160xf32>, vector<160x128xf32>, vector<8x128xf32> -> vector<8x128xf32>
    %c0_176 = arith.constant 0 : index
    %c0_177 = arith.constant 0 : index
    %572 = vector.load %arg7[%c0_176, %c0_177] : memref<8x128xf32, #tpu.memory_space<vmem>>, vector<8x128xf32>
    %573 = arith.addf %571, %572 : vector<8x128xf32>
    %574 = vector.extract_strided_slice %573 {offsets = [0, 0], sizes = [8, 32], strides = [1, 1]} : vector<8x128xf32> to vector<8x32xf32>
    %575 = arith.negf %574 : vector<8x32xf32>
    %576 = math.exp %575 : vector<8x32xf32>
    %cst_178 = arith.constant 1.000000e+00 : f32
    %577 = vector.broadcast %cst_178 : f32 to vector<8x32xf32>
    %578 = arith.addf %577, %576 : vector<8x32xf32>
    %579 = arith.divf %577, %578 : vector<8x32xf32>
    %580 = vector.extract_strided_slice %573 {offsets = [0, 32], sizes = [8, 32], strides = [1, 1]} : vector<8x128xf32> to vector<8x32xf32>
    %581 = arith.negf %580 : vector<8x32xf32>
    %582 = math.exp %581 : vector<8x32xf32>
    %cst_179 = arith.constant 1.000000e+00 : f32
    %583 = vector.broadcast %cst_179 : f32 to vector<8x32xf32>
    %584 = arith.addf %583, %582 : vector<8x32xf32>
    %585 = arith.divf %583, %584 : vector<8x32xf32>
    %586 = vector.extract_strided_slice %573 {offsets = [0, 64], sizes = [8, 32], strides = [1, 1]} : vector<8x128xf32> to vector<8x32xf32>
    %587 = math.tanh %586 : vector<8x32xf32>
    %588 = vector.extract_strided_slice %573 {offsets = [0, 96], sizes = [8, 32], strides = [1, 1]} : vector<8x128xf32> to vector<8x32xf32>
    %589 = arith.negf %588 : vector<8x32xf32>
    %590 = math.exp %589 : vector<8x32xf32>
    %cst_180 = arith.constant 1.000000e+00 : f32
    %591 = vector.broadcast %cst_180 : f32 to vector<8x32xf32>
    %592 = arith.addf %591, %590 : vector<8x32xf32>
    %593 = arith.divf %591, %592 : vector<8x32xf32>
    %594 = arith.mulf %585, %528 : vector<8x32xf32>
    %595 = arith.mulf %579, %587 : vector<8x32xf32>
    %596 = arith.addf %594, %595 : vector<8x32xf32>
    %597 = math.tanh %596 : vector<8x32xf32>
    %598 = arith.mulf %593, %597 : vector<8x32xf32>
    %599 = tpu.concatenate %598, %560 in 1 : vector<8x32xf32>, vector<8x32xf32> -> vector<8x64xf32>
    %c0_181 = arith.constant 0 : index
    %c0_182 = arith.constant 0 : index
    %600 = vector.load %arg8[%c0_181, %c0_182] : memref<64x128xf32, #tpu.memory_space<vmem>>, vector<64x128xf32>
    %cst_183 = arith.constant dense<0.000000e+00> : vector<8x128xf32>
    %601 = tpu.matmul %599, %600, %cst_183 {dimension_numbers = #tpu.dot_dimension_numbers<[1], [0], [0], [1], [0, 0, 1, 1], [], []>} : vector<8x64xf32>, vector<64x128xf32>, vector<8x128xf32> -> vector<8x128xf32>
    %c0_184 = arith.constant 0 : index
    %c0_185 = arith.constant 0 : index
    %602 = vector.load %arg9[%c0_184, %c0_185] : memref<8x128xf32, #tpu.memory_space<vmem>>, vector<8x128xf32>
    %603 = arith.addf %601, %602 : vector<8x128xf32>
    %604 = vector.extract_strided_slice %603 {offsets = [0, 0], sizes = [8, 32], strides = [1, 1]} : vector<8x128xf32> to vector<8x32xf32>
    %605 = arith.negf %604 : vector<8x32xf32>
    %606 = math.exp %605 : vector<8x32xf32>
    %cst_186 = arith.constant 1.000000e+00 : f32
    %607 = vector.broadcast %cst_186 : f32 to vector<8x32xf32>
    %608 = arith.addf %607, %606 : vector<8x32xf32>
    %609 = arith.divf %607, %608 : vector<8x32xf32>
    %610 = vector.extract_strided_slice %603 {offsets = [0, 32], sizes = [8, 32], strides = [1, 1]} : vector<8x128xf32> to vector<8x32xf32>
    %611 = arith.negf %610 : vector<8x32xf32>
    %612 = math.exp %611 : vector<8x32xf32>
    %cst_187 = arith.constant 1.000000e+00 : f32
    %613 = vector.broadcast %cst_187 : f32 to vector<8x32xf32>
    %614 = arith.addf %613, %612 : vector<8x32xf32>
    %615 = arith.divf %613, %614 : vector<8x32xf32>
    %616 = vector.extract_strided_slice %603 {offsets = [0, 64], sizes = [8, 32], strides = [1, 1]} : vector<8x128xf32> to vector<8x32xf32>
    %617 = math.tanh %616 : vector<8x32xf32>
    %618 = vector.extract_strided_slice %603 {offsets = [0, 96], sizes = [8, 32], strides = [1, 1]} : vector<8x128xf32> to vector<8x32xf32>
    %619 = arith.negf %618 : vector<8x32xf32>
    %620 = math.exp %619 : vector<8x32xf32>
    %cst_188 = arith.constant 1.000000e+00 : f32
    %621 = vector.broadcast %cst_188 : f32 to vector<8x32xf32>
    %622 = arith.addf %621, %620 : vector<8x32xf32>
    %623 = arith.divf %621, %622 : vector<8x32xf32>
    %624 = arith.mulf %615, %558 : vector<8x32xf32>
    %625 = arith.mulf %609, %617 : vector<8x32xf32>
    %626 = arith.addf %624, %625 : vector<8x32xf32>
    %627 = math.tanh %626 : vector<8x32xf32>
    %628 = arith.mulf %623, %627 : vector<8x32xf32>
    %c0_189 = arith.constant 0 : index
    %c0_190 = arith.constant 0 : index
    %629 = vector.load %arg10[%c0_189, %c0_190] : memref<32x128xf32, #tpu.memory_space<vmem>>, vector<32x128xf32>
    %cst_191 = arith.constant dense<0.000000e+00> : vector<8x128xf32>
    %630 = tpu.matmul %628, %629, %cst_191 {dimension_numbers = #tpu.dot_dimension_numbers<[1], [0], [0], [1], [0, 0, 1, 1], [], []>} : vector<8x32xf32>, vector<32x128xf32>, vector<8x128xf32> -> vector<8x128xf32>
    %c0_192 = arith.constant 0 : index
    %c0_193 = arith.constant 0 : index
    %631 = vector.load %arg11[%c0_192, %c0_193] : memref<8x128xf32, #tpu.memory_space<vmem>>, vector<8x128xf32>
    %632 = arith.addf %630, %631 : vector<8x128xf32>
    %633 = arith.addf %632, %565 : vector<8x128xf32>
    %c1_194 = arith.constant 1 : index
    %c0_195 = arith.constant 0 : index
    %c0_196 = arith.constant 0 : index
    %634 = vector.load %arg12[%c1_194, %c0_195, %c0_196] : memref<4x8x128xf32, #tpu.memory_space<vmem>>, vector<1x8x128xf32>
    %635 = vector.shape_cast %634 : vector<1x8x128xf32> to vector<8x128xf32>
    %636 = vector.shape_cast %633 : vector<8x128xf32> to vector<1x8x128xf32>
    tpu.vector_store %arg12[%c1_194, %c0_195, %c0_196], %636 {strides = array<i32>} : memref<4x8x128xf32, #tpu.memory_space<vmem>>, vector<1x8x128xf32>,
    %637 = tpu.concatenate %633, %598 in 1 : vector<8x128xf32>, vector<8x32xf32> -> vector<8x160xf32>
    %c0_197 = arith.constant 0 : index
    %c0_198 = arith.constant 0 : index
    %638 = vector.load %arg6[%c0_197, %c0_198] : memref<160x128xf32, #tpu.memory_space<vmem>>, vector<160x128xf32>
    %cst_199 = arith.constant dense<0.000000e+00> : vector<8x128xf32>
    %639 = tpu.matmul %637, %638, %cst_199 {dimension_numbers = #tpu.dot_dimension_numbers<[1], [0], [0], [1], [0, 0, 1, 1], [], []>} : vector<8x160xf32>, vector<160x128xf32>, vector<8x128xf32> -> vector<8x128xf32>
    %c0_200 = arith.constant 0 : index
    %c0_201 = arith.constant 0 : index
    %640 = vector.load %arg7[%c0_200, %c0_201] : memref<8x128xf32, #tpu.memory_space<vmem>>, vector<8x128xf32>
    %641 = arith.addf %639, %640 : vector<8x128xf32>
    %642 = vector.extract_strided_slice %641 {offsets = [0, 0], sizes = [8, 32], strides = [1, 1]} : vector<8x128xf32> to vector<8x32xf32>
    %643 = arith.negf %642 : vector<8x32xf32>
    %644 = math.exp %643 : vector<8x32xf32>
    %cst_202 = arith.constant 1.000000e+00 : f32
    %645 = vector.broadcast %cst_202 : f32 to vector<8x32xf32>
    %646 = arith.addf %645, %644 : vector<8x32xf32>
    %647 = arith.divf %645, %646 : vector<8x32xf32>
    %648 = vector.extract_strided_slice %641 {offsets = [0, 32], sizes = [8, 32], strides = [1, 1]} : vector<8x128xf32> to vector<8x32xf32>
    %649 = arith.negf %648 : vector<8x32xf32>
    %650 = math.exp %649 : vector<8x32xf32>
    %cst_203 = arith.constant 1.000000e+00 : f32
    %651 = vector.broadcast %cst_203 : f32 to vector<8x32xf32>
    %652 = arith.addf %651, %650 : vector<8x32xf32>
    %653 = arith.divf %651, %652 : vector<8x32xf32>
    %654 = vector.extract_strided_slice %641 {offsets = [0, 64], sizes = [8, 32], strides = [1, 1]} : vector<8x128xf32> to vector<8x32xf32>
    %655 = math.tanh %654 : vector<8x32xf32>
    %656 = vector.extract_strided_slice %641 {offsets = [0, 96], sizes = [8, 32], strides = [1, 1]} : vector<8x128xf32> to vector<8x32xf32>
    %657 = arith.negf %656 : vector<8x32xf32>
    %658 = math.exp %657 : vector<8x32xf32>
    %cst_204 = arith.constant 1.000000e+00 : f32
    %659 = vector.broadcast %cst_204 : f32 to vector<8x32xf32>
    %660 = arith.addf %659, %658 : vector<8x32xf32>
    %661 = arith.divf %659, %660 : vector<8x32xf32>
    %662 = arith.mulf %653, %596 : vector<8x32xf32>
    %663 = arith.mulf %647, %655 : vector<8x32xf32>
    %664 = arith.addf %662, %663 : vector<8x32xf32>
    %665 = math.tanh %664 : vector<8x32xf32>
    %666 = arith.mulf %661, %665 : vector<8x32xf32>
    %667 = tpu.concatenate %666, %628 in 1 : vector<8x32xf32>, vector<8x32xf32> -> vector<8x64xf32>
    %c0_205 = arith.constant 0 : index
    %c0_206 = arith.constant 0 : index
    %668 = vector.load %arg8[%c0_205, %c0_206] : memref<64x128xf32, #tpu.memory_space<vmem>>, vector<64x128xf32>
    %cst_207 = arith.constant dense<0.000000e+00> : vector<8x128xf32>
    %669 = tpu.matmul %667, %668, %cst_207 {dimension_numbers = #tpu.dot_dimension_numbers<[1], [0], [0], [1], [0, 0, 1, 1], [], []>} : vector<8x64xf32>, vector<64x128xf32>, vector<8x128xf32> -> vector<8x128xf32>
    %c0_208 = arith.constant 0 : index
    %c0_209 = arith.constant 0 : index
    %670 = vector.load %arg9[%c0_208, %c0_209] : memref<8x128xf32, #tpu.memory_space<vmem>>, vector<8x128xf32>
    %671 = arith.addf %669, %670 : vector<8x128xf32>
    %672 = vector.extract_strided_slice %671 {offsets = [0, 0], sizes = [8, 32], strides = [1, 1]} : vector<8x128xf32> to vector<8x32xf32>
    %673 = arith.negf %672 : vector<8x32xf32>
    %674 = math.exp %673 : vector<8x32xf32>
    %cst_210 = arith.constant 1.000000e+00 : f32
    %675 = vector.broadcast %cst_210 : f32 to vector<8x32xf32>
    %676 = arith.addf %675, %674 : vector<8x32xf32>
    %677 = arith.divf %675, %676 : vector<8x32xf32>
    %678 = vector.extract_strided_slice %671 {offsets = [0, 32], sizes = [8, 32], strides = [1, 1]} : vector<8x128xf32> to vector<8x32xf32>
    %679 = arith.negf %678 : vector<8x32xf32>
    %680 = math.exp %679 : vector<8x32xf32>
    %cst_211 = arith.constant 1.000000e+00 : f32
    %681 = vector.broadcast %cst_211 : f32 to vector<8x32xf32>
    %682 = arith.addf %681, %680 : vector<8x32xf32>
    %683 = arith.divf %681, %682 : vector<8x32xf32>
    %684 = vector.extract_strided_slice %671 {offsets = [0, 64], sizes = [8, 32], strides = [1, 1]} : vector<8x128xf32> to vector<8x32xf32>
    %685 = math.tanh %684 : vector<8x32xf32>
    %686 = vector.extract_strided_slice %671 {offsets = [0, 96], sizes = [8, 32], strides = [1, 1]} : vector<8x128xf32> to vector<8x32xf32>
    %687 = arith.negf %686 : vector<8x32xf32>
    %688 = math.exp %687 : vector<8x32xf32>
    %cst_212 = arith.constant 1.000000e+00 : f32
    %689 = vector.broadcast %cst_212 : f32 to vector<8x32xf32>
    %690 = arith.addf %689, %688 : vector<8x32xf32>
    %691 = arith.divf %689, %690 : vector<8x32xf32>
    %692 = arith.mulf %683, %626 : vector<8x32xf32>
    %693 = arith.mulf %677, %685 : vector<8x32xf32>
    %694 = arith.addf %692, %693 : vector<8x32xf32>
    %695 = math.tanh %694 : vector<8x32xf32>
    %696 = arith.mulf %691, %695 : vector<8x32xf32>
    %c0_213 = arith.constant 0 : index
    %c0_214 = arith.constant 0 : index
    %697 = vector.load %arg10[%c0_213, %c0_214] : memref<32x128xf32, #tpu.memory_space<vmem>>, vector<32x128xf32>
    %cst_215 = arith.constant dense<0.000000e+00> : vector<8x128xf32>
    %698 = tpu.matmul %696, %697, %cst_215 {dimension_numbers = #tpu.dot_dimension_numbers<[1], [0], [0], [1], [0, 0, 1, 1], [], []>} : vector<8x32xf32>, vector<32x128xf32>, vector<8x128xf32> -> vector<8x128xf32>
    %c0_216 = arith.constant 0 : index
    %c0_217 = arith.constant 0 : index
    %699 = vector.load %arg11[%c0_216, %c0_217] : memref<8x128xf32, #tpu.memory_space<vmem>>, vector<8x128xf32>
    %700 = arith.addf %698, %699 : vector<8x128xf32>
    %701 = arith.addf %700, %633 : vector<8x128xf32>
    %c2_218 = arith.constant 2 : index
    %c0_219 = arith.constant 0 : index
    %c0_220 = arith.constant 0 : index
    %702 = vector.load %arg12[%c2_218, %c0_219, %c0_220] : memref<4x8x128xf32, #tpu.memory_space<vmem>>, vector<1x8x128xf32>
    %703 = vector.shape_cast %702 : vector<1x8x128xf32> to vector<8x128xf32>
    %704 = vector.shape_cast %701 : vector<8x128xf32> to vector<1x8x128xf32>
    tpu.vector_store %arg12[%c2_218, %c0_219, %c0_220], %704 {strides = array<i32>} : memref<4x8x128xf32, #tpu.memory_space<vmem>>, vector<1x8x128xf32>,
    %705 = tpu.concatenate %701, %666 in 1 : vector<8x128xf32>, vector<8x32xf32> -> vector<8x160xf32>
    %c0_221 = arith.constant 0 : index
    %c0_222 = arith.constant 0 : index
    %706 = vector.load %arg6[%c0_221, %c0_222] : memref<160x128xf32, #tpu.memory_space<vmem>>, vector<160x128xf32>
    %cst_223 = arith.constant dense<0.000000e+00> : vector<8x128xf32>
    %707 = tpu.matmul %705, %706, %cst_223 {dimension_numbers = #tpu.dot_dimension_numbers<[1], [0], [0], [1], [0, 0, 1, 1], [], []>} : vector<8x160xf32>, vector<160x128xf32>, vector<8x128xf32> -> vector<8x128xf32>
    %c0_224 = arith.constant 0 : index
    %c0_225 = arith.constant 0 : index
    %708 = vector.load %arg7[%c0_224, %c0_225] : memref<8x128xf32, #tpu.memory_space<vmem>>, vector<8x128xf32>
    %709 = arith.addf %707, %708 : vector<8x128xf32>
    %710 = vector.extract_strided_slice %709 {offsets = [0, 0], sizes = [8, 32], strides = [1, 1]} : vector<8x128xf32> to vector<8x32xf32>
    %711 = arith.negf %710 : vector<8x32xf32>
    %712 = math.exp %711 : vector<8x32xf32>
    %cst_226 = arith.constant 1.000000e+00 : f32
    %713 = vector.broadcast %cst_226 : f32 to vector<8x32xf32>
    %714 = arith.addf %713, %712 : vector<8x32xf32>
    %715 = arith.divf %713, %714 : vector<8x32xf32>
    %716 = vector.extract_strided_slice %709 {offsets = [0, 32], sizes = [8, 32], strides = [1, 1]} : vector<8x128xf32> to vector<8x32xf32>
    %717 = arith.negf %716 : vector<8x32xf32>
    %718 = math.exp %717 : vector<8x32xf32>
    %cst_227 = arith.constant 1.000000e+00 : f32
    %719 = vector.broadcast %cst_227 : f32 to vector<8x32xf32>
    %720 = arith.addf %719, %718 : vector<8x32xf32>
    %721 = arith.divf %719, %720 : vector<8x32xf32>
    %722 = vector.extract_strided_slice %709 {offsets = [0, 64], sizes = [8, 32], strides = [1, 1]} : vector<8x128xf32> to vector<8x32xf32>
    %723 = math.tanh %722 : vector<8x32xf32>
    %724 = vector.extract_strided_slice %709 {offsets = [0, 96], sizes = [8, 32], strides = [1, 1]} : vector<8x128xf32> to vector<8x32xf32>
    %725 = arith.negf %724 : vector<8x32xf32>
    %726 = math.exp %725 : vector<8x32xf32>
    %cst_228 = arith.constant 1.000000e+00 : f32
    %727 = vector.broadcast %cst_228 : f32 to vector<8x32xf32>
    %728 = arith.addf %727, %726 : vector<8x32xf32>
    %729 = arith.divf %727, %728 : vector<8x32xf32>
    %730 = arith.mulf %721, %664 : vector<8x32xf32>
    %731 = arith.mulf %715, %723 : vector<8x32xf32>
    %732 = arith.addf %730, %731 : vector<8x32xf32>
    %733 = math.tanh %732 : vector<8x32xf32>
    %734 = arith.mulf %729, %733 : vector<8x32xf32>
    %735 = tpu.concatenate %734, %696 in 1 : vector<8x32xf32>, vector<8x32xf32> -> vector<8x64xf32>
    %c0_229 = arith.constant 0 : index
    %c0_230 = arith.constant 0 : index
    %736 = vector.load %arg8[%c0_229, %c0_230] : memref<64x128xf32, #tpu.memory_space<vmem>>, vector<64x128xf32>
    %cst_231 = arith.constant dense<0.000000e+00> : vector<8x128xf32>
    %737 = tpu.matmul %735, %736, %cst_231 {dimension_numbers = #tpu.dot_dimension_numbers<[1], [0], [0], [1], [0, 0, 1, 1], [], []>} : vector<8x64xf32>, vector<64x128xf32>, vector<8x128xf32> -> vector<8x128xf32>
    %c0_232 = arith.constant 0 : index
    %c0_233 = arith.constant 0 : index
    %738 = vector.load %arg9[%c0_232, %c0_233] : memref<8x128xf32, #tpu.memory_space<vmem>>, vector<8x128xf32>
    %739 = arith.addf %737, %738 : vector<8x128xf32>
    %740 = vector.extract_strided_slice %739 {offsets = [0, 0], sizes = [8, 32], strides = [1, 1]} : vector<8x128xf32> to vector<8x32xf32>
    %741 = arith.negf %740 : vector<8x32xf32>
    %742 = math.exp %741 : vector<8x32xf32>
    %cst_234 = arith.constant 1.000000e+00 : f32
    %743 = vector.broadcast %cst_234 : f32 to vector<8x32xf32>
    %744 = arith.addf %743, %742 : vector<8x32xf32>
    %745 = arith.divf %743, %744 : vector<8x32xf32>
    %746 = vector.extract_strided_slice %739 {offsets = [0, 32], sizes = [8, 32], strides = [1, 1]} : vector<8x128xf32> to vector<8x32xf32>
    %747 = arith.negf %746 : vector<8x32xf32>
    %748 = math.exp %747 : vector<8x32xf32>
    %cst_235 = arith.constant 1.000000e+00 : f32
    %749 = vector.broadcast %cst_235 : f32 to vector<8x32xf32>
    %750 = arith.addf %749, %748 : vector<8x32xf32>
    %751 = arith.divf %749, %750 : vector<8x32xf32>
    %752 = vector.extract_strided_slice %739 {offsets = [0, 64], sizes = [8, 32], strides = [1, 1]} : vector<8x128xf32> to vector<8x32xf32>
    %753 = math.tanh %752 : vector<8x32xf32>
    %754 = vector.extract_strided_slice %739 {offsets = [0, 96], sizes = [8, 32], strides = [1, 1]} : vector<8x128xf32> to vector<8x32xf32>
    %755 = arith.negf %754 : vector<8x32xf32>
    %756 = math.exp %755 : vector<8x32xf32>
    %cst_236 = arith.constant 1.000000e+00 : f32
    %757 = vector.broadcast %cst_236 : f32 to vector<8x32xf32>
    %758 = arith.addf %757, %756 : vector<8x32xf32>
    %759 = arith.divf %757, %758 : vector<8x32xf32>
    %760 = arith.mulf %751, %694 : vector<8x32xf32>
    %761 = arith.mulf %745, %753 : vector<8x32xf32>
    %762 = arith.addf %760, %761 : vector<8x32xf32>
    %763 = math.tanh %762 : vector<8x32xf32>
    %764 = arith.mulf %759, %763 : vector<8x32xf32>
    %c0_237 = arith.constant 0 : index
    %c0_238 = arith.constant 0 : index
    %765 = vector.load %arg10[%c0_237, %c0_238] : memref<32x128xf32, #tpu.memory_space<vmem>>, vector<32x128xf32>
    %cst_239 = arith.constant dense<0.000000e+00> : vector<8x128xf32>
    %766 = tpu.matmul %764, %765, %cst_239 {dimension_numbers = #tpu.dot_dimension_numbers<[1], [0], [0], [1], [0, 0, 1, 1], [], []>} : vector<8x32xf32>, vector<32x128xf32>, vector<8x128xf32> -> vector<8x128xf32>
    %c0_240 = arith.constant 0 : index
    %c0_241 = arith.constant 0 : index
    %767 = vector.load %arg11[%c0_240, %c0_241] : memref<8x128xf32, #tpu.memory_space<vmem>>, vector<8x128xf32>
    %768 = arith.addf %766, %767 : vector<8x128xf32>
    %769 = arith.addf %768, %701 : vector<8x128xf32>
    %c3_242 = arith.constant 3 : index
    %c0_243 = arith.constant 0 : index
    %c0_244 = arith.constant 0 : index
    %770 = vector.load %arg12[%c3_242, %c0_243, %c0_244] : memref<4x8x128xf32, #tpu.memory_space<vmem>>, vector<1x8x128xf32>
    %771 = vector.shape_cast %770 : vector<1x8x128xf32> to vector<8x128xf32>
    %772 = vector.shape_cast %769 : vector<8x128xf32> to vector<1x8x128xf32>
    tpu.vector_store %arg12[%c3_242, %c0_243, %c0_244], %772 {strides = array<i32>} : memref<4x8x128xf32, #tpu.memory_space<vmem>>, vector<1x8x128xf32>,
    return
  }
}

</mosaic_0001>

<llo_original>
// kernel: tpu_custom_call.1
$region0: #{tpu_custom_call.1}
  #allocation0 [shape = 'u32[]', space=smem, size = 0x4, offset = 0x4, fixed_abs, tag = 'smem constant byte address 0x4 - core index']
  #allocation1 [shape = 'u32[72,128]{1,0:T(1,128)}', space=vmem, size = 0x9000, scoped, tag = 'internal scratch']
  %s0 = inlined_call_operand.hbm [shape: f32[8,8,128], index: 0, kind: input, shape index: {}]
  %s1 = inlined_call_operand.hbm [shape: f32[8,128], index: 1, kind: input, shape index: {}]
  %s2 = inlined_call_operand.hbm [shape: f32[160,128], index: 2, kind: input, shape index: {}]
  %s3 = inlined_call_operand.hbm [shape: f32[8,128], index: 3, kind: input, shape index: {}]
  %s4 = inlined_call_operand.hbm [shape: f32[64,128], index: 4, kind: input, shape index: {}]
  %s5 = inlined_call_operand.hbm [shape: f32[8,128], index: 5, kind: input, shape index: {}]
  %s6 = inlined_call_operand.hbm [shape: f32[160,128], index: 6, kind: input, shape index: {}]
  %s7 = inlined_call_operand.hbm [shape: f32[8,128], index: 7, kind: input, shape index: {}]
  %s8 = inlined_call_operand.hbm [shape: f32[64,128], index: 8, kind: input, shape index: {}]
  %s9 = inlined_call_operand.vmem [shape: f32[8,128], index: 9, kind: input, shape index: {}]
  %s10 = inlined_call_operand.hbm [shape: f32[32,128], index: 10, kind: input, shape index: {}]
  %s11 = inlined_call_operand.hbm [shape: f32[8,128], index: 11, kind: input, shape index: {}]
  %s12 = inlined_call_operand.hbm [shape: f32[4,8,128], index: 12, kind: output, shape index: {}]
  %s13 = sld [smem:[#allocation0]]
  $region102: #{tpu_custom_call.1} parent=0
    _
  %s15 = ssub.s32 1, %s13
  %s16 = scalar_select 0, %s15, %s13
  $region1: #{tpu_custom_call.1} parent=0
    #allocation2 [shape = 'u8[32768]{0}', space=vmem, size = 0x8000, scoped, tag = 'input window, operand 0, single buffered']
    #allocation3 [shape = 's32[1]{0}', space=sflag, size = 0x4, scoped, tag = 'scoped memory for tpu_custom_call.1']
    #allocation4 [shape = 's32[1]{0}', space=sflag, size = 0x4, scoped, tag = 'scoped memory for tpu_custom_call.1']
    #allocation5 [shape = 'u8[4096]{0}', space=vmem, size = 0x1000, scoped, tag = 'input window, operand 1, single buffered']
    #allocation6 [shape = 's32[1]{0}', space=sflag, size = 0x4, scoped, tag = 'scoped memory for tpu_custom_call.1']
    #allocation7 [shape = 'u8[81920]{0}', space=vmem, size = 0x14000, scoped, tag = 'input window, operand 2, single buffered']
    #allocation8 [shape = 'u8[4096]{0}', space=vmem, size = 0x1000, scoped, tag = 'input window, operand 3, single buffered']
    #allocation9 [shape = 's32[1]{0}', space=sflag, size = 0x4, scoped, tag = 'scoped memory for tpu_custom_call.1']
    #allocation10 [shape = 'u8[32768]{0}', space=vmem, size = 0x8000, scoped, tag = 'input window, operand 4, single buffered']
    #allocation11 [shape = 'u8[4096]{0}', space=vmem, size = 0x1000, scoped, tag = 'input window, operand 5, single buffered']
    #allocation12 [shape = 's32[1]{0}', space=sflag, size = 0x4, scoped, tag = 'scoped memory for tpu_custom_call.1']
    #allocation13 [shape = 'u8[81920]{0}', space=vmem, size = 0x14000, scoped, tag = 'input window, operand 6, single buffered']
    #allocation14 [shape = 'u8[4096]{0}', space=vmem, size = 0x1000, scoped, tag = 'input window, operand 7, single buffered']
    #allocation15 [shape = 's32[1]{0}', space=sflag, size = 0x4, scoped, tag = 'scoped memory for tpu_custom_call.1']
    #allocation16 [shape = 'u8[32768]{0}', space=vmem, size = 0x8000, scoped, tag = 'input window, operand 8, single buffered']
    #allocation17 [shape = 'u8[16384]{0}', space=vmem, size = 0x4000, scoped, tag = 'input window, operand 10, single buffered']
    #allocation18 [shape = 's32[1]{0}', space=sflag, size = 0x4, scoped, tag = 'scoped memory for tpu_custom_call.1']
    #allocation19 [shape = 'u8[4096]{0}', space=vmem, size = 0x1000, scoped, tag = 'input window, operand 11, single buffered']
    #allocation20 [shape = 'u8[16384]{0}', space=vmem, size = 0x4000, scoped, tag = 'output window, operand 0, single buffered']
    %17 = vsyncpa [#allocation3], 0
    %18 = vsyncpa [#allocation6], 0
    %19 = vsyncpa [#allocation9], 0
    %20 = vsyncpa [#allocation12], 0
    %21 = vsyncpa [#allocation15], 0
    %22 = vsyncpa [#allocation18], 0
    %23 = vsyncpa [#allocation4], 0
    // Predicated region
    $region2: #{tpu_custom_call.1} parent=1 // pred_check
      _
    $region3: #{tpu_custom_call.1} parent=1 // pred_check_branch
      %25 = sbr.rel (0) target = $region5
    $region4: #{tpu_custom_call.1} parent=1 // pred_region
      %27 = vsyncadd [#allocation3], 0
      %s28 = sshll.u32 %s0, 4
      %s29 = int_to_ptr.hbm [resolvable:$true] %s28
      %s30 = sshll.u32 [#allocation2], 4
      %s31 = int_to_ptr.vmem [resolvable:$true] %s30
      %36 = dma.hbm_to_vmem [thread:$0]  %s29, 1024, %s31, [#allocation3], 128, 128, 8
    $region5: #{tpu_custom_call.1} parent=1 // pred_fallthru
      _
    // Predicated region
    $region6: #{tpu_custom_call.1} parent=1 // pred_check
      _
    $region7: #{tpu_custom_call.1} parent=1 // pred_check_branch
      %38 = sbr.rel (0) target = $region9
    $region8: #{tpu_custom_call.1} parent=1 // pred_region
      %40 = vsyncadd [#allocation6], 0
      %s42 = sshll.u32 %s1, 4
      %s43 = int_to_ptr.hbm [resolvable:$true] %s42
      %s44 = sshll.u32 [#allocation5], 4
      %s45 = int_to_ptr.vmem [resolvable:$true] %s44
      %47 = dma.hbm_to_vmem [thread:$0]  %s43, 128, %s45, [#allocation6]
    $region9: #{tpu_custom_call.1} parent=1 // pred_fallthru
      _
    // Predicated region
    $region10: #{tpu_custom_call.1} parent=1 // pred_check
      _
    $region11: #{tpu_custom_call.1} parent=1 // pred_check_branch
      %49 = sbr.rel (0) target = $region13
    $region12: #{tpu_custom_call.1} parent=1 // pred_region
      %51 = vsyncadd [#allocation6], 0
      %s52 = sshll.u32 %s2, 4
      %s53 = int_to_ptr.hbm [resolvable:$true] %s52
      %s54 = sshll.u32 [#allocation7], 4
      %s55 = int_to_ptr.vmem [resolvable:$true] %s54
      %60 = dma.hbm_to_vmem [thread:$0]  %s53, 2560, %s55, [#allocation6], 128, 128, 8
    $region13: #{tpu_custom_call.1} parent=1 // pred_fallthru
      _
    // Predicated region
    $region14: #{tpu_custom_call.1} parent=1 // pred_check
      _
    $region15: #{tpu_custom_call.1} parent=1 // pred_check_branch
      %62 = sbr.rel (0) target = $region17
    $region16: #{tpu_custom_call.1} parent=1 // pred_region
      %64 = vsyncadd [#allocation9], 0
      %s66 = sshll.u32 %s3, 4
      %s67 = int_to_ptr.hbm [resolvable:$true] %s66
      %s68 = sshll.u32 [#allocation8], 4
      %s69 = int_to_ptr.vmem [resolvable:$true] %s68
      %71 = dma.hbm_to_vmem [thread:$0]  %s67, 128, %s69, [#allocation9]
    $region17: #{tpu_custom_call.1} parent=1 // pred_fallthru
      _
    // Predicated region
    $region18: #{tpu_custom_call.1} parent=1 // pred_check
      _
    $region19: #{tpu_custom_call.1} parent=1 // pred_check_branch
      %73 = sbr.rel (0) target = $region21
    $region20: #{tpu_custom_call.1} parent=1 // pred_region
      %75 = vsyncadd [#allocation9], 0
      %s76 = sshll.u32 %s4, 4
      %s77 = int_to_ptr.hbm [resolvable:$true] %s76
      %s78 = sshll.u32 [#allocation10], 4
      %s79 = int_to_ptr.vmem [resolvable:$true] %s78
      %84 = dma.hbm_to_vmem [thread:$0]  %s77, 1024, %s79, [#allocation9], 128, 128, 8
    $region21: #{tpu_custom_call.1} parent=1 // pred_fallthru
      _
    // Predicated region
    $region22: #{tpu_custom_call.1} parent=1 // pred_check
      _
    $region23: #{tpu_custom_call.1} parent=1 // pred_check_branch
      %86 = sbr.rel (0) target = $region25
    $region24: #{tpu_custom_call.1} parent=1 // pred_region
      %88 = vsyncadd [#allocation12], 0
      %s90 = sshll.u32 %s5, 4
      %s91 = int_to_ptr.hbm [resolvable:$true] %s90
      %s92 = sshll.u32 [#allocation11], 4
      %s93 = int_to_ptr.vmem [resolvable:$true] %s92
      %95 = dma.hbm_to_vmem [thread:$0]  %s91, 128, %s93, [#allocation12]
    $region25: #{tpu_custom_call.1} parent=1 // pred_fallthru
      _
    // Predicated region
    $region26: #{tpu_custom_call.1} parent=1 // pred_check
      _
    $region27: #{tpu_custom_call.1} parent=1 // pred_check_branch
      %97 = sbr.rel (0) target = $region29
    $region28: #{tpu_custom_call.1} parent=1 // pred_region
      %99 = vsyncadd [#allocation12], 0
      %s100 = sshll.u32 %s6, 4
      %s101 = int_to_ptr.hbm [resolvable:$true] %s100
      %s102 = sshll.u32 [#allocation13], 4
      %s103 = int_to_ptr.vmem [resolvable:$true] %s102
      %108 = dma.hbm_to_vmem [thread:$0]  %s101, 2560, %s103, [#allocation12], 128, 128, 8
    $region29: #{tpu_custom_call.1} parent=1 // pred_fallthru
      _
    // Predicated region
    $region30: #{tpu_custom_call.1} parent=1 // pred_check
      _
    $region31: #{tpu_custom_call.1} parent=1 // pred_check_branch
      %110 = sbr.rel (0) target = $region33
    $region32: #{tpu_custom_call.1} parent=1 // pred_region
      %112 = vsyncadd [#allocation15], 0
      %s114 = sshll.u32 %s7, 4
      %s115 = int_to_ptr.hbm [resolvable:$true] %s114
      %s116 = sshll.u32 [#allocation14], 4
      %s117 = int_to_ptr.vmem [resolvable:$true] %s116
      %119 = dma.hbm_to_vmem [thread:$0]  %s115, 128, %s117, [#allocation15]
    $region33: #{tpu_custom_call.1} parent=1 // pred_fallthru
      _
    // Predicated region
    $region34: #{tpu_custom_call.1} parent=1 // pred_check
      _
    $region35: #{tpu_custom_call.1} parent=1 // pred_check_branch
      %121 = sbr.rel (0) target = $region37
    $region36: #{tpu_custom_call.1} parent=1 // pred_region
      %123 = vsyncadd [#allocation15], 0
      %s124 = sshll.u32 %s8, 4
      %s125 = int_to_ptr.hbm [resolvable:$true] %s124
      %s126 = sshll.u32 [#allocation16], 4
      %s127 = int_to_ptr.vmem [resolvable:$true] %s126
      %132 = dma.hbm_to_vmem [thread:$0]  %s125, 1024, %s127, [#allocation15], 128, 128, 8
    $region37: #{tpu_custom_call.1} parent=1 // pred_fallthru
      _
    // Predicated region
    $region38: #{tpu_custom_call.1} parent=1 // pred_check
      _
    $region39: #{tpu_custom_call.1} parent=1 // pred_check_branch
      %134 = sbr.rel (0) target = $region41
    $region40: #{tpu_custom_call.1} parent=1 // pred_region
      _
    $region41: #{tpu_custom_call.1} parent=1 // pred_fallthru
      _
    // Predicated region
    $region42: #{tpu_custom_call.1} parent=1 // pred_check
      _
    $region43: #{tpu_custom_call.1} parent=1 // pred_check_branch
      %136 = sbr.rel (0) target = $region45
    $region44: #{tpu_custom_call.1} parent=1 // pred_region
      %138 = vsyncadd [#allocation18], 0
      %s139 = sshll.u32 %s10, 4
      %s140 = int_to_ptr.hbm [resolvable:$true] %s139
      %s141 = sshll.u32 [#allocation17], 4
      %s142 = int_to_ptr.vmem [resolvable:$true] %s141
      %147 = dma.hbm_to_vmem [thread:$0]  %s140, 512, %s142, [#allocation18], 128, 128, 8
    $region45: #{tpu_custom_call.1} parent=1 // pred_fallthru
      _
    // Predicated region
    $region46: #{tpu_custom_call.1} parent=1 // pred_check
      _
    $region47: #{tpu_custom_call.1} parent=1 // pred_check_branch
      %149 = sbr.rel (0) target = $region49
    $region48: #{tpu_custom_call.1} parent=1 // pred_region
      %151 = vsyncadd [#allocation18], 0
      %s153 = sshll.u32 %s11, 4
      %s154 = int_to_ptr.hbm [resolvable:$true] %s153
      %s155 = sshll.u32 [#allocation19], 4
      %s156 = int_to_ptr.vmem [resolvable:$true] %s155
      %158 = dma.hbm_to_vmem [thread:$0]  %s154, 128, %s156, [#allocation18]
    $region49: #{tpu_custom_call.1} parent=1 // pred_fallthru
      _
    // Predicated region
    $region50: #{tpu_custom_call.1} parent=1 // pred_check
      _
    $region51: #{tpu_custom_call.1} parent=1 // pred_check_branch
      %160 = sbr.rel (0) target = $region53
    $region52: #{tpu_custom_call.1} parent=1 // pred_region
      %162 = dma.done [#allocation3], 1024
    $region53: #{tpu_custom_call.1} parent=1 // pred_fallthru
      _
    // Predicated region
    $region54: #{tpu_custom_call.1} parent=1 // pred_check
      _
    $region55: #{tpu_custom_call.1} parent=1 // pred_check_branch
      %164 = sbr.rel (0) target = $region57
    $region56: #{tpu_custom_call.1} parent=1 // pred_region
      %166 = dma.done [#allocation6], 128
    $region57: #{tpu_custom_call.1} parent=1 // pred_fallthru
      _
    // Predicated region
    $region58: #{tpu_custom_call.1} parent=1 // pred_check
      _
    $region59: #{tpu_custom_call.1} parent=1 // pred_check_branch
      %168 = sbr.rel (0) target = $region61
    $region60: #{tpu_custom_call.1} parent=1 // pred_region
      %170 = dma.done [#allocation6], 2560
    $region61: #{tpu_custom_call.1} parent=1 // pred_fallthru
      _
    // Predicated region
    $region62: #{tpu_custom_call.1} parent=1 // pred_check
      _
    $region63: #{tpu_custom_call.1} parent=1 // pred_check_branch
      %172 = sbr.rel (0) target = $region65
    $region64: #{tpu_custom_call.1} parent=1 // pred_region
      %174 = dma.done [#allocation9], 128
    $region65: #{tpu_custom_call.1} parent=1 // pred_fallthru
      _
    // Predicated region
    $region66: #{tpu_custom_call.1} parent=1 // pred_check
      _
    $region67: #{tpu_custom_call.1} parent=1 // pred_check_branch
      %176 = sbr.rel (0) target = $region69
    $region68: #{tpu_custom_call.1} parent=1 // pred_region
      %178 = dma.done [#allocation9], 1024
    $region69: #{tpu_custom_call.1} parent=1 // pred_fallthru
      _
    // Predicated region
    $region70: #{tpu_custom_call.1} parent=1 // pred_check
      _
    $region71: #{tpu_custom_call.1} parent=1 // pred_check_branch
      %180 = sbr.rel (0) target = $region73
    $region72: #{tpu_custom_call.1} parent=1 // pred_region
      %182 = dma.done [#allocation12], 128
    $region73: #{tpu_custom_call.1} parent=1 // pred_fallthru
      _
    // Predicated region
    $region74: #{tpu_custom_call.1} parent=1 // pred_check
      _
    $region75: #{tpu_custom_call.1} parent=1 // pred_check_branch
      %184 = sbr.rel (0) target = $region77
    $region76: #{tpu_custom_call.1} parent=1 // pred_region
      %186 = dma.done [#allocation12], 2560
    $region77: #{tpu_custom_call.1} parent=1 // pred_fallthru
      _
    // Predicated region
    $region78: #{tpu_custom_call.1} parent=1 // pred_check
      _
    $region79: #{tpu_custom_call.1} parent=1 // pred_check_branch
      %188 = sbr.rel (0) target = $region81
    $region80: #{tpu_custom_call.1} parent=1 // pred_region
      %190 = dma.done [#allocation15], 128
    $region81: #{tpu_custom_call.1} parent=1 // pred_fallthru
      _
    // Predicated region
    $region82: #{tpu_custom_call.1} parent=1 // pred_check
      _
    $region83: #{tpu_custom_call.1} parent=1 // pred_check_branch
      %192 = sbr.rel (0) target = $region85
    $region84: #{tpu_custom_call.1} parent=1 // pred_region
      %194 = dma.done [#allocation15], 1024
    $region85: #{tpu_custom_call.1} parent=1 // pred_fallthru
      _
    // Predicated region
    $region86: #{tpu_custom_call.1} parent=1 // pred_check
      _
    $region87: #{tpu_custom_call.1} parent=1 // pred_check_branch
      %196 = sbr.rel (0) target = $region89
    $region88: #{tpu_custom_call.1} parent=1 // pred_region
      %198 = dma.done [#allocation18], 512
    $region89: #{tpu_custom_call.1} parent=1 // pred_fallthru
      _
    // Predicated region
    $region90: #{tpu_custom_call.1} parent=1 // pred_check
      _
    $region91: #{tpu_custom_call.1} parent=1 // pred_check_branch
      %200 = sbr.rel (0) target = $region93
    $region92: #{tpu_custom_call.1} parent=1 // pred_region
      %202 = dma.done [#allocation18], 128
    $region93: #{tpu_custom_call.1} parent=1 // pred_fallthru
      _
    %v203 = vld [vmem:[#allocation2] sm:$0xff]
    %v204 = vld [vmem:[#allocation7] sm:$0xff]
    %v205 = vld [vmem:[#allocation7 + $0x8] sm:$0xff]
    %v206 = vld [vmem:[#allocation7 + $0x10] sm:$0xff]
    %v207 = vld [vmem:[#allocation7 + $0x18] sm:$0xff]
    %v208 = vld [vmem:[#allocation7 + $0x20] sm:$0xff]
    %v209 = vld [vmem:[#allocation7 + $0x28] sm:$0xff]
    %v210 = vld [vmem:[#allocation7 + $0x30] sm:$0xff]
    %v211 = vld [vmem:[#allocation7 + $0x38] sm:$0xff]
    %v212 = vld [vmem:[#allocation7 + $0x40] sm:$0xff]
    %v213 = vld [vmem:[#allocation7 + $0x48] sm:$0xff]
    %v214 = vld [vmem:[#allocation7 + $0x50] sm:$0xff]
    %v215 = vld [vmem:[#allocation7 + $0x58] sm:$0xff]
    %v216 = vld [vmem:[#allocation7 + $0x60] sm:$0xff]
    %v217 = vld [vmem:[#allocation7 + $0x68] sm:$0xff]
    %v218 = vld [vmem:[#allocation7 + $0x70] sm:$0xff]
    %v219 = vld [vmem:[#allocation7 + $0x78] sm:$0xff]
    %v220 = vld [vmem:[#allocation7 + $0x80] sm:$0xff]
    %v221 = vld [vmem:[#allocation7 + $0x88] sm:$0xff]
    %v222 = vld [vmem:[#allocation7 + $0x90] sm:$0xff]
    %v223 = vld [vmem:[#allocation7 + $0x98] sm:$0xff]
    %v224 = vld [vmem:[#allocation8] sm:$0xff]
    %vm225 = vcmask 261120
    %v227 = vsel %vm225, 0.0, 0
    %229 = vmatpush.msra.mxu0 %v219
    %230 = vmatpush.msra.mxu0 %v218
    %231 = vmatpush.msra.mxu0 %v217
    %232 = vmatpush.msra.mxu0 %v216
    %233 = vmatpush.msra.mxu0 %v215
    %234 = vmatpush.msra.mxu0 %v214
    %235 = vmatpush.msra.mxu0 %v213
    %236 = vmatpush.msra.mxu0 %v212
    %237 = vmatpush.msra.mxu0 %v211
    %238 = vmatpush.msra.mxu0 %v210
    %239 = vmatpush.msra.mxu0 %v209
    %240 = vmatpush.msra.mxu0 %v208
    %241 = vmatpush.msra.mxu0 %v207
    %242 = vmatpush.msra.mxu0 %v206
    %243 = vmatpush.msra.mxu0 %v205
    %244 = vmatpush.msra.mxu0 %v204
    %245 = vmatmul.f32.gmra.mxu0 %v203
    %v246 = vpop.f32.mrf.mxu0
    %v247 = vadd.f32 %v224, %v246
    %248 = vdwg.mxu0
    %249 = vmatpush.msra.mxu0 0.0
    %250 = vmatpush.msra.mxu0 0.0
    %251 = vmatpush.msra.mxu0 0.0
    %252 = vmatpush.msra.mxu0 0.0
    %253 = vmatpush.msra.mxu0 0.0
    %254 = vmatpush.msra.mxu0 0.0
    %255 = vmatpush.msra.mxu0 0.0
    %256 = vmatpush.msra.mxu0 0.0
    %257 = vmatpush.msra.mxu0 0.0
    %258 = vmatpush.msra.mxu0 0.0
    %259 = vmatpush.msra.mxu0 0.0
    %260 = vmatpush.msra.mxu0 0.0
    %261 = vmatpush.msra.mxu0 %v223
    %262 = vmatpush.msra.mxu0 %v222
    %263 = vmatpush.msra.mxu0 %v221
    %264 = vmatpush.msra.mxu0 %v220
    %265 = vmatmul.f32.gmra.mxu0 %v227
    %v266 = vpop.f32.mrf.mxu0
    %v267 = vadd.f32 %v247, %v266
    %268 = vdwg.mxu0
    %v269 = vxor.u32 %v267, 2147483648
    %v270 = vmul.f32 %v269, 1.442695
    %v271 = vpow.pop %v270
    %v272 = vadd.f32 %v271, 1.0
    %v273 = vrcp.pop %v272
    %v274 = vmul.f32 %v272, %v273
    %v275 = vsub.f32 1.0, %v274
    %v276 = vmul.f32 %v273, %v275
    %v277 = vadd.f32 %v273, %v276
    %vm278 = vweird.f32 %v272
    %vm279 = vweird.f32 %v273
    %vm280 = vmor %vm278, %vm279
    %v281 = vsel %vm280, %v273, %v277
    %v282 = vand.u32 2147483647, %v272
    %vm283 = vcmp.eq.f32.partialorder %v282, 8.507059e+37
    %v284 = vand.u32 %v272, 2147483648
    %v285 = vor.u32 1.1754944e-38, %v284
    %v286 = vsel %vm283, %v285, %v281
    %v287 = vmul.f32 1.0, %v286
    %v288 = vtanh.pop %v267
    %v289 = vmul.f32 %v287, 0.0
    %291 = vrot.lane.b32.xlu0 %v288, 64
    %v292 = vpop.permute.xlu0 %291
    %v294 = vmul.f32 %v287, %v292
    %296 = vrot.lane.b32.xlu0 %v294, 32
    %v297 = vpop.permute.xlu0 %296
    %v299 = vadd.f32 %v289, %v297
    %v300 = vtanh.pop %v299
    %302 = vrot.lane.b32.xlu0 %v300, 64
    %v303 = vpop.permute.xlu0 %302
    %v305 = vmul.f32 %v287, %v303
    %307 = vrot.lane.b32.xlu0 %v305, 32
    %v308 = vpop.permute.xlu0 %307
    %v310 = vsel %vm225, %v308, 0.0
    %v311 = vld [vmem:[#allocation10] sm:$0xff]
    %v312 = vld [vmem:[#allocation10 + $0x8] sm:$0xff]
    %v313 = vld [vmem:[#allocation10 + $0x10] sm:$0xff]
    %v314 = vld [vmem:[#allocation10 + $0x18] sm:$0xff]
    %v315 = vld [vmem:[#allocation10 + $0x20] sm:$0xff]
    %v316 = vld [vmem:[#allocation10 + $0x28] sm:$0xff]
    %v317 = vld [vmem:[#allocation10 + $0x30] sm:$0xff]
    %v318 = vld [vmem:[#allocation10 + $0x38] sm:$0xff]
    %v319 = vld [vmem:[#allocation11] sm:$0xff]
    %vm320 = vcmask 523264
    %v322 = vsel %vm320, %v310, 0
    %324 = vmatpush.msra.mxu0 0.0
    %325 = vmatpush.msra.mxu0 0.0
    %326 = vmatpush.msra.mxu0 0.0
    %327 = vmatpush.msra.mxu0 0.0
    %328 = vmatpush.msra.mxu0 0.0
    %329 = vmatpush.msra.mxu0 0.0
    %330 = vmatpush.msra.mxu0 0.0
    %331 = vmatpush.msra.mxu0 0.0
    %332 = vmatpush.msra.mxu0 %v318
    %333 = vmatpush.msra.mxu0 %v317
    %334 = vmatpush.msra.mxu0 %v316
    %335 = vmatpush.msra.mxu0 %v315
    %336 = vmatpush.msra.mxu0 %v314
    %337 = vmatpush.msra.mxu0 %v313
    %338 = vmatpush.msra.mxu0 %v312
    %339 = vmatpush.msra.mxu0 %v311
    %340 = vmatmul.f32.gmra.mxu0 %v322
    %v341 = vpop.f32.mrf.mxu0
    %v342 = vadd.f32 %v319, %v341
    %343 = vdwg.mxu0
    %v344 = vxor.u32 %v342, 2147483648
    %v345 = vmul.f32 %v344, 1.442695
    %v346 = vpow.pop %v345
    %v347 = vadd.f32 %v346, 1.0
    %v348 = vrcp.pop %v347
    %v349 = vmul.f32 %v347, %v348
    %v350 = vsub.f32 1.0, %v349
    %v351 = vmul.f32 %v348, %v350
    %v352 = vadd.f32 %v348, %v351
    %vm353 = vweird.f32 %v347
    %vm354 = vweird.f32 %v348
    %vm355 = vmor %vm353, %vm354
    %v356 = vsel %vm355, %v348, %v352
    %v357 = vand.u32 2147483647, %v347
    %vm358 = vcmp.eq.f32.partialorder %v357, 8.507059e+37
    %v359 = vand.u32 %v347, 2147483648
    %v360 = vor.u32 1.1754944e-38, %v359
    %v361 = vsel %vm358, %v360, %v356
    %v362 = vmul.f32 1.0, %v361
    %v363 = vtanh.pop %v342
    %v364 = vmul.f32 %v362, 0.0
    %366 = vrot.lane.b32.xlu0 %v363, 64
    %v367 = vpop.permute.xlu0 %366
    %v369 = vmul.f32 %v362, %v367
    %371 = vrot.lane.b32.xlu0 %v369, 32
    %v372 = vpop.permute.xlu0 %371
    %v374 = vadd.f32 %v364, %v372
    %v375 = vtanh.pop %v374
    %377 = vrot.lane.b32.xlu0 %v375, 64
    %v378 = vpop.permute.xlu0 %377
    %v380 = vmul.f32 %v362, %v378
    %s381 = scalar_lea.vmem [#allocation2], 8
    %v382 = vld [vmem:[%s381] sm:$0xff]
    %v383 = vsel %vm225, %v308, 0
    %385 = vmatpush.msra.mxu0 %v219
    %386 = vmatpush.msra.mxu0 %v218
    %387 = vmatpush.msra.mxu0 %v217
    %388 = vmatpush.msra.mxu0 %v216
    %389 = vmatpush.msra.mxu0 %v215
    %390 = vmatpush.msra.mxu0 %v214
    %391 = vmatpush.msra.mxu0 %v213
    %392 = vmatpush.msra.mxu0 %v212
    %393 = vmatpush.msra.mxu0 %v211
    %394 = vmatpush.msra.mxu0 %v210
    %395 = vmatpush.msra.mxu0 %v209
    %396 = vmatpush.msra.mxu0 %v208
    %397 = vmatpush.msra.mxu0 %v207
    %398 = vmatpush.msra.mxu0 %v206
    %399 = vmatpush.msra.mxu0 %v205
    %400 = vmatpush.msra.mxu0 %v204
    %401 = vmatmul.f32.gmra.mxu0 %v382
    %v402 = vpop.f32.mrf.mxu0
    %v403 = vadd.f32 %v224, %v402
    %404 = vdwg.mxu0
    %405 = vmatpush.msra.mxu0 0.0
    %406 = vmatpush.msra.mxu0 0.0
    %407 = vmatpush.msra.mxu0 0.0
    %408 = vmatpush.msra.mxu0 0.0
    %409 = vmatpush.msra.mxu0 0.0
    %410 = vmatpush.msra.mxu0 0.0
    %411 = vmatpush.msra.mxu0 0.0
    %412 = vmatpush.msra.mxu0 0.0
    %413 = vmatpush.msra.mxu0 0.0
    %414 = vmatpush.msra.mxu0 0.0
    %415 = vmatpush.msra.mxu0 0.0
    %416 = vmatpush.msra.mxu0 0.0
    %417 = vmatpush.msra.mxu0 %v223
    %418 = vmatpush.msra.mxu0 %v222
    %419 = vmatpush.msra.mxu0 %v221
    %420 = vmatpush.msra.mxu0 %v220
    %421 = vmatmul.f32.gmra.mxu0 %v383
    %v422 = vpop.f32.mrf.mxu0
    %v423 = vadd.f32 %v403, %v422
    %424 = vdwg.mxu0
    %v425 = vxor.u32 %v423, 2147483648
    %v426 = vmul.f32 %v425, 1.442695
    %v427 = vpow.pop %v426
    %v428 = vadd.f32 %v427, 1.0
    %v429 = vrcp.pop %v428
    %v430 = vmul.f32 %v428, %v429
    %v431 = vsub.f32 1.0, %v430
    %v432 = vmul.f32 %v429, %v431
    %v433 = vadd.f32 %v429, %v432
    %vm434 = vweird.f32 %v428
    %vm435 = vweird.f32 %v429
    %vm436 = vmor %vm434, %vm435
    %v437 = vsel %vm436, %v429, %v433
    %v438 = vand.u32 2147483647, %v428
    %vm439 = vcmp.eq.f32.partialorder %v438, 8.507059e+37
    %v440 = vand.u32 %v428, 2147483648
    %v441 = vor.u32 1.1754944e-38, %v440
    %v442 = vsel %vm439, %v441, %v437
    %v443 = vmul.f32 1.0, %v442
    %v444 = vtanh.pop %v423
    %v445 = vmul.f32 %v443, %v299
    %447 = vrot.lane.b32.xlu0 %v444, 64
    %v448 = vpop.permute.xlu0 %447
    %v450 = vmul.f32 %v443, %v448
    %452 = vrot.lane.b32.xlu0 %v450, 32
    %v453 = vpop.permute.xlu0 %452
    %v455 = vadd.f32 %v445, %v453
    %v456 = vtanh.pop %v455
    %458 = vrot.lane.b32.xlu0 %v456, 64
    %v459 = vpop.permute.xlu0 %458
    %v461 = vmul.f32 %v443, %v459
    %463 = vrot.lane.b32.xlu0 %v461, 32
    %v464 = vpop.permute.xlu0 %463
    %467 = vrot.lane.b32.xlu0 %v380, 64
    %v468 = vpop.permute.xlu0 %467
    %v470 = vsel %vm225, %v464, %v468
    %v472 = vsel %vm320, %v470, 0
    %474 = vmatpush.msra.mxu0 0.0
    %475 = vmatpush.msra.mxu0 0.0
    %476 = vmatpush.msra.mxu0 0.0
    %477 = vmatpush.msra.mxu0 0.0
    %478 = vmatpush.msra.mxu0 0.0
    %479 = vmatpush.msra.mxu0 0.0
    %480 = vmatpush.msra.mxu0 0.0
    %481 = vmatpush.msra.mxu0 0.0
    %482 = vmatpush.msra.mxu0 %v318
    %483 = vmatpush.msra.mxu0 %v317
    %484 = vmatpush.msra.mxu0 %v316
    %485 = vmatpush.msra.mxu0 %v315
    %486 = vmatpush.msra.mxu0 %v314
    %487 = vmatpush.msra.mxu0 %v313
    %488 = vmatpush.msra.mxu0 %v312
    %489 = vmatpush.msra.mxu0 %v311
    %490 = vmatmul.f32.gmra.mxu0 %v472
    %v491 = vpop.f32.mrf.mxu0
    %v492 = vadd.f32 %v319, %v491
    %493 = vdwg.mxu0
    %v494 = vxor.u32 %v492, 2147483648
    %v495 = vmul.f32 %v494, 1.442695
    %v496 = vpow.pop %v495
    %v497 = vadd.f32 %v496, 1.0
    %v498 = vrcp.pop %v497
    %v499 = vmul.f32 %v497, %v498
    %v500 = vsub.f32 1.0, %v499
    %v501 = vmul.f32 %v498, %v500
    %v502 = vadd.f32 %v498, %v501
    %vm503 = vweird.f32 %v497
    %vm504 = vweird.f32 %v498
    %vm505 = vmor %vm503, %vm504
    %v506 = vsel %vm505, %v498, %v502
    %v507 = vand.u32 2147483647, %v497
    %vm508 = vcmp.eq.f32.partialorder %v507, 8.507059e+37
    %v509 = vand.u32 %v497, 2147483648
    %v510 = vor.u32 1.1754944e-38, %v509
    %v511 = vsel %vm508, %v510, %v506
    %v512 = vmul.f32 1.0, %v511
    %v513 = vtanh.pop %v492
    %v514 = vmul.f32 %v512, %v374
    %516 = vrot.lane.b32.xlu0 %v513, 64
    %v517 = vpop.permute.xlu0 %516
    %v519 = vmul.f32 %v512, %v517
    %521 = vrot.lane.b32.xlu0 %v519, 32
    %v522 = vpop.permute.xlu0 %521
    %v524 = vadd.f32 %v514, %v522
    %v525 = vtanh.pop %v524
    %527 = vrot.lane.b32.xlu0 %v525, 64
    %v528 = vpop.permute.xlu0 %527
    %v530 = vmul.f32 %v512, %v528
    %s531 = scalar_lea.vmem [#allocation2], 16
    %v532 = vld [vmem:[%s531] sm:$0xff]
    %v533 = vsel %vm225, %v464, 0
    %535 = vmatpush.msra.mxu0 %v219
    %536 = vmatpush.msra.mxu0 %v218
    %537 = vmatpush.msra.mxu0 %v217
    %538 = vmatpush.msra.mxu0 %v216
    %539 = vmatpush.msra.mxu0 %v215
    %540 = vmatpush.msra.mxu0 %v214
    %541 = vmatpush.msra.mxu0 %v213
    %542 = vmatpush.msra.mxu0 %v212
    %543 = vmatpush.msra.mxu0 %v211
    %544 = vmatpush.msra.mxu0 %v210
    %545 = vmatpush.msra.mxu0 %v209
    %546 = vmatpush.msra.mxu0 %v208
    %547 = vmatpush.msra.mxu0 %v207
    %548 = vmatpush.msra.mxu0 %v206
    %549 = vmatpush.msra.mxu0 %v205
    %550 = vmatpush.msra.mxu0 %v204
    %551 = vmatmul.f32.gmra.mxu0 %v532
    %v552 = vpop.f32.mrf.mxu0
    %v553 = vadd.f32 %v224, %v552
    %554 = vdwg.mxu0
    %555 = vmatpush.msra.mxu0 0.0
    %556 = vmatpush.msra.mxu0 0.0
    %557 = vmatpush.msra.mxu0 0.0
    %558 = vmatpush.msra.mxu0 0.0
    %559 = vmatpush.msra.mxu0 0.0
    %560 = vmatpush.msra.mxu0 0.0
    %561 = vmatpush.msra.mxu0 0.0
    %562 = vmatpush.msra.mxu0 0.0
    %563 = vmatpush.msra.mxu0 0.0
    %564 = vmatpush.msra.mxu0 0.0
    %565 = vmatpush.msra.mxu0 0.0
    %566 = vmatpush.msra.mxu0 0.0
    %567 = vmatpush.msra.mxu0 %v223
    %568 = vmatpush.msra.mxu0 %v222
    %569 = vmatpush.msra.mxu0 %v221
    %570 = vmatpush.msra.mxu0 %v220
    %571 = vmatmul.f32.gmra.mxu0 %v533
    %v572 = vpop.f32.mrf.mxu0
    %v573 = vadd.f32 %v553, %v572
    %574 = vdwg.mxu0
    %v575 = vxor.u32 %v573, 2147483648
    %v576 = vmul.f32 %v575, 1.442695
    %v577 = vpow.pop %v576
    %v578 = vadd.f32 %v577, 1.0
    %v579 = vrcp.pop %v578
    %v580 = vmul.f32 %v578, %v579
    %v581 = vsub.f32 1.0, %v580
    %v582 = vmul.f32 %v579, %v581
    %v583 = vadd.f32 %v579, %v582
    %vm584 = vweird.f32 %v578
    %vm585 = vweird.f32 %v579
    %vm586 = vmor %vm584, %vm585
    %v587 = vsel %vm586, %v579, %v583
    %v588 = vand.u32 2147483647, %v578
    %vm589 = vcmp.eq.f32.partialorder %v588, 8.507059e+37
    %v590 = vand.u32 %v578, 2147483648
    %v591 = vor.u32 1.1754944e-38, %v590
    %v592 = vsel %vm589, %v591, %v587
    %v593 = vmul.f32 1.0, %v592
    %v594 = vtanh.pop %v573
    %v595 = vmul.f32 %v593, %v455
    %597 = vrot.lane.b32.xlu0 %v594, 64
    %v598 = vpop.permute.xlu0 %597
    %v600 = vmul.f32 %v593, %v598
    %602 = vrot.lane.b32.xlu0 %v600, 32
    %v603 = vpop.permute.xlu0 %602
    %v605 = vadd.f32 %v595, %v603
    %v606 = vtanh.pop %v605
    %608 = vrot.lane.b32.xlu0 %v606, 64
    %v609 = vpop.permute.xlu0 %608
    %v611 = vmul.f32 %v593, %v609
    %613 = vrot.lane.b32.xlu0 %v611, 32
    %v614 = vpop.permute.xlu0 %613
    %617 = vrot.lane.b32.xlu0 %v530, 64
    %v618 = vpop.permute.xlu0 %617
    %v620 = vsel %vm225, %v614, %v618
    %v622 = vsel %vm320, %v620, 0
    %624 = vmatpush.msra.mxu0 0.0
    %625 = vmatpush.msra.mxu0 0.0
    %626 = vmatpush.msra.mxu0 0.0
    %627 = vmatpush.msra.mxu0 0.0
    %628 = vmatpush.msra.mxu0 0.0
    %629 = vmatpush.msra.mxu0 0.0
    %630 = vmatpush.msra.mxu0 0.0
    %631 = vmatpush.msra.mxu0 0.0
    %632 = vmatpush.msra.mxu0 %v318
    %633 = vmatpush.msra.mxu0 %v317
    %634 = vmatpush.msra.mxu0 %v316
    %635 = vmatpush.msra.mxu0 %v315
    %636 = vmatpush.msra.mxu0 %v314
    %637 = vmatpush.msra.mxu0 %v313
    %638 = vmatpush.msra.mxu0 %v312
    %639 = vmatpush.msra.mxu0 %v311
    %640 = vmatmul.f32.gmra.mxu0 %v622
    %v641 = vpop.f32.mrf.mxu0
    %v642 = vadd.f32 %v319, %v641
    %643 = vdwg.mxu0
    %v644 = vxor.u32 %v642, 2147483648
    %v645 = vmul.f32 %v644, 1.442695
    %v646 = vpow.pop %v645
    %v647 = vadd.f32 %v646, 1.0
    %v648 = vrcp.pop %v647
    %v649 = vmul.f32 %v647, %v648
    %v650 = vsub.f32 1.0, %v649
    %v651 = vmul.f32 %v648, %v650
    %v652 = vadd.f32 %v648, %v651
    %vm653 = vweird.f32 %v647
    %vm654 = vweird.f32 %v648
    %vm655 = vmor %vm653, %vm654
    %v656 = vsel %vm655, %v648, %v652
    %v657 = vand.u32 2147483647, %v647
    %vm658 = vcmp.eq.f32.partialorder %v657, 8.507059e+37
    %v659 = vand.u32 %v647, 2147483648
    %v660 = vor.u32 1.1754944e-38, %v659
    %v661 = vsel %vm658, %v660, %v656
    %v662 = vmul.f32 1.0, %v661
    %v663 = vtanh.pop %v642
    %v664 = vmul.f32 %v662, %v524
    %666 = vrot.lane.b32.xlu0 %v663, 64
    %v667 = vpop.permute.xlu0 %666
    %v669 = vmul.f32 %v662, %v667
    %671 = vrot.lane.b32.xlu0 %v669, 32
    %v672 = vpop.permute.xlu0 %671
    %v674 = vadd.f32 %v664, %v672
    %v675 = vtanh.pop %v674
    %677 = vrot.lane.b32.xlu0 %v675, 64
    %v678 = vpop.permute.xlu0 %677
    %v680 = vmul.f32 %v662, %v678
    %s681 = scalar_lea.vmem [#allocation2], 24
    %v682 = vld [vmem:[%s681] sm:$0xff]
    %v683 = vsel %vm225, %v614, 0
    %685 = vmatpush.msra.mxu0 %v219
    %686 = vmatpush.msra.mxu0 %v218
    %687 = vmatpush.msra.mxu0 %v217
    %688 = vmatpush.msra.mxu0 %v216
    %689 = vmatpush.msra.mxu0 %v215
    %690 = vmatpush.msra.mxu0 %v214
    %691 = vmatpush.msra.mxu0 %v213
    %692 = vmatpush.msra.mxu0 %v212
    %693 = vmatpush.msra.mxu0 %v211
    %694 = vmatpush.msra.mxu0 %v210
    %695 = vmatpush.msra.mxu0 %v209
    %696 = vmatpush.msra.mxu0 %v208
    %697 = vmatpush.msra.mxu0 %v207
    %698 = vmatpush.msra.mxu0 %v206
    %699 = vmatpush.msra.mxu0 %v205
    %700 = vmatpush.msra.mxu0 %v204
    %701 = vmatmul.f32.gmra.mxu0 %v682
    %v702 = vpop.f32.mrf.mxu0
    %v703 = vadd.f32 %v224, %v702
    %704 = vdwg.mxu0
    %705 = vmatpush.msra.mxu0 0.0
    %706 = vmatpush.msra.mxu0 0.0
    %707 = vmatpush.msra.mxu0 0.0
    %708 = vmatpush.msra.mxu0 0.0
    %709 = vmatpush.msra.mxu0 0.0
    %710 = vmatpush.msra.mxu0 0.0
    %711 = vmatpush.msra.mxu0 0.0
    %712 = vmatpush.msra.mxu0 0.0
    %713 = vmatpush.msra.mxu0 0.0
    %714 = vmatpush.msra.mxu0 0.0
    %715 = vmatpush.msra.mxu0 0.0
    %716 = vmatpush.msra.mxu0 0.0
    %717 = vmatpush.msra.mxu0 %v223
    %718 = vmatpush.msra.mxu0 %v222
    %719 = vmatpush.msra.mxu0 %v221
    %720 = vmatpush.msra.mxu0 %v220
    %721 = vmatmul.f32.gmra.mxu0 %v683
    %v722 = vpop.f32.mrf.mxu0
    %v723 = vadd.f32 %v703, %v722
    %724 = vdwg.mxu0
    %v725 = vxor.u32 %v723, 2147483648
    %v726 = vmul.f32 %v725, 1.442695
    %v727 = vpow.pop %v726
    %v728 = vadd.f32 %v727, 1.0
    %v729 = vrcp.pop %v728
    %v730 = vmul.f32 %v728, %v729
    %v731 = vsub.f32 1.0, %v730
    %v732 = vmul.f32 %v729, %v731
    %v733 = vadd.f32 %v729, %v732
    %vm734 = vweird.f32 %v728
    %vm735 = vweird.f32 %v729
    %vm736 = vmor %vm734, %vm735
    %v737 = vsel %vm736, %v729, %v733
    %v738 = vand.u32 2147483647, %v728
    %vm739 = vcmp.eq.f32.partialorder %v738, 8.507059e+37
    %v740 = vand.u32 %v728, 2147483648
    %v741 = vor.u32 1.1754944e-38, %v740
    %v742 = vsel %vm739, %v741, %v737
    %v743 = vmul.f32 1.0, %v742
    %v744 = vtanh.pop %v723
    %v745 = vmul.f32 %v743, %v605
    %747 = vrot.lane.b32.xlu0 %v744, 64
    %v748 = vpop.permute.xlu0 %747
    %v750 = vmul.f32 %v743, %v748
    %752 = vrot.lane.b32.xlu0 %v750, 32
    %v753 = vpop.permute.xlu0 %752
    %v755 = vadd.f32 %v745, %v753
    %v756 = vtanh.pop %v755
    %758 = vrot.lane.b32.xlu0 %v756, 64
    %v759 = vpop.permute.xlu0 %758
    %v761 = vmul.f32 %v743, %v759
    %763 = vrot.lane.b32.xlu0 %v761, 32
    %v764 = vpop.permute.xlu0 %763
    %767 = vrot.lane.b32.xlu0 %v680, 64
    %v768 = vpop.permute.xlu0 %767
    %v770 = vsel %vm225, %v764, %v768
    %v772 = vsel %vm320, %v770, 0
    %774 = vmatpush.msra.mxu0 0.0
    %775 = vmatpush.msra.mxu0 0.0
    %776 = vmatpush.msra.mxu0 0.0
    %777 = vmatpush.msra.mxu0 0.0
    %778 = vmatpush.msra.mxu0 0.0
    %779 = vmatpush.msra.mxu0 0.0
    %780 = vmatpush.msra.mxu0 0.0
    %781 = vmatpush.msra.mxu0 0.0
    %782 = vmatpush.msra.mxu0 %v318
    %783 = vmatpush.msra.mxu0 %v317
    %784 = vmatpush.msra.mxu0 %v316
    %785 = vmatpush.msra.mxu0 %v315
    %786 = vmatpush.msra.mxu0 %v314
    %787 = vmatpush.msra.mxu0 %v313
    %788 = vmatpush.msra.mxu0 %v312
    %789 = vmatpush.msra.mxu0 %v311
    %790 = vmatmul.f32.gmra.mxu0 %v772
    %v791 = vpop.f32.mrf.mxu0
    %v792 = vadd.f32 %v319, %v791
    %793 = vdwg.mxu0
    %v794 = vxor.u32 %v792, 2147483648
    %v795 = vmul.f32 %v794, 1.442695
    %v796 = vpow.pop %v795
    %v797 = vadd.f32 %v796, 1.0
    %v798 = vrcp.pop %v797
    %v799 = vmul.f32 %v797, %v798
    %v800 = vsub.f32 1.0, %v799
    %v801 = vmul.f32 %v798, %v800
    %v802 = vadd.f32 %v798, %v801
    %vm803 = vweird.f32 %v797
    %vm804 = vweird.f32 %v798
    %vm805 = vmor %vm803, %vm804
    %v806 = vsel %vm805, %v798, %v802
    %v807 = vand.u32 2147483647, %v797
    %vm808 = vcmp.eq.f32.partialorder %v807, 8.507059e+37
    %v809 = vand.u32 %v797, 2147483648
    %v810 = vor.u32 1.1754944e-38, %v809
    %v811 = vsel %vm808, %v810, %v806
    %v812 = vmul.f32 1.0, %v811
    %v813 = vtanh.pop %v792
    %v814 = vmul.f32 %v812, %v674
    %816 = vrot.lane.b32.xlu0 %v813, 64
    %v817 = vpop.permute.xlu0 %816
    %v819 = vmul.f32 %v812, %v817
    %821 = vrot.lane.b32.xlu0 %v819, 32
    %v822 = vpop.permute.xlu0 %821
    %v824 = vadd.f32 %v814, %v822
    %v825 = vtanh.pop %v824
    %827 = vrot.lane.b32.xlu0 %v825, 64
    %v828 = vpop.permute.xlu0 %827
    %v830 = vmul.f32 %v812, %v828
    %s831 = scalar_lea.vmem [#allocation2], 32
    %v832 = vld [vmem:[%s831] sm:$0xff]
    %v833 = vsel %vm225, %v764, 0
    %835 = vmatpush.msra.mxu0 %v219
    %836 = vmatpush.msra.mxu0 %v218
    %837 = vmatpush.msra.mxu0 %v217
    %838 = vmatpush.msra.mxu0 %v216
    %839 = vmatpush.msra.mxu0 %v215
    %840 = vmatpush.msra.mxu0 %v214
    %841 = vmatpush.msra.mxu0 %v213
    %842 = vmatpush.msra.mxu0 %v212
    %843 = vmatpush.msra.mxu0 %v211
    %844 = vmatpush.msra.mxu0 %v210
    %845 = vmatpush.msra.mxu0 %v209
    %846 = vmatpush.msra.mxu0 %v208
    %847 = vmatpush.msra.mxu0 %v207
    %848 = vmatpush.msra.mxu0 %v206
    %849 = vmatpush.msra.mxu0 %v205
    %850 = vmatpush.msra.mxu0 %v204
    %851 = vmatmul.f32.gmra.mxu0 %v832
    %v852 = vpop.f32.mrf.mxu0
    %v853 = vadd.f32 %v224, %v852
    %854 = vdwg.mxu0
    %855 = vmatpush.msra.mxu0 0.0
    %856 = vmatpush.msra.mxu0 0.0
    %857 = vmatpush.msra.mxu0 0.0
    %858 = vmatpush.msra.mxu0 0.0
    %859 = vmatpush.msra.mxu0 0.0
    %860 = vmatpush.msra.mxu0 0.0
    %861 = vmatpush.msra.mxu0 0.0
    %862 = vmatpush.msra.mxu0 0.0
    %863 = vmatpush.msra.mxu0 0.0
    %864 = vmatpush.msra.mxu0 0.0
    %865 = vmatpush.msra.mxu0 0.0
    %866 = vmatpush.msra.mxu0 0.0
    %867 = vmatpush.msra.mxu0 %v223
    %868 = vmatpush.msra.mxu0 %v222
    %869 = vmatpush.msra.mxu0 %v221
    %870 = vmatpush.msra.mxu0 %v220
    %871 = vmatmul.f32.gmra.mxu0 %v833
    %v872 = vpop.f32.mrf.mxu0
    %v873 = vadd.f32 %v853, %v872
    %874 = vdwg.mxu0
    %v875 = vxor.u32 %v873, 2147483648
    %v876 = vmul.f32 %v875, 1.442695
    %v877 = vpow.pop %v876
    %v878 = vadd.f32 %v877, 1.0
    %v879 = vrcp.pop %v878
    %v880 = vmul.f32 %v878, %v879
    %v881 = vsub.f32 1.0, %v880
    %v882 = vmul.f32 %v879, %v881
    %v883 = vadd.f32 %v879, %v882
    %vm884 = vweird.f32 %v878
    %vm885 = vweird.f32 %v879
    %vm886 = vmor %vm884, %vm885
    %v887 = vsel %vm886, %v879, %v883
    %v888 = vand.u32 2147483647, %v878
    %vm889 = vcmp.eq.f32.partialorder %v888, 8.507059e+37
    %v890 = vand.u32 %v878, 2147483648
    %v891 = vor.u32 1.1754944e-38, %v890
    %v892 = vsel %vm889, %v891, %v887
    %v893 = vmul.f32 1.0, %v892
    %v894 = vtanh.pop %v873
    %v895 = vmul.f32 %v893, %v755
    %897 = vrot.lane.b32.xlu0 %v894, 64
    %v898 = vpop.permute.xlu0 %897
    %v900 = vmul.f32 %v893, %v898
    %902 = vrot.lane.b32.xlu0 %v900, 32
    %v903 = vpop.permute.xlu0 %902
    %v905 = vadd.f32 %v895, %v903
    %v906 = vtanh.pop %v905
    %908 = vrot.lane.b32.xlu0 %v906, 64
    %v909 = vpop.permute.xlu0 %908
    %v911 = vmul.f32 %v893, %v909
    %913 = vrot.lane.b32.xlu0 %v911, 32
    %v914 = vpop.permute.xlu0 %913
    %917 = vrot.lane.b32.xlu0 %v830, 64
    %v918 = vpop.permute.xlu0 %917
    %v920 = vsel %vm225, %v914, %v918
    %v922 = vsel %vm320, %v920, 0
    %924 = vmatpush.msra.mxu0 0.0
    %925 = vmatpush.msra.mxu0 0.0
    %926 = vmatpush.msra.mxu0 0.0
    %927 = vmatpush.msra.mxu0 0.0
    %928 = vmatpush.msra.mxu0 0.0
    %929 = vmatpush.msra.mxu0 0.0
    %930 = vmatpush.msra.mxu0 0.0
    %931 = vmatpush.msra.mxu0 0.0
    %932 = vmatpush.msra.mxu0 %v318
    %933 = vmatpush.msra.mxu0 %v317
    %934 = vmatpush.msra.mxu0 %v316
    %935 = vmatpush.msra.mxu0 %v315
    %936 = vmatpush.msra.mxu0 %v314
    %937 = vmatpush.msra.mxu0 %v313
    %938 = vmatpush.msra.mxu0 %v312
    %939 = vmatpush.msra.mxu0 %v311
    %940 = vmatmul.f32.gmra.mxu0 %v922
    %v941 = vpop.f32.mrf.mxu0
    %v942 = vadd.f32 %v319, %v941
    %943 = vdwg.mxu0
    %v944 = vxor.u32 %v942, 2147483648
    %v945 = vmul.f32 %v944, 1.442695
    %v946 = vpow.pop %v945
    %v947 = vadd.f32 %v946, 1.0
    %v948 = vrcp.pop %v947
    %v949 = vmul.f32 %v947, %v948
    %v950 = vsub.f32 1.0, %v949
    %v951 = vmul.f32 %v948, %v950
    %v952 = vadd.f32 %v948, %v951
    %vm953 = vweird.f32 %v947
    %vm954 = vweird.f32 %v948
    %vm955 = vmor %vm953, %vm954
    %v956 = vsel %vm955, %v948, %v952
    %v957 = vand.u32 2147483647, %v947
    %vm958 = vcmp.eq.f32.partialorder %v957, 8.507059e+37
    %v959 = vand.u32 %v947, 2147483648
    %v960 = vor.u32 1.1754944e-38, %v959
    %v961 = vsel %vm958, %v960, %v956
    %v962 = vmul.f32 1.0, %v961
    %v963 = vtanh.pop %v942
    %v964 = vmul.f32 %v962, %v824
    %966 = vrot.lane.b32.xlu0 %v963, 64
    %v967 = vpop.permute.xlu0 %966
    %v969 = vmul.f32 %v962, %v967
    %971 = vrot.lane.b32.xlu0 %v969, 32
    %v972 = vpop.permute.xlu0 %971
    %v974 = vadd.f32 %v964, %v972
    %v975 = vtanh.pop %v974
    %977 = vrot.lane.b32.xlu0 %v975, 64
    %v978 = vpop.permute.xlu0 %977
    %v980 = vmul.f32 %v962, %v978
    %s981 = scalar_lea.vmem [#allocation2], 40
    %v982 = vld [vmem:[%s981] sm:$0xff]
    %v983 = vsel %vm225, %v914, 0
    %985 = vmatpush.msra.mxu0 %v219
    %986 = vmatpush.msra.mxu0 %v218
    %987 = vmatpush.msra.mxu0 %v217
    %988 = vmatpush.msra.mxu0 %v216
    %989 = vmatpush.msra.mxu0 %v215
    %990 = vmatpush.msra.mxu0 %v214
    %991 = vmatpush.msra.mxu0 %v213
    %992 = vmatpush.msra.mxu0 %v212
    %993 = vmatpush.msra.mxu0 %v211
    %994 = vmatpush.msra.mxu0 %v210
    %995 = vmatpush.msra.mxu0 %v209
    %996 = vmatpush.msra.mxu0 %v208
    %997 = vmatpush.msra.mxu0 %v207
    %998 = vmatpush.msra.mxu0 %v206
    %999 = vmatpush.msra.mxu0 %v205
    %1000 = vmatpush.msra.mxu0 %v204
    %1001 = vmatmul.f32.gmra.mxu0 %v982
    %v1002 = vpop.f32.mrf.mxu0
    %v1003 = vadd.f32 %v224, %v1002
    %1004 = vdwg.mxu0
    %1005 = vmatpush.msra.mxu0 0.0
    %1006 = vmatpush.msra.mxu0 0.0
    %1007 = vmatpush.msra.mxu0 0.0
    %1008 = vmatpush.msra.mxu0 0.0
    %1009 = vmatpush.msra.mxu0 0.0
    %1010 = vmatpush.msra.mxu0 0.0
    %1011 = vmatpush.msra.mxu0 0.0
    %1012 = vmatpush.msra.mxu0 0.0
    %1013 = vmatpush.msra.mxu0 0.0
    %1014 = vmatpush.msra.mxu0 0.0
    %1015 = vmatpush.msra.mxu0 0.0
    %1016 = vmatpush.msra.mxu0 0.0
    %1017 = vmatpush.msra.mxu0 %v223
    %1018 = vmatpush.msra.mxu0 %v222
    %1019 = vmatpush.msra.mxu0 %v221
    %1020 = vmatpush.msra.mxu0 %v220
    %1021 = vmatmul.f32.gmra.mxu0 %v983
    %v1022 = vpop.f32.mrf.mxu0
    %v1023 = vadd.f32 %v1003, %v1022
    %1024 = vdwg.mxu0
    %v1025 = vxor.u32 %v1023, 2147483648
    %v1026 = vmul.f32 %v1025, 1.442695
    %v1027 = vpow.pop %v1026
    %v1028 = vadd.f32 %v1027, 1.0
    %v1029 = vrcp.pop %v1028
    %v1030 = vmul.f32 %v1028, %v1029
    %v1031 = vsub.f32 1.0, %v1030
    %v1032 = vmul.f32 %v1029, %v1031
    %v1033 = vadd.f32 %v1029, %v1032
    %vm1034 = vweird.f32 %v1028
    %vm1035 = vweird.f32 %v1029
    %vm1036 = vmor %vm1034, %vm1035
    %v1037 = vsel %vm1036, %v1029, %v1033
    %v1038 = vand.u32 2147483647, %v1028
    %vm1039 = vcmp.eq.f32.partialorder %v1038, 8.507059e+37
    %v1040 = vand.u32 %v1028, 2147483648
    %v1041 = vor.u32 1.1754944e-38, %v1040
    %v1042 = vsel %vm1039, %v1041, %v1037
    %v1043 = vmul.f32 1.0, %v1042
    %v1044 = vtanh.pop %v1023
    %v1045 = vmul.f32 %v1043, %v905
    %1047 = vrot.lane.b32.xlu0 %v1044, 64
    %v1048 = vpop.permute.xlu0 %1047
    %v1050 = vmul.f32 %v1043, %v1048
    %1052 = vrot.lane.b32.xlu0 %v1050, 32
    %v1053 = vpop.permute.xlu0 %1052
    %v1055 = vadd.f32 %v1045, %v1053
    %v1056 = vtanh.pop %v1055
    %1058 = vrot.lane.b32.xlu0 %v1056, 64
    %v1059 = vpop.permute.xlu0 %1058
    %v1061 = vmul.f32 %v1043, %v1059
    %1063 = vrot.lane.b32.xlu0 %v1061, 32
    %v1064 = vpop.permute.xlu0 %1063
    %1067 = vrot.lane.b32.xlu0 %v980, 64
    %v1068 = vpop.permute.xlu0 %1067
    %v1070 = vsel %vm225, %v1064, %v1068
    %v1072 = vsel %vm320, %v1070, 0
    %1074 = vmatpush.msra.mxu0 0.0
    %1075 = vmatpush.msra.mxu0 0.0
    %1076 = vmatpush.msra.mxu0 0.0
    %1077 = vmatpush.msra.mxu0 0.0
    %1078 = vmatpush.msra.mxu0 0.0
    %1079 = vmatpush.msra.mxu0 0.0
    %1080 = vmatpush.msra.mxu0 0.0
    %1081 = vmatpush.msra.mxu0 0.0
    %1082 = vmatpush.msra.mxu0 %v318
    %1083 = vmatpush.msra.mxu0 %v317
    %1084 = vmatpush.msra.mxu0 %v316
    %1085 = vmatpush.msra.mxu0 %v315
    %1086 = vmatpush.msra.mxu0 %v314
    %1087 = vmatpush.msra.mxu0 %v313
    %1088 = vmatpush.msra.mxu0 %v312
    %1089 = vmatpush.msra.mxu0 %v311
    %1090 = vmatmul.f32.gmra.mxu0 %v1072
    %v1091 = vpop.f32.mrf.mxu0
    %v1092 = vadd.f32 %v319, %v1091
    %1093 = vdwg.mxu0
    %v1094 = vxor.u32 %v1092, 2147483648
    %v1095 = vmul.f32 %v1094, 1.442695
    %v1096 = vpow.pop %v1095
    %v1097 = vadd.f32 %v1096, 1.0
    %v1098 = vrcp.pop %v1097
    %v1099 = vmul.f32 %v1097, %v1098
    %v1100 = vsub.f32 1.0, %v1099
    %v1101 = vmul.f32 %v1098, %v1100
    %v1102 = vadd.f32 %v1098, %v1101
    %vm1103 = vweird.f32 %v1097
    %vm1104 = vweird.f32 %v1098
    %vm1105 = vmor %vm1103, %vm1104
    %v1106 = vsel %vm1105, %v1098, %v1102
    %v1107 = vand.u32 2147483647, %v1097
    %vm1108 = vcmp.eq.f32.partialorder %v1107, 8.507059e+37
    %v1109 = vand.u32 %v1097, 2147483648
    %v1110 = vor.u32 1.1754944e-38, %v1109
    %v1111 = vsel %vm1108, %v1110, %v1106
    %v1112 = vmul.f32 1.0, %v1111
    %v1113 = vtanh.pop %v1092
    %v1114 = vmul.f32 %v1112, %v974
    %1116 = vrot.lane.b32.xlu0 %v1113, 64
    %v1117 = vpop.permute.xlu0 %1116
    %v1119 = vmul.f32 %v1112, %v1117
    %1121 = vrot.lane.b32.xlu0 %v1119, 32
    %v1122 = vpop.permute.xlu0 %1121
    %v1124 = vadd.f32 %v1114, %v1122
    %v1125 = vtanh.pop %v1124
    %1127 = vrot.lane.b32.xlu0 %v1125, 64
    %v1128 = vpop.permute.xlu0 %1127
    %v1130 = vmul.f32 %v1112, %v1128
    %s1131 = scalar_lea.vmem [#allocation2], 48
    %v1132 = vld [vmem:[%s1131] sm:$0xff]
    %v1133 = vsel %vm225, %v1064, 0
    %1135 = vmatpush.msra.mxu0 %v219
    %1136 = vmatpush.msra.mxu0 %v218
    %1137 = vmatpush.msra.mxu0 %v217
    %1138 = vmatpush.msra.mxu0 %v216
    %1139 = vmatpush.msra.mxu0 %v215
    %1140 = vmatpush.msra.mxu0 %v214
    %1141 = vmatpush.msra.mxu0 %v213
    %1142 = vmatpush.msra.mxu0 %v212
    %1143 = vmatpush.msra.mxu0 %v211
    %1144 = vmatpush.msra.mxu0 %v210
    %1145 = vmatpush.msra.mxu0 %v209
    %1146 = vmatpush.msra.mxu0 %v208
    %1147 = vmatpush.msra.mxu0 %v207
    %1148 = vmatpush.msra.mxu0 %v206
    %1149 = vmatpush.msra.mxu0 %v205
    %1150 = vmatpush.msra.mxu0 %v204
    %1151 = vmatmul.f32.gmra.mxu0 %v1132
    %v1152 = vpop.f32.mrf.mxu0
    %v1153 = vadd.f32 %v224, %v1152
    %1154 = vdwg.mxu0
    %1155 = vmatpush.msra.mxu0 0.0
    %1156 = vmatpush.msra.mxu0 0.0
    %1157 = vmatpush.msra.mxu0 0.0
    %1158 = vmatpush.msra.mxu0 0.0
    %1159 = vmatpush.msra.mxu0 0.0
    %1160 = vmatpush.msra.mxu0 0.0
    %1161 = vmatpush.msra.mxu0 0.0
    %1162 = vmatpush.msra.mxu0 0.0
    %1163 = vmatpush.msra.mxu0 0.0
    %1164 = vmatpush.msra.mxu0 0.0
    %1165 = vmatpush.msra.mxu0 0.0
    %1166 = vmatpush.msra.mxu0 0.0
    %1167 = vmatpush.msra.mxu0 %v223
    %1168 = vmatpush.msra.mxu0 %v222
    %1169 = vmatpush.msra.mxu0 %v221
    %1170 = vmatpush.msra.mxu0 %v220
    %1171 = vmatmul.f32.gmra.mxu0 %v1133
    %v1172 = vpop.f32.mrf.mxu0
    %v1173 = vadd.f32 %v1153, %v1172
    %1174 = vdwg.mxu0
    %v1175 = vxor.u32 %v1173, 2147483648
    %v1176 = vmul.f32 %v1175, 1.442695
    %v1177 = vpow.pop %v1176
    %v1178 = vadd.f32 %v1177, 1.0
    %v1179 = vrcp.pop %v1178
    %v1180 = vmul.f32 %v1178, %v1179
    %v1181 = vsub.f32 1.0, %v1180
    %v1182 = vmul.f32 %v1179, %v1181
    %v1183 = vadd.f32 %v1179, %v1182
    %vm1184 = vweird.f32 %v1178
    %vm1185 = vweird.f32 %v1179
    %vm1186 = vmor %vm1184, %vm1185
    %v1187 = vsel %vm1186, %v1179, %v1183
    %v1188 = vand.u32 2147483647, %v1178
    %vm1189 = vcmp.eq.f32.partialorder %v1188, 8.507059e+37
    %v1190 = vand.u32 %v1178, 2147483648
    %v1191 = vor.u32 1.1754944e-38, %v1190
    %v1192 = vsel %vm1189, %v1191, %v1187
    %v1193 = vmul.f32 1.0, %v1192
    %v1194 = vtanh.pop %v1173
    %v1195 = vmul.f32 %v1193, %v1055
    %1197 = vrot.lane.b32.xlu0 %v1194, 64
    %v1198 = vpop.permute.xlu0 %1197
    %v1200 = vmul.f32 %v1193, %v1198
    %1202 = vrot.lane.b32.xlu0 %v1200, 32
    %v1203 = vpop.permute.xlu0 %1202
    %v1205 = vadd.f32 %v1195, %v1203
    %v1206 = vtanh.pop %v1205
    %1208 = vrot.lane.b32.xlu0 %v1206, 64
    %v1209 = vpop.permute.xlu0 %1208
    %v1211 = vmul.f32 %v1193, %v1209
    %1213 = vrot.lane.b32.xlu0 %v1211, 32
    %v1214 = vpop.permute.xlu0 %1213
    %1217 = vrot.lane.b32.xlu0 %v1130, 64
    %v1218 = vpop.permute.xlu0 %1217
    %v1220 = vsel %vm225, %v1214, %v1218
    %v1222 = vsel %vm320, %v1220, 0
    %1224 = vmatpush.msra.mxu0 0.0
    %1225 = vmatpush.msra.mxu0 0.0
    %1226 = vmatpush.msra.mxu0 0.0
    %1227 = vmatpush.msra.mxu0 0.0
    %1228 = vmatpush.msra.mxu0 0.0
    %1229 = vmatpush.msra.mxu0 0.0
    %1230 = vmatpush.msra.mxu0 0.0
    %1231 = vmatpush.msra.mxu0 0.0
    %1232 = vmatpush.msra.mxu0 %v318
    %1233 = vmatpush.msra.mxu0 %v317
    %1234 = vmatpush.msra.mxu0 %v316
    %1235 = vmatpush.msra.mxu0 %v315
    %1236 = vmatpush.msra.mxu0 %v314
    %1237 = vmatpush.msra.mxu0 %v313
    %1238 = vmatpush.msra.mxu0 %v312
    %1239 = vmatpush.msra.mxu0 %v311
    %1240 = vmatmul.f32.gmra.mxu0 %v1222
    %v1241 = vpop.f32.mrf.mxu0
    %v1242 = vadd.f32 %v319, %v1241
    %1243 = vdwg.mxu0
    %v1244 = vxor.u32 %v1242, 2147483648
    %v1245 = vmul.f32 %v1244, 1.442695
    %v1246 = vpow.pop %v1245
    %v1247 = vadd.f32 %v1246, 1.0
    %v1248 = vrcp.pop %v1247
    %v1249 = vmul.f32 %v1247, %v1248
    %v1250 = vsub.f32 1.0, %v1249
    %v1251 = vmul.f32 %v1248, %v1250
    %v1252 = vadd.f32 %v1248, %v1251
    %vm1253 = vweird.f32 %v1247
    %vm1254 = vweird.f32 %v1248
    %vm1255 = vmor %vm1253, %vm1254
    %v1256 = vsel %vm1255, %v1248, %v1252
    %v1257 = vand.u32 2147483647, %v1247
    %vm1258 = vcmp.eq.f32.partialorder %v1257, 8.507059e+37
    %v1259 = vand.u32 %v1247, 2147483648
    %v1260 = vor.u32 1.1754944e-38, %v1259
    %v1261 = vsel %vm1258, %v1260, %v1256
    %v1262 = vmul.f32 1.0, %v1261
    %v1263 = vtanh.pop %v1242
    %v1264 = vmul.f32 %v1262, %v1124
    %1266 = vrot.lane.b32.xlu0 %v1263, 64
    %v1267 = vpop.permute.xlu0 %1266
    %v1269 = vmul.f32 %v1262, %v1267
    %1271 = vrot.lane.b32.xlu0 %v1269, 32
    %v1272 = vpop.permute.xlu0 %1271
    %v1274 = vadd.f32 %v1264, %v1272
    %v1275 = vtanh.pop %v1274
    %1277 = vrot.lane.b32.xlu0 %v1275, 64
    %v1278 = vpop.permute.xlu0 %1277
    %v1280 = vmul.f32 %v1262, %v1278
    %s1281 = scalar_lea.vmem [#allocation2], 56
    %v1282 = vld [vmem:[%s1281] sm:$0xff]
    %v1283 = vsel %vm225, %v1214, 0
    %1285 = vmatpush.msra.mxu0 %v219
    %1286 = vmatpush.msra.mxu0 %v218
    %1287 = vmatpush.msra.mxu0 %v217
    %1288 = vmatpush.msra.mxu0 %v216
    %1289 = vmatpush.msra.mxu0 %v215
    %1290 = vmatpush.msra.mxu0 %v214
    %1291 = vmatpush.msra.mxu0 %v213
    %1292 = vmatpush.msra.mxu0 %v212
    %1293 = vmatpush.msra.mxu0 %v211
    %1294 = vmatpush.msra.mxu0 %v210
    %1295 = vmatpush.msra.mxu0 %v209
    %1296 = vmatpush.msra.mxu0 %v208
    %1297 = vmatpush.msra.mxu0 %v207
    %1298 = vmatpush.msra.mxu0 %v206
    %1299 = vmatpush.msra.mxu0 %v205
    %1300 = vmatpush.msra.mxu0 %v204
    %1301 = vmatmul.f32.gmra.mxu0 %v1282
    %v1302 = vpop.f32.mrf.mxu0
    %v1303 = vadd.f32 %v224, %v1302
    %1304 = vdwg.mxu0
    %1305 = vmatpush.msra.mxu0 0.0
    %1306 = vmatpush.msra.mxu0 0.0
    %1307 = vmatpush.msra.mxu0 0.0
    %1308 = vmatpush.msra.mxu0 0.0
    %1309 = vmatpush.msra.mxu0 0.0
    %1310 = vmatpush.msra.mxu0 0.0
    %1311 = vmatpush.msra.mxu0 0.0
    %1312 = vmatpush.msra.mxu0 0.0
    %1313 = vmatpush.msra.mxu0 0.0
    %1314 = vmatpush.msra.mxu0 0.0
    %1315 = vmatpush.msra.mxu0 0.0
    %1316 = vmatpush.msra.mxu0 0.0
    %1317 = vmatpush.msra.mxu0 %v223
    %1318 = vmatpush.msra.mxu0 %v222
    %1319 = vmatpush.msra.mxu0 %v221
    %1320 = vmatpush.msra.mxu0 %v220
    %1321 = vmatmul.f32.gmra.mxu0 %v1283
    %v1322 = vpop.f32.mrf.mxu0
    %v1323 = vadd.f32 %v1303, %v1322
    %1324 = vdwg.mxu0
    %v1325 = vxor.u32 %v1323, 2147483648
    %v1326 = vmul.f32 %v1325, 1.442695
    %v1327 = vpow.pop %v1326
    %v1328 = vadd.f32 %v1327, 1.0
    %v1329 = vrcp.pop %v1328
    %v1330 = vmul.f32 %v1328, %v1329
    %v1331 = vsub.f32 1.0, %v1330
    %v1332 = vmul.f32 %v1329, %v1331
    %v1333 = vadd.f32 %v1329, %v1332
    %vm1334 = vweird.f32 %v1328
    %vm1335 = vweird.f32 %v1329
    %vm1336 = vmor %vm1334, %vm1335
    %v1337 = vsel %vm1336, %v1329, %v1333
    %v1338 = vand.u32 2147483647, %v1328
    %vm1339 = vcmp.eq.f32.partialorder %v1338, 8.507059e+37
    %v1340 = vand.u32 %v1328, 2147483648
    %v1341 = vor.u32 1.1754944e-38, %v1340
    %v1342 = vsel %vm1339, %v1341, %v1337
    %v1343 = vmul.f32 1.0, %v1342
    %v1344 = vtanh.pop %v1323
    %v1345 = vmul.f32 %v1343, %v1205
    %1347 = vrot.lane.b32.xlu0 %v1344, 64
    %v1348 = vpop.permute.xlu0 %1347
    %v1350 = vmul.f32 %v1343, %v1348
    %1352 = vrot.lane.b32.xlu0 %v1350, 32
    %v1353 = vpop.permute.xlu0 %1352
    %v1355 = vadd.f32 %v1345, %v1353
    %v1356 = vtanh.pop %v1355
    %1358 = vrot.lane.b32.xlu0 %v1356, 64
    %v1359 = vpop.permute.xlu0 %1358
    %v1361 = vmul.f32 %v1343, %v1359
    %1363 = vrot.lane.b32.xlu0 %v1361, 32
    %v1364 = vpop.permute.xlu0 %1363
    %1367 = vrot.lane.b32.xlu0 %v1280, 64
    %v1368 = vpop.permute.xlu0 %1367
    %v1370 = vsel %vm225, %v1364, %v1368
    %v1372 = vsel %vm320, %v1370, 0
    %1374 = vmatpush.msra.mxu0 0.0
    %1375 = vmatpush.msra.mxu0 0.0
    %1376 = vmatpush.msra.mxu0 0.0
    %1377 = vmatpush.msra.mxu0 0.0
    %1378 = vmatpush.msra.mxu0 0.0
    %1379 = vmatpush.msra.mxu0 0.0
    %1380 = vmatpush.msra.mxu0 0.0
    %1381 = vmatpush.msra.mxu0 0.0
    %1382 = vmatpush.msra.mxu0 %v318
    %1383 = vmatpush.msra.mxu0 %v317
    %1384 = vmatpush.msra.mxu0 %v316
    %1385 = vmatpush.msra.mxu0 %v315
    %1386 = vmatpush.msra.mxu0 %v314
    %1387 = vmatpush.msra.mxu0 %v313
    %1388 = vmatpush.msra.mxu0 %v312
    %1389 = vmatpush.msra.mxu0 %v311
    %1390 = vmatmul.f32.gmra.mxu0 %v1372
    %v1391 = vpop.f32.mrf.mxu0
    %v1392 = vadd.f32 %v319, %v1391
    %1393 = vdwg.mxu0
    %v1394 = vxor.u32 %v1392, 2147483648
    %v1395 = vmul.f32 %v1394, 1.442695
    %v1396 = vpow.pop %v1395
    %v1397 = vadd.f32 %v1396, 1.0
    %v1398 = vrcp.pop %v1397
    %v1399 = vmul.f32 %v1397, %v1398
    %v1400 = vsub.f32 1.0, %v1399
    %v1401 = vmul.f32 %v1398, %v1400
    %v1402 = vadd.f32 %v1398, %v1401
    %vm1403 = vweird.f32 %v1397
    %vm1404 = vweird.f32 %v1398
    %vm1405 = vmor %vm1403, %vm1404
    %v1406 = vsel %vm1405, %v1398, %v1402
    %v1407 = vand.u32 2147483647, %v1397
    %vm1408 = vcmp.eq.f32.partialorder %v1407, 8.507059e+37
    %v1409 = vand.u32 %v1397, 2147483648
    %v1410 = vor.u32 1.1754944e-38, %v1409
    %v1411 = vsel %vm1408, %v1410, %v1406
    %v1412 = vmul.f32 1.0, %v1411
    %v1413 = vtanh.pop %v1392
    %v1414 = vmul.f32 %v1412, %v1274
    %1416 = vrot.lane.b32.xlu0 %v1413, 64
    %v1417 = vpop.permute.xlu0 %1416
    %v1419 = vmul.f32 %v1412, %v1417
    %1421 = vrot.lane.b32.xlu0 %v1419, 32
    %v1422 = vpop.permute.xlu0 %1421
    %v1424 = vadd.f32 %v1414, %v1422
    %v1425 = vtanh.pop %v1424
    %1427 = vrot.lane.b32.xlu0 %v1425, 64
    %v1428 = vpop.permute.xlu0 %1427
    %v1430 = vmul.f32 %v1412, %v1428
    %v1431 = vld [vmem:[#allocation5] sm:$0xff]
    %v1432 = vld [vmem:[#allocation13] sm:$0xff]
    %v1433 = vld [vmem:[#allocation13 + $0x8] sm:$0xff]
    %v1434 = vld [vmem:[#allocation13 + $0x10] sm:$0xff]
    %v1435 = vld [vmem:[#allocation13 + $0x18] sm:$0xff]
    %v1436 = vld [vmem:[#allocation13 + $0x20] sm:$0xff]
    %v1437 = vld [vmem:[#allocation13 + $0x28] sm:$0xff]
    %v1438 = vld [vmem:[#allocation13 + $0x30] sm:$0xff]
    %v1439 = vld [vmem:[#allocation13 + $0x38] sm:$0xff]
    %v1440 = vld [vmem:[#allocation13 + $0x40] sm:$0xff]
    %v1441 = vld [vmem:[#allocation13 + $0x48] sm:$0xff]
    %v1442 = vld [vmem:[#allocation13 + $0x50] sm:$0xff]
    %v1443 = vld [vmem:[#allocation13 + $0x58] sm:$0xff]
    %v1444 = vld [vmem:[#allocation13 + $0x60] sm:$0xff]
    %v1445 = vld [vmem:[#allocation13 + $0x68] sm:$0xff]
    %v1446 = vld [vmem:[#allocation13 + $0x70] sm:$0xff]
    %v1447 = vld [vmem:[#allocation13 + $0x78] sm:$0xff]
    %v1448 = vld [vmem:[#allocation13 + $0x80] sm:$0xff]
    %v1449 = vld [vmem:[#allocation13 + $0x88] sm:$0xff]
    %v1450 = vld [vmem:[#allocation13 + $0x90] sm:$0xff]
    %v1451 = vld [vmem:[#allocation13 + $0x98] sm:$0xff]
    %v1452 = vld [vmem:[#allocation14] sm:$0xff]
    %v1453 = vsel %vm225, %v1364, 0
    %1455 = vmatpush.msra.mxu0 %v1447
    %1456 = vmatpush.msra.mxu0 %v1446
    %1457 = vmatpush.msra.mxu0 %v1445
    %1458 = vmatpush.msra.mxu0 %v1444
    %1459 = vmatpush.msra.mxu0 %v1443
    %1460 = vmatpush.msra.mxu0 %v1442
    %1461 = vmatpush.msra.mxu0 %v1441
    %1462 = vmatpush.msra.mxu0 %v1440
    %1463 = vmatpush.msra.mxu0 %v1439
    %1464 = vmatpush.msra.mxu0 %v1438
    %1465 = vmatpush.msra.mxu0 %v1437
    %1466 = vmatpush.msra.mxu0 %v1436
    %1467 = vmatpush.msra.mxu0 %v1435
    %1468 = vmatpush.msra.mxu0 %v1434
    %1469 = vmatpush.msra.mxu0 %v1433
    %1470 = vmatpush.msra.mxu0 %v1432
    %1471 = vmatmul.f32.gmra.mxu0 %v1431
    %v1472 = vpop.f32.mrf.mxu0
    %v1473 = vadd.f32 %v1452, %v1472
    %1474 = vdwg.mxu0
    %1475 = vmatpush.msra.mxu0 0.0
    %1476 = vmatpush.msra.mxu0 0.0
    %1477 = vmatpush.msra.mxu0 0.0
    %1478 = vmatpush.msra.mxu0 0.0
    %1479 = vmatpush.msra.mxu0 0.0
    %1480 = vmatpush.msra.mxu0 0.0
    %1481 = vmatpush.msra.mxu0 0.0
    %1482 = vmatpush.msra.mxu0 0.0
    %1483 = vmatpush.msra.mxu0 0.0
    %1484 = vmatpush.msra.mxu0 0.0
    %1485 = vmatpush.msra.mxu0 0.0
    %1486 = vmatpush.msra.mxu0 0.0
    %1487 = vmatpush.msra.mxu0 %v1451
    %1488 = vmatpush.msra.mxu0 %v1450
    %1489 = vmatpush.msra.mxu0 %v1449
    %1490 = vmatpush.msra.mxu0 %v1448
    %1491 = vmatmul.f32.gmra.mxu0 %v1453
    %v1492 = vpop.f32.mrf.mxu0
    %v1493 = vadd.f32 %v1473, %v1492
    %1494 = vdwg.mxu0
    %v1495 = vxor.u32 %v1493, 2147483648
    %v1496 = vmul.f32 %v1495, 1.442695
    %v1497 = vpow.pop %v1496
    %v1498 = vadd.f32 %v1497, 1.0
    %v1499 = vrcp.pop %v1498
    %v1500 = vmul.f32 %v1498, %v1499
    %v1501 = vsub.f32 1.0, %v1500
    %v1502 = vmul.f32 %v1499, %v1501
    %v1503 = vadd.f32 %v1499, %v1502
    %vm1504 = vweird.f32 %v1498
    %vm1505 = vweird.f32 %v1499
    %vm1506 = vmor %vm1504, %vm1505
    %v1507 = vsel %vm1506, %v1499, %v1503
    %v1508 = vand.u32 2147483647, %v1498
    %vm1509 = vcmp.eq.f32.partialorder %v1508, 8.507059e+37
    %v1510 = vand.u32 %v1498, 2147483648
    %v1511 = vor.u32 1.1754944e-38, %v1510
    %v1512 = vsel %vm1509, %v1511, %v1507
    %v1513 = vmul.f32 1.0, %v1512
    %v1514 = vtanh.pop %v1493
    %v1515 = vmul.f32 %v1513, %v1355
    %1517 = vrot.lane.b32.xlu0 %v1514, 64
    %v1518 = vpop.permute.xlu0 %1517
    %v1520 = vmul.f32 %v1513, %v1518
    %1522 = vrot.lane.b32.xlu0 %v1520, 32
    %v1523 = vpop.permute.xlu0 %1522
    %v1525 = vadd.f32 %v1515, %v1523
    %v1526 = vtanh.pop %v1525
    %1528 = vrot.lane.b32.xlu0 %v1526, 64
    %v1529 = vpop.permute.xlu0 %1528
    %v1531 = vmul.f32 %v1513, %v1529
    %1533 = vrot.lane.b32.xlu0 %v1531, 32
    %v1534 = vpop.permute.xlu0 %1533
    %1537 = vrot.lane.b32.xlu0 %v1430, 64
    %v1538 = vpop.permute.xlu0 %1537
    %v1540 = vsel %vm225, %v1534, %v1538
    %v1541 = vld [vmem:[#allocation16] sm:$0xff]
    %v1542 = vld [vmem:[#allocation16 + $0x8] sm:$0xff]
    %v1543 = vld [vmem:[#allocation16 + $0x10] sm:$0xff]
    %v1544 = vld [vmem:[#allocation16 + $0x18] sm:$0xff]
    %v1545 = vld [vmem:[#allocation16 + $0x20] sm:$0xff]
    %v1546 = vld [vmem:[#allocation16 + $0x28] sm:$0xff]
    %v1547 = vld [vmem:[#allocation16 + $0x30] sm:$0xff]
    %v1548 = vld [vmem:[#allocation16 + $0x38] sm:$0xff]
    %v1549 = vld [vmem:[%s9] sm:$0xff]
    %v1551 = vsel %vm320, %v1540, 0
    %1553 = vmatpush.msra.mxu0 0.0
    %1554 = vmatpush.msra.mxu0 0.0
    %1555 = vmatpush.msra.mxu0 0.0
    %1556 = vmatpush.msra.mxu0 0.0
    %1557 = vmatpush.msra.mxu0 0.0
    %1558 = vmatpush.msra.mxu0 0.0
    %1559 = vmatpush.msra.mxu0 0.0
    %1560 = vmatpush.msra.mxu0 0.0
    %1561 = vmatpush.msra.mxu0 %v1548
    %1562 = vmatpush.msra.mxu0 %v1547
    %1563 = vmatpush.msra.mxu0 %v1546
    %1564 = vmatpush.msra.mxu0 %v1545
    %1565 = vmatpush.msra.mxu0 %v1544
    %1566 = vmatpush.msra.mxu0 %v1543
    %1567 = vmatpush.msra.mxu0 %v1542
    %1568 = vmatpush.msra.mxu0 %v1541
    %1569 = vmatmul.f32.gmra.mxu0 %v1551
    %v1570 = vpop.f32.mrf.mxu0
    %v1571 = vadd.f32 %v1549, %v1570
    %1572 = vdwg.mxu0
    %v1573 = vxor.u32 %v1571, 2147483648
    %v1574 = vmul.f32 %v1573, 1.442695
    %v1575 = vpow.pop %v1574
    %v1576 = vadd.f32 %v1575, 1.0
    %v1577 = vrcp.pop %v1576
    %v1578 = vmul.f32 %v1576, %v1577
    %v1579 = vsub.f32 1.0, %v1578
    %v1580 = vmul.f32 %v1577, %v1579
    %v1581 = vadd.f32 %v1577, %v1580
    %vm1582 = vweird.f32 %v1576
    %vm1583 = vweird.f32 %v1577
    %vm1584 = vmor %vm1582, %vm1583
    %v1585 = vsel %vm1584, %v1577, %v1581
    %v1586 = vand.u32 2147483647, %v1576
    %vm1587 = vcmp.eq.f32.partialorder %v1586, 8.507059e+37
    %v1588 = vand.u32 %v1576, 2147483648
    %v1589 = vor.u32 1.1754944e-38, %v1588
    %v1590 = vsel %vm1587, %v1589, %v1585
    %v1591 = vmul.f32 1.0, %v1590
    %v1592 = vtanh.pop %v1571
    %v1593 = vmul.f32 %v1591, %v1424
    %1595 = vrot.lane.b32.xlu0 %v1592, 64
    %v1596 = vpop.permute.xlu0 %1595
    %v1598 = vmul.f32 %v1591, %v1596
    %1600 = vrot.lane.b32.xlu0 %v1598, 32
    %v1601 = vpop.permute.xlu0 %1600
    %v1603 = vadd.f32 %v1593, %v1601
    %v1604 = vtanh.pop %v1603
    %1606 = vrot.lane.b32.xlu0 %v1604, 64
    %v1607 = vpop.permute.xlu0 %1606
    %v1609 = vmul.f32 %v1591, %v1607
    %v1610 = vld [vmem:[#allocation17] sm:$0xff]
    %v1611 = vld [vmem:[#allocation17 + $0x8] sm:$0xff]
    %v1612 = vld [vmem:[#allocation17 + $0x10] sm:$0xff]
    %v1613 = vld [vmem:[#allocation17 + $0x18] sm:$0xff]
    %v1614 = vld [vmem:[#allocation19] sm:$0xff]
    %1616 = vrot.lane.b32.xlu0 %v1609, 32
    %v1617 = vpop.permute.xlu0 %1616
    %v1618 = vsel %vm225, %v1617, 0
    %1620 = vmatpush.msra.mxu0 0.0
    %1621 = vmatpush.msra.mxu0 0.0
    %1622 = vmatpush.msra.mxu0 0.0
    %1623 = vmatpush.msra.mxu0 0.0
    %1624 = vmatpush.msra.mxu0 0.0
    %1625 = vmatpush.msra.mxu0 0.0
    %1626 = vmatpush.msra.mxu0 0.0
    %1627 = vmatpush.msra.mxu0 0.0
    %1628 = vmatpush.msra.mxu0 0.0
    %1629 = vmatpush.msra.mxu0 0.0
    %1630 = vmatpush.msra.mxu0 0.0
    %1631 = vmatpush.msra.mxu0 0.0
    %1632 = vmatpush.msra.mxu0 %v1613
    %1633 = vmatpush.msra.mxu0 %v1612
    %1634 = vmatpush.msra.mxu0 %v1611
    %1635 = vmatpush.msra.mxu0 %v1610
    %1636 = vmatmul.f32.gmra.mxu0 %v1618
    %v1637 = vpop.f32.mrf.mxu0
    %v1638 = vadd.f32 %v1614, %v1637
    %1639 = vdwg.mxu0
    %v1640 = vadd.f32 %v1638, %v1431
    %1641 = vst [vmem:[#allocation20] sm:$0xff] %v1640
    %v1642 = vld [vmem:[#allocation13] sm:$0xff]
    %v1643 = vld [vmem:[#allocation13 + $0x8] sm:$0xff]
    %v1644 = vld [vmem:[#allocation13 + $0x10] sm:$0xff]
    %v1645 = vld [vmem:[#allocation13 + $0x18] sm:$0xff]
    %v1646 = vld [vmem:[#allocation13 + $0x20] sm:$0xff]
    %v1647 = vld [vmem:[#allocation13 + $0x28] sm:$0xff]
    %v1648 = vld [vmem:[#allocation13 + $0x30] sm:$0xff]
    %v1649 = vld [vmem:[#allocation13 + $0x38] sm:$0xff]
    %v1650 = vld [vmem:[#allocation13 + $0x40] sm:$0xff]
    %v1651 = vld [vmem:[#allocation13 + $0x48] sm:$0xff]
    %v1652 = vld [vmem:[#allocation13 + $0x50] sm:$0xff]
    %v1653 = vld [vmem:[#allocation13 + $0x58] sm:$0xff]
    %v1654 = vld [vmem:[#allocation13 + $0x60] sm:$0xff]
    %v1655 = vld [vmem:[#allocation13 + $0x68] sm:$0xff]
    %v1656 = vld [vmem:[#allocation13 + $0x70] sm:$0xff]
    %v1657 = vld [vmem:[#allocation13 + $0x78] sm:$0xff]
    %v1658 = vld [vmem:[#allocation13 + $0x80] sm:$0xff]
    %v1659 = vld [vmem:[#allocation13 + $0x88] sm:$0xff]
    %v1660 = vld [vmem:[#allocation13 + $0x90] sm:$0xff]
    %v1661 = vld [vmem:[#allocation13 + $0x98] sm:$0xff]
    %v1662 = vld [vmem:[#allocation14] sm:$0xff]
    %v1663 = vsel %vm225, %v1534, 0
    %1665 = vmatpush.msra.mxu0 %v1657
    %1666 = vmatpush.msra.mxu0 %v1656
    %1667 = vmatpush.msra.mxu0 %v1655
    %1668 = vmatpush.msra.mxu0 %v1654
    %1669 = vmatpush.msra.mxu0 %v1653
    %1670 = vmatpush.msra.mxu0 %v1652
    %1671 = vmatpush.msra.mxu0 %v1651
    %1672 = vmatpush.msra.mxu0 %v1650
    %1673 = vmatpush.msra.mxu0 %v1649
    %1674 = vmatpush.msra.mxu0 %v1648
    %1675 = vmatpush.msra.mxu0 %v1647
    %1676 = vmatpush.msra.mxu0 %v1646
    %1677 = vmatpush.msra.mxu0 %v1645
    %1678 = vmatpush.msra.mxu0 %v1644
    %1679 = vmatpush.msra.mxu0 %v1643
    %1680 = vmatpush.msra.mxu0 %v1642
    %1681 = vmatmul.f32.gmra.mxu0 %v1640
    %v1682 = vpop.f32.mrf.mxu0
    %v1683 = vadd.f32 %v1662, %v1682
    %1684 = vdwg.mxu0
    %1685 = vmatpush.msra.mxu0 0.0
    %1686 = vmatpush.msra.mxu0 0.0
    %1687 = vmatpush.msra.mxu0 0.0
    %1688 = vmatpush.msra.mxu0 0.0
    %1689 = vmatpush.msra.mxu0 0.0
    %1690 = vmatpush.msra.mxu0 0.0
    %1691 = vmatpush.msra.mxu0 0.0
    %1692 = vmatpush.msra.mxu0 0.0
    %1693 = vmatpush.msra.mxu0 0.0
    %1694 = vmatpush.msra.mxu0 0.0
    %1695 = vmatpush.msra.mxu0 0.0
    %1696 = vmatpush.msra.mxu0 0.0
    %1697 = vmatpush.msra.mxu0 %v1661
    %1698 = vmatpush.msra.mxu0 %v1660
    %1699 = vmatpush.msra.mxu0 %v1659
    %1700 = vmatpush.msra.mxu0 %v1658
    %1701 = vmatmul.f32.gmra.mxu0 %v1663
    %v1702 = vpop.f32.mrf.mxu0
    %v1703 = vadd.f32 %v1683, %v1702
    %1704 = vdwg.mxu0
    %v1705 = vxor.u32 %v1703, 2147483648
    %v1706 = vmul.f32 %v1705, 1.442695
    %v1707 = vpow.pop %v1706
    %v1708 = vadd.f32 %v1707, 1.0
    %v1709 = vrcp.pop %v1708
    %v1710 = vmul.f32 %v1708, %v1709
    %v1711 = vsub.f32 1.0, %v1710
    %v1712 = vmul.f32 %v1709, %v1711
    %v1713 = vadd.f32 %v1709, %v1712
    %vm1714 = vweird.f32 %v1708
    %vm1715 = vweird.f32 %v1709
    %vm1716 = vmor %vm1714, %vm1715
    %v1717 = vsel %vm1716, %v1709, %v1713
    %v1718 = vand.u32 2147483647, %v1708
    %vm1719 = vcmp.eq.f32.partialorder %v1718, 8.507059e+37
    %v1720 = vand.u32 %v1708, 2147483648
    %v1721 = vor.u32 1.1754944e-38, %v1720
    %v1722 = vsel %vm1719, %v1721, %v1717
    %v1723 = vmul.f32 1.0, %v1722
    %v1724 = vtanh.pop %v1703
    %v1725 = vmul.f32 %v1723, %v1525
    %1727 = vrot.lane.b32.xlu0 %v1724, 64
    %v1728 = vpop.permute.xlu0 %1727
    %v1730 = vmul.f32 %v1723, %v1728
    %1732 = vrot.lane.b32.xlu0 %v1730, 32
    %v1733 = vpop.permute.xlu0 %1732
    %v1735 = vadd.f32 %v1725, %v1733
    %v1736 = vtanh.pop %v1735
    %1738 = vrot.lane.b32.xlu0 %v1736, 64
    %v1739 = vpop.permute.xlu0 %1738
    %v1741 = vmul.f32 %v1723, %v1739
    %1743 = vrot.lane.b32.xlu0 %v1741, 32
    %v1744 = vpop.permute.xlu0 %1743
    %1746 = vrot.lane.b32.xlu0 %v1609, 64
    %v1747 = vpop.permute.xlu0 %1746
    %v1749 = vsel %vm225, %v1744, %v1747
    %v1750 = vld [vmem:[#allocation16] sm:$0xff]
    %v1751 = vld [vmem:[#allocation16 + $0x8] sm:$0xff]
    %v1752 = vld [vmem:[#allocation16 + $0x10] sm:$0xff]
    %v1753 = vld [vmem:[#allocation16 + $0x18] sm:$0xff]
    %v1754 = vld [vmem:[#allocation16 + $0x20] sm:$0xff]
    %v1755 = vld [vmem:[#allocation16 + $0x28] sm:$0xff]
    %v1756 = vld [vmem:[#allocation16 + $0x30] sm:$0xff]
    %v1757 = vld [vmem:[#allocation16 + $0x38] sm:$0xff]
    %v1758 = vld [vmem:[%s9] sm:$0xff]
    %v1760 = vsel %vm320, %v1749, 0
    %1762 = vmatpush.msra.mxu0 0.0
    %1763 = vmatpush.msra.mxu0 0.0
    %1764 = vmatpush.msra.mxu0 0.0
    %1765 = vmatpush.msra.mxu0 0.0
    %1766 = vmatpush.msra.mxu0 0.0
    %1767 = vmatpush.msra.mxu0 0.0
    %1768 = vmatpush.msra.mxu0 0.0
    %1769 = vmatpush.msra.mxu0 0.0
    %1770 = vmatpush.msra.mxu0 %v1757
    %1771 = vmatpush.msra.mxu0 %v1756
    %1772 = vmatpush.msra.mxu0 %v1755
    %1773 = vmatpush.msra.mxu0 %v1754
    %1774 = vmatpush.msra.mxu0 %v1753
    %1775 = vmatpush.msra.mxu0 %v1752
    %1776 = vmatpush.msra.mxu0 %v1751
    %1777 = vmatpush.msra.mxu0 %v1750
    %1778 = vmatmul.f32.gmra.mxu0 %v1760
    %v1779 = vpop.f32.mrf.mxu0
    %v1780 = vadd.f32 %v1758, %v1779
    %1781 = vdwg.mxu0
    %v1782 = vxor.u32 %v1780, 2147483648
    %v1783 = vmul.f32 %v1782, 1.442695
    %v1784 = vpow.pop %v1783
    %v1785 = vadd.f32 %v1784, 1.0
    %v1786 = vrcp.pop %v1785
    %v1787 = vmul.f32 %v1785, %v1786
    %v1788 = vsub.f32 1.0, %v1787
    %v1789 = vmul.f32 %v1786, %v1788
    %v1790 = vadd.f32 %v1786, %v1789
    %vm1791 = vweird.f32 %v1785
    %vm1792 = vweird.f32 %v1786
    %vm1793 = vmor %vm1791, %vm1792
    %v1794 = vsel %vm1793, %v1786, %v1790
    %v1795 = vand.u32 2147483647, %v1785
    %vm1796 = vcmp.eq.f32.partialorder %v1795, 8.507059e+37
    %v1797 = vand.u32 %v1785, 2147483648
    %v1798 = vor.u32 1.1754944e-38, %v1797
    %v1799 = vsel %vm1796, %v1798, %v1794
    %v1800 = vmul.f32 1.0, %v1799
    %v1801 = vtanh.pop %v1780
    %v1802 = vmul.f32 %v1800, %v1603
    %1804 = vrot.lane.b32.xlu0 %v1801, 64
    %v1805 = vpop.permute.xlu0 %1804
    %v1807 = vmul.f32 %v1800, %v1805
    %1809 = vrot.lane.b32.xlu0 %v1807, 32
    %v1810 = vpop.permute.xlu0 %1809
    %v1812 = vadd.f32 %v1802, %v1810
    %v1813 = vtanh.pop %v1812
    %1815 = vrot.lane.b32.xlu0 %v1813, 64
    %v1816 = vpop.permute.xlu0 %1815
    %v1818 = vmul.f32 %v1800, %v1816
    %v1819 = vld [vmem:[#allocation17] sm:$0xff]
    %v1820 = vld [vmem:[#allocation17 + $0x8] sm:$0xff]
    %v1821 = vld [vmem:[#allocation17 + $0x10] sm:$0xff]
    %v1822 = vld [vmem:[#allocation17 + $0x18] sm:$0xff]
    %v1823 = vld [vmem:[#allocation19] sm:$0xff]
    %1825 = vrot.lane.b32.xlu0 %v1818, 32
    %v1826 = vpop.permute.xlu0 %1825
    %v1827 = vsel %vm225, %v1826, 0
    %1829 = vmatpush.msra.mxu0 0.0
    %1830 = vmatpush.msra.mxu0 0.0
    %1831 = vmatpush.msra.mxu0 0.0
    %1832 = vmatpush.msra.mxu0 0.0
    %1833 = vmatpush.msra.mxu0 0.0
    %1834 = vmatpush.msra.mxu0 0.0
    %1835 = vmatpush.msra.mxu0 0.0
    %1836 = vmatpush.msra.mxu0 0.0
    %1837 = vmatpush.msra.mxu0 0.0
    %1838 = vmatpush.msra.mxu0 0.0
    %1839 = vmatpush.msra.mxu0 0.0
    %1840 = vmatpush.msra.mxu0 0.0
    %1841 = vmatpush.msra.mxu0 %v1822
    %1842 = vmatpush.msra.mxu0 %v1821
    %1843 = vmatpush.msra.mxu0 %v1820
    %1844 = vmatpush.msra.mxu0 %v1819
    %1845 = vmatmul.f32.gmra.mxu0 %v1827
    %v1846 = vpop.f32.mrf.mxu0
    %v1847 = vadd.f32 %v1823, %v1846
    %1848 = vdwg.mxu0
    %v1849 = vadd.f32 %v1847, %v1640
    %s1850 = scalar_lea.vmem [#allocation20], 8
    %1851 = vst [vmem:[%s1850] sm:$0xff] %v1849
    %v1852 = vld [vmem:[#allocation13] sm:$0xff]
    %v1853 = vld [vmem:[#allocation13 + $0x8] sm:$0xff]
    %v1854 = vld [vmem:[#allocation13 + $0x10] sm:$0xff]
    %v1855 = vld [vmem:[#allocation13 + $0x18] sm:$0xff]
    %v1856 = vld [vmem:[#allocation13 + $0x20] sm:$0xff]
    %v1857 = vld [vmem:[#allocation13 + $0x28] sm:$0xff]
    %v1858 = vld [vmem:[#allocation13 + $0x30] sm:$0xff]
    %v1859 = vld [vmem:[#allocation13 + $0x38] sm:$0xff]
    %v1860 = vld [vmem:[#allocation13 + $0x40] sm:$0xff]
    %v1861 = vld [vmem:[#allocation13 + $0x48] sm:$0xff]
    %v1862 = vld [vmem:[#allocation13 + $0x50] sm:$0xff]
    %v1863 = vld [vmem:[#allocation13 + $0x58] sm:$0xff]
    %v1864 = vld [vmem:[#allocation13 + $0x60] sm:$0xff]
    %v1865 = vld [vmem:[#allocation13 + $0x68] sm:$0xff]
    %v1866 = vld [vmem:[#allocation13 + $0x70] sm:$0xff]
    %v1867 = vld [vmem:[#allocation13 + $0x78] sm:$0xff]
    %v1868 = vld [vmem:[#allocation13 + $0x80] sm:$0xff]
    %v1869 = vld [vmem:[#allocation13 + $0x88] sm:$0xff]
    %v1870 = vld [vmem:[#allocation13 + $0x90] sm:$0xff]
    %v1871 = vld [vmem:[#allocation13 + $0x98] sm:$0xff]
    %v1872 = vld [vmem:[#allocation14] sm:$0xff]
    %v1873 = vsel %vm225, %v1744, 0
    %1875 = vmatpush.msra.mxu0 %v1867
    %1876 = vmatpush.msra.mxu0 %v1866
    %1877 = vmatpush.msra.mxu0 %v1865
    %1878 = vmatpush.msra.mxu0 %v1864
    %1879 = vmatpush.msra.mxu0 %v1863
    %1880 = vmatpush.msra.mxu0 %v1862
    %1881 = vmatpush.msra.mxu0 %v1861
    %1882 = vmatpush.msra.mxu0 %v1860
    %1883 = vmatpush.msra.mxu0 %v1859
    %1884 = vmatpush.msra.mxu0 %v1858
    %1885 = vmatpush.msra.mxu0 %v1857
    %1886 = vmatpush.msra.mxu0 %v1856
    %1887 = vmatpush.msra.mxu0 %v1855
    %1888 = vmatpush.msra.mxu0 %v1854
    %1889 = vmatpush.msra.mxu0 %v1853
    %1890 = vmatpush.msra.mxu0 %v1852
    %1891 = vmatmul.f32.gmra.mxu0 %v1849
    %v1892 = vpop.f32.mrf.mxu0
    %v1893 = vadd.f32 %v1872, %v1892
    %1894 = vdwg.mxu0
    %1895 = vmatpush.msra.mxu0 0.0
    %1896 = vmatpush.msra.mxu0 0.0
    %1897 = vmatpush.msra.mxu0 0.0
    %1898 = vmatpush.msra.mxu0 0.0
    %1899 = vmatpush.msra.mxu0 0.0
    %1900 = vmatpush.msra.mxu0 0.0
    %1901 = vmatpush.msra.mxu0 0.0
    %1902 = vmatpush.msra.mxu0 0.0
    %1903 = vmatpush.msra.mxu0 0.0
    %1904 = vmatpush.msra.mxu0 0.0
    %1905 = vmatpush.msra.mxu0 0.0
    %1906 = vmatpush.msra.mxu0 0.0
    %1907 = vmatpush.msra.mxu0 %v1871
    %1908 = vmatpush.msra.mxu0 %v1870
    %1909 = vmatpush.msra.mxu0 %v1869
    %1910 = vmatpush.msra.mxu0 %v1868
    %1911 = vmatmul.f32.gmra.mxu0 %v1873
    %v1912 = vpop.f32.mrf.mxu0
    %v1913 = vadd.f32 %v1893, %v1912
    %1914 = vdwg.mxu0
    %v1915 = vxor.u32 %v1913, 2147483648
    %v1916 = vmul.f32 %v1915, 1.442695
    %v1917 = vpow.pop %v1916
    %v1918 = vadd.f32 %v1917, 1.0
    %v1919 = vrcp.pop %v1918
    %v1920 = vmul.f32 %v1918, %v1919
    %v1921 = vsub.f32 1.0, %v1920
    %v1922 = vmul.f32 %v1919, %v1921
    %v1923 = vadd.f32 %v1919, %v1922
    %vm1924 = vweird.f32 %v1918
    %vm1925 = vweird.f32 %v1919
    %vm1926 = vmor %vm1924, %vm1925
    %v1927 = vsel %vm1926, %v1919, %v1923
    %v1928 = vand.u32 2147483647, %v1918
    %vm1929 = vcmp.eq.f32.partialorder %v1928, 8.507059e+37
    %v1930 = vand.u32 %v1918, 2147483648
    %v1931 = vor.u32 1.1754944e-38, %v1930
    %v1932 = vsel %vm1929, %v1931, %v1927
    %v1933 = vmul.f32 1.0, %v1932
    %v1934 = vtanh.pop %v1913
    %v1935 = vmul.f32 %v1933, %v1735
    %1937 = vrot.lane.b32.xlu0 %v1934, 64
    %v1938 = vpop.permute.xlu0 %1937
    %v1940 = vmul.f32 %v1933, %v1938
    %1942 = vrot.lane.b32.xlu0 %v1940, 32
    %v1943 = vpop.permute.xlu0 %1942
    %v1945 = vadd.f32 %v1935, %v1943
    %v1946 = vtanh.pop %v1945
    %1948 = vrot.lane.b32.xlu0 %v1946, 64
    %v1949 = vpop.permute.xlu0 %1948
    %v1951 = vmul.f32 %v1933, %v1949
    %1953 = vrot.lane.b32.xlu0 %v1951, 32
    %v1954 = vpop.permute.xlu0 %1953
    %1956 = vrot.lane.b32.xlu0 %v1818, 64
    %v1957 = vpop.permute.xlu0 %1956
    %v1959 = vsel %vm225, %v1954, %v1957
    %v1960 = vld [vmem:[#allocation16] sm:$0xff]
    %v1961 = vld [vmem:[#allocation16 + $0x8] sm:$0xff]
    %v1962 = vld [vmem:[#allocation16 + $0x10] sm:$0xff]
    %v1963 = vld [vmem:[#allocation16 + $0x18] sm:$0xff]
    %v1964 = vld [vmem:[#allocation16 + $0x20] sm:$0xff]
    %v1965 = vld [vmem:[#allocation16 + $0x28] sm:$0xff]
    %v1966 = vld [vmem:[#allocation16 + $0x30] sm:$0xff]
    %v1967 = vld [vmem:[#allocation16 + $0x38] sm:$0xff]
    %v1968 = vld [vmem:[%s9] sm:$0xff]
    %v1970 = vsel %vm320, %v1959, 0
    %1972 = vmatpush.msra.mxu0 0.0
    %1973 = vmatpush.msra.mxu0 0.0
    %1974 = vmatpush.msra.mxu0 0.0
    %1975 = vmatpush.msra.mxu0 0.0
    %1976 = vmatpush.msra.mxu0 0.0
    %1977 = vmatpush.msra.mxu0 0.0
    %1978 = vmatpush.msra.mxu0 0.0
    %1979 = vmatpush.msra.mxu0 0.0
    %1980 = vmatpush.msra.mxu0 %v1967
    %1981 = vmatpush.msra.mxu0 %v1966
    %1982 = vmatpush.msra.mxu0 %v1965
    %1983 = vmatpush.msra.mxu0 %v1964
    %1984 = vmatpush.msra.mxu0 %v1963
    %1985 = vmatpush.msra.mxu0 %v1962
    %1986 = vmatpush.msra.mxu0 %v1961
    %1987 = vmatpush.msra.mxu0 %v1960
    %1988 = vmatmul.f32.gmra.mxu0 %v1970
    %v1989 = vpop.f32.mrf.mxu0
    %v1990 = vadd.f32 %v1968, %v1989
    %1991 = vdwg.mxu0
    %v1992 = vxor.u32 %v1990, 2147483648
    %v1993 = vmul.f32 %v1992, 1.442695
    %v1994 = vpow.pop %v1993
    %v1995 = vadd.f32 %v1994, 1.0
    %v1996 = vrcp.pop %v1995
    %v1997 = vmul.f32 %v1995, %v1996
    %v1998 = vsub.f32 1.0, %v1997
    %v1999 = vmul.f32 %v1996, %v1998
    %v2000 = vadd.f32 %v1996, %v1999
    %vm2001 = vweird.f32 %v1995
    %vm2002 = vweird.f32 %v1996
    %vm2003 = vmor %vm2001, %vm2002
    %v2004 = vsel %vm2003, %v1996, %v2000
    %v2005 = vand.u32 2147483647, %v1995
    %vm2006 = vcmp.eq.f32.partialorder %v2005, 8.507059e+37
    %v2007 = vand.u32 %v1995, 2147483648
    %v2008 = vor.u32 1.1754944e-38, %v2007
    %v2009 = vsel %vm2006, %v2008, %v2004
    %v2010 = vmul.f32 1.0, %v2009
    %v2011 = vtanh.pop %v1990
    %v2012 = vmul.f32 %v2010, %v1812
    %2014 = vrot.lane.b32.xlu0 %v2011, 64
    %v2015 = vpop.permute.xlu0 %2014
    %v2017 = vmul.f32 %v2010, %v2015
    %2019 = vrot.lane.b32.xlu0 %v2017, 32
    %v2020 = vpop.permute.xlu0 %2019
    %v2022 = vadd.f32 %v2012, %v2020
    %v2023 = vtanh.pop %v2022
    %2025 = vrot.lane.b32.xlu0 %v2023, 64
    %v2026 = vpop.permute.xlu0 %2025
    %v2028 = vmul.f32 %v2010, %v2026
    %v2029 = vld [vmem:[#allocation17] sm:$0xff]
    %v2030 = vld [vmem:[#allocation17 + $0x8] sm:$0xff]
    %v2031 = vld [vmem:[#allocation17 + $0x10] sm:$0xff]
    %v2032 = vld [vmem:[#allocation17 + $0x18] sm:$0xff]
    %v2033 = vld [vmem:[#allocation19] sm:$0xff]
    %2035 = vrot.lane.b32.xlu0 %v2028, 32
    %v2036 = vpop.permute.xlu0 %2035
    %v2037 = vsel %vm225, %v2036, 0
    %2039 = vmatpush.msra.mxu0 0.0
    %2040 = vmatpush.msra.mxu0 0.0
    %2041 = vmatpush.msra.mxu0 0.0
    %2042 = vmatpush.msra.mxu0 0.0
    %2043 = vmatpush.msra.mxu0 0.0
    %2044 = vmatpush.msra.mxu0 0.0
    %2045 = vmatpush.msra.mxu0 0.0
    %2046 = vmatpush.msra.mxu0 0.0
    %2047 = vmatpush.msra.mxu0 0.0
    %2048 = vmatpush.msra.mxu0 0.0
    %2049 = vmatpush.msra.mxu0 0.0
    %2050 = vmatpush.msra.mxu0 0.0
    %2051 = vmatpush.msra.mxu0 %v2032
    %2052 = vmatpush.msra.mxu0 %v2031
    %2053 = vmatpush.msra.mxu0 %v2030
    %2054 = vmatpush.msra.mxu0 %v2029
    %2055 = vmatmul.f32.gmra.mxu0 %v2037
    %v2056 = vpop.f32.mrf.mxu0
    %v2057 = vadd.f32 %v2033, %v2056
    %2058 = vdwg.mxu0
    %v2059 = vadd.f32 %v2057, %v1849
    %s2060 = scalar_lea.vmem [#allocation20], 16
    %2061 = vst [vmem:[%s2060] sm:$0xff] %v2059
    %v2062 = vld [vmem:[#allocation13] sm:$0xff]
    %v2063 = vld [vmem:[#allocation13 + $0x8] sm:$0xff]
    %v2064 = vld [vmem:[#allocation13 + $0x10] sm:$0xff]
    %v2065 = vld [vmem:[#allocation13 + $0x18] sm:$0xff]
    %v2066 = vld [vmem:[#allocation13 + $0x20] sm:$0xff]
    %v2067 = vld [vmem:[#allocation13 + $0x28] sm:$0xff]
    %v2068 = vld [vmem:[#allocation13 + $0x30] sm:$0xff]
    %v2069 = vld [vmem:[#allocation13 + $0x38] sm:$0xff]
    %v2070 = vld [vmem:[#allocation13 + $0x40] sm:$0xff]
    %v2071 = vld [vmem:[#allocation13 + $0x48] sm:$0xff]
    %v2072 = vld [vmem:[#allocation13 + $0x50] sm:$0xff]
    %v2073 = vld [vmem:[#allocation13 + $0x58] sm:$0xff]
    %v2074 = vld [vmem:[#allocation13 + $0x60] sm:$0xff]
    %v2075 = vld [vmem:[#allocation13 + $0x68] sm:$0xff]
    %v2076 = vld [vmem:[#allocation13 + $0x70] sm:$0xff]
    %v2077 = vld [vmem:[#allocation13 + $0x78] sm:$0xff]
    %v2078 = vld [vmem:[#allocation13 + $0x80] sm:$0xff]
    %v2079 = vld [vmem:[#allocation13 + $0x88] sm:$0xff]
    %v2080 = vld [vmem:[#allocation13 + $0x90] sm:$0xff]
    %v2081 = vld [vmem:[#allocation13 + $0x98] sm:$0xff]
    %v2082 = vld [vmem:[#allocation14] sm:$0xff]
    %v2083 = vsel %vm225, %v1954, 0
    %2085 = vmatpush.msra.mxu0 %v2077
    %2086 = vmatpush.msra.mxu0 %v2076
    %2087 = vmatpush.msra.mxu0 %v2075
    %2088 = vmatpush.msra.mxu0 %v2074
    %2089 = vmatpush.msra.mxu0 %v2073
    %2090 = vmatpush.msra.mxu0 %v2072
    %2091 = vmatpush.msra.mxu0 %v2071
    %2092 = vmatpush.msra.mxu0 %v2070
    %2093 = vmatpush.msra.mxu0 %v2069
    %2094 = vmatpush.msra.mxu0 %v2068
    %2095 = vmatpush.msra.mxu0 %v2067
    %2096 = vmatpush.msra.mxu0 %v2066
    %2097 = vmatpush.msra.mxu0 %v2065
    %2098 = vmatpush.msra.mxu0 %v2064
    %2099 = vmatpush.msra.mxu0 %v2063
    %2100 = vmatpush.msra.mxu0 %v2062
    %2101 = vmatmul.f32.gmra.mxu0 %v2059
    %v2102 = vpop.f32.mrf.mxu0
    %v2103 = vadd.f32 %v2082, %v2102
    %2104 = vdwg.mxu0
    %2105 = vmatpush.msra.mxu0 0.0
    %2106 = vmatpush.msra.mxu0 0.0
    %2107 = vmatpush.msra.mxu0 0.0
    %2108 = vmatpush.msra.mxu0 0.0
    %2109 = vmatpush.msra.mxu0 0.0
    %2110 = vmatpush.msra.mxu0 0.0
    %2111 = vmatpush.msra.mxu0 0.0
    %2112 = vmatpush.msra.mxu0 0.0
    %2113 = vmatpush.msra.mxu0 0.0
    %2114 = vmatpush.msra.mxu0 0.0
    %2115 = vmatpush.msra.mxu0 0.0
    %2116 = vmatpush.msra.mxu0 0.0
    %2117 = vmatpush.msra.mxu0 %v2081
    %2118 = vmatpush.msra.mxu0 %v2080
    %2119 = vmatpush.msra.mxu0 %v2079
    %2120 = vmatpush.msra.mxu0 %v2078
    %2121 = vmatmul.f32.gmra.mxu0 %v2083
    %v2122 = vpop.f32.mrf.mxu0
    %v2123 = vadd.f32 %v2103, %v2122
    %2124 = vdwg.mxu0
    %v2125 = vxor.u32 %v2123, 2147483648
    %v2126 = vmul.f32 %v2125, 1.442695
    %v2127 = vpow.pop %v2126
    %v2128 = vadd.f32 %v2127, 1.0
    %v2129 = vrcp.pop %v2128
    %v2130 = vmul.f32 %v2128, %v2129
    %v2131 = vsub.f32 1.0, %v2130
    %v2132 = vmul.f32 %v2129, %v2131
    %v2133 = vadd.f32 %v2129, %v2132
    %vm2134 = vweird.f32 %v2128
    %vm2135 = vweird.f32 %v2129
    %vm2136 = vmor %vm2134, %vm2135
    %v2137 = vsel %vm2136, %v2129, %v2133
    %v2138 = vand.u32 2147483647, %v2128
    %vm2139 = vcmp.eq.f32.partialorder %v2138, 8.507059e+37
    %v2140 = vand.u32 %v2128, 2147483648
    %v2141 = vor.u32 1.1754944e-38, %v2140
    %v2142 = vsel %vm2139, %v2141, %v2137
    %v2143 = vmul.f32 1.0, %v2142
    %v2144 = vtanh.pop %v2123
    %v2145 = vmul.f32 %v2143, %v1945
    %2147 = vrot.lane.b32.xlu0 %v2144, 64
    %v2148 = vpop.permute.xlu0 %2147
    %v2150 = vmul.f32 %v2143, %v2148
    %2152 = vrot.lane.b32.xlu0 %v2150, 32
    %v2153 = vpop.permute.xlu0 %2152
    %v2155 = vadd.f32 %v2145, %v2153
    %v2156 = vtanh.pop %v2155
    %2158 = vrot.lane.b32.xlu0 %v2156, 64
    %v2159 = vpop.permute.xlu0 %2158
    %v2161 = vmul.f32 %v2143, %v2159
    %2163 = vrot.lane.b32.xlu0 %v2161, 32
    %v2164 = vpop.permute.xlu0 %2163
    %2166 = vrot.lane.b32.xlu0 %v2028, 64
    %v2167 = vpop.permute.xlu0 %2166
    %v2169 = vsel %vm225, %v2164, %v2167
    %v2170 = vld [vmem:[#allocation16] sm:$0xff]
    %v2171 = vld [vmem:[#allocation16 + $0x8] sm:$0xff]
    %v2172 = vld [vmem:[#allocation16 + $0x10] sm:$0xff]
    %v2173 = vld [vmem:[#allocation16 + $0x18] sm:$0xff]
    %v2174 = vld [vmem:[#allocation16 + $0x20] sm:$0xff]
    %v2175 = vld [vmem:[#allocation16 + $0x28] sm:$0xff]
    %v2176 = vld [vmem:[#allocation16 + $0x30] sm:$0xff]
    %v2177 = vld [vmem:[#allocation16 + $0x38] sm:$0xff]
    %v2178 = vld [vmem:[%s9] sm:$0xff]
    %v2180 = vsel %vm320, %v2169, 0
    %2182 = vmatpush.msra.mxu0 0.0
    %2183 = vmatpush.msra.mxu0 0.0
    %2184 = vmatpush.msra.mxu0 0.0
    %2185 = vmatpush.msra.mxu0 0.0
    %2186 = vmatpush.msra.mxu0 0.0
    %2187 = vmatpush.msra.mxu0 0.0
    %2188 = vmatpush.msra.mxu0 0.0
    %2189 = vmatpush.msra.mxu0 0.0
    %2190 = vmatpush.msra.mxu0 %v2177
    %2191 = vmatpush.msra.mxu0 %v2176
    %2192 = vmatpush.msra.mxu0 %v2175
    %2193 = vmatpush.msra.mxu0 %v2174
    %2194 = vmatpush.msra.mxu0 %v2173
    %2195 = vmatpush.msra.mxu0 %v2172
    %2196 = vmatpush.msra.mxu0 %v2171
    %2197 = vmatpush.msra.mxu0 %v2170
    %2198 = vmatmul.f32.gmra.mxu0 %v2180
    %v2199 = vpop.f32.mrf.mxu0
    %v2200 = vadd.f32 %v2178, %v2199
    %2201 = vdwg.mxu0
    %v2202 = vxor.u32 %v2200, 2147483648
    %v2203 = vmul.f32 %v2202, 1.442695
    %v2204 = vpow.pop %v2203
    %v2205 = vadd.f32 %v2204, 1.0
    %v2206 = vrcp.pop %v2205
    %v2207 = vmul.f32 %v2205, %v2206
    %v2208 = vsub.f32 1.0, %v2207
    %v2209 = vmul.f32 %v2206, %v2208
    %v2210 = vadd.f32 %v2206, %v2209
    %vm2211 = vweird.f32 %v2205
    %vm2212 = vweird.f32 %v2206
    %vm2213 = vmor %vm2211, %vm2212
    %v2214 = vsel %vm2213, %v2206, %v2210
    %v2215 = vand.u32 2147483647, %v2205
    %vm2216 = vcmp.eq.f32.partialorder %v2215, 8.507059e+37
    %v2217 = vand.u32 %v2205, 2147483648
    %v2218 = vor.u32 1.1754944e-38, %v2217
    %v2219 = vsel %vm2216, %v2218, %v2214
    %v2220 = vmul.f32 1.0, %v2219
    %v2221 = vtanh.pop %v2200
    %v2222 = vmul.f32 %v2220, %v2022
    %2224 = vrot.lane.b32.xlu0 %v2221, 64
    %v2225 = vpop.permute.xlu0 %2224
    %v2227 = vmul.f32 %v2220, %v2225
    %2229 = vrot.lane.b32.xlu0 %v2227, 32
    %v2230 = vpop.permute.xlu0 %2229
    %v2232 = vadd.f32 %v2222, %v2230
    %v2233 = vtanh.pop %v2232
    %2235 = vrot.lane.b32.xlu0 %v2233, 64
    %v2236 = vpop.permute.xlu0 %2235
    %v2238 = vmul.f32 %v2220, %v2236
    %v2239 = vld [vmem:[#allocation17] sm:$0xff]
    %v2240 = vld [vmem:[#allocation17 + $0x8] sm:$0xff]
    %v2241 = vld [vmem:[#allocation17 + $0x10] sm:$0xff]
    %v2242 = vld [vmem:[#allocation17 + $0x18] sm:$0xff]
    %v2243 = vld [vmem:[#allocation19] sm:$0xff]
    %2245 = vrot.lane.b32.xlu0 %v2238, 32
    %v2246 = vpop.permute.xlu0 %2245
    %v2247 = vsel %vm225, %v2246, 0
    %2249 = vmatpush.msra.mxu0 0.0
    %2250 = vmatpush.msra.mxu0 0.0
    %2251 = vmatpush.msra.mxu0 0.0
    %2252 = vmatpush.msra.mxu0 0.0
    %2253 = vmatpush.msra.mxu0 0.0
    %2254 = vmatpush.msra.mxu0 0.0
    %2255 = vmatpush.msra.mxu0 0.0
    %2256 = vmatpush.msra.mxu0 0.0
    %2257 = vmatpush.msra.mxu0 0.0
    %2258 = vmatpush.msra.mxu0 0.0
    %2259 = vmatpush.msra.mxu0 0.0
    %2260 = vmatpush.msra.mxu0 0.0
    %2261 = vmatpush.msra.mxu0 %v2242
    %2262 = vmatpush.msra.mxu0 %v2241
    %2263 = vmatpush.msra.mxu0 %v2240
    %2264 = vmatpush.msra.mxu0 %v2239
    %2265 = vmatmul.f32.gmra.mxu0 %v2247
    %v2266 = vpop.f32.mrf.mxu0
    %v2267 = vadd.f32 %v2243, %v2266
    %2268 = vdwg.mxu0
    %v2269 = vadd.f32 %v2267, %v2059
    %s2270 = scalar_lea.vmem [#allocation20], 24
    %2271 = vst [vmem:[%s2270] sm:$0xff] %v2269
    // Predicated region
    $region94: #{tpu_custom_call.1} parent=1 // pred_check
      _
    $region95: #{tpu_custom_call.1} parent=1 // pred_check_branch
      %2273 = sbr.rel (0) target = $region97
    $region96: #{tpu_custom_call.1} parent=1 // pred_region
      %2275 = vsyncadd [#allocation4], 0
      %s2276 = sshll.u32 [#allocation20], 4
      %s2277 = int_to_ptr.vmem [resolvable:$true] %s2276
      %s2278 = sshll.u32 %s12, 4
      %s2279 = int_to_ptr.hbm [resolvable:$true] %s2278
      %2284 = dma.vmem_to_hbm [thread:$0]  %s2277, 512, %s2279, [#allocation4], 128, 128, 8
    $region97: #{tpu_custom_call.1} parent=1 // pred_fallthru
      _
    // Predicated region
    $region98: #{tpu_custom_call.1} parent=1 // pred_check
      _
    $region99: #{tpu_custom_call.1} parent=1 // pred_check_branch
      %2286 = sbr.rel (0) target = $region101
    $region100: #{tpu_custom_call.1} parent=1 // pred_region
      %2288 = dma.done [#allocation4], 512
    $region101: #{tpu_custom_call.1} parent=1 // pred_fallthru
      _
    %2289 = vsyncpa [#allocation3], 1
    %2290 = vsyncpa [#allocation6], 1
    %2291 = vsyncpa [#allocation9], 1
    %2292 = vsyncpa [#allocation12], 1
    %2293 = vsyncpa [#allocation15], 1
    %2294 = vsyncpa [#allocation18], 1
    %2295 = vsyncpa [#allocation4], 1

</llo_original>
